<compile_context>
chip_gen: v6e
topology: v6e:2x2x1
jax: 0.10.0
libtpu: 0.0.40
codegen_flags: <defaults>
</compile_context>

<pallas_src>
import math
from functools import partial

import jax
import jax.numpy as jnp
from jax.experimental import pallas as pl
from jax.experimental.pallas import tpu as pltpu

F32 = jnp.float32
BF16 = jnp.bfloat16
EPS = 1e-5


# ------------------------- tiling / misc helpers -------------------------

def _row_tile(n, target=256):
    """Largest tile t <= target dividing n, sublane aligned (or full n)."""
    if n <= target:
        return n
    for align in (32, 16, 8):
        t = (min(target, n) // align) * align
        while t >= align:
            if n % t == 0:
                return t
            t -= align
    return n


def _lane_tile(n, target=512):
    """Largest tile t <= target dividing n with t % 128 == 0 (or full n)."""
    if n <= target:
        return n
    t = (min(target, n) // 128) * 128
    while t >= 128:
        if n % t == 0:
            return t
        t -= 128
    return n


def _vmem_limit(nbytes):
    """Explicit scoped-VMEM limit: 2x (double-buffer) + headroom, clamped."""
    return int(min(max(2 * nbytes + (8 << 20), 16 << 20), 48 << 20))


def _bn_affine(mean, var, gamma, beta):
    """Fold BatchNorm (batch statistics, eps=1e-5) into per-column scale/shift."""
    s = gamma * jax.lax.rsqrt(jnp.maximum(var, 0.0) + EPS)
    return s, beta - mean * s


# ------------------------- embed kernel -------------------------

def _embed_kernel(x_ref, pe_ref, spe_ref, tpe_ref, w_ref, b_ref, o_ref):
    # pe_norm as a precomputed affine; node_emb|pe_lin as one block-diag matmul.
    pe_n = pe_ref[...] * spe_ref[...] + tpe_ref[...]
    cat = jnp.concatenate([x_ref[...], pe_n], axis=1)
    o_ref[...] = jnp.dot(cat.astype(BF16), w_ref[...],
                         preferred_element_type=F32) + b_ref[...]


def embed(x_sq, pe, s_pe, t_pe, emb_w, emb_b, *, tm=512):
    N, in_dim = x_sq.shape
    C = emb_w.shape[1]
    tm = _row_tile(N, tm)
    nm = N // tm
    nbytes = tm * (in_dim + 32 + C) * 4 + emb_w.size * 2 + (C + 64) * 4
    return pl.pallas_call(
        _embed_kernel,
        out_shape=jax.ShapeDtypeStruct((N, C), F32),
        grid=(nm,),
        in_specs=[pl.BlockSpec((tm, in_dim), lambda i: (i, 0)),
                  pl.BlockSpec((tm, 32), lambda i: (i, 0)),
                  pl.BlockSpec((1, 32), lambda i: (0, 0)),
                  pl.BlockSpec((1, 32), lambda i: (0, 0)),
                  pl.BlockSpec(emb_w.shape, lambda i: (0, 0)),
                  pl.BlockSpec((1, C), lambda i: (0, 0))],
        out_specs=pl.BlockSpec((tm, C), lambda i: (i, 0)),
        compiler_params=pltpu.CompilerParams(
            dimension_semantics=("parallel",),
            vmem_limit_bytes=_vmem_limit(nbytes)),
    )(x_sq, pe, s_pe, t_pe, emb_w, emb_b)


# ------------------------- local branch + qkv (tiled) -------------------------

def _local_qkv_kernel(a_ref, xk_ref, xm_ref, w_ref, b_ref,
                      z_ref, st_ref, acc_ref):
    # z = [a_mean@x | x] @ W_comb + b_comb   (residual + q-scale folded into W)
    # z[:, :C] = h (pre-BN local branch), z[:, C:] = qkv.
    # Also emits per-row-tile sum / sumsq of h for the BN1 statistics.
    k = pl.program_id(1)
    nk = pl.num_programs(1)

    @pl.when(k == 0)
    def _():
        acc_ref[...] = jnp.zeros_like(acc_ref)

    acc_ref[...] += jnp.dot(a_ref[...], xk_ref[...].astype(BF16),
                            preferred_element_type=F32)

    @pl.when(k == nk - 1)
    def _():
        C = xm_ref.shape[1]
        cat = jnp.concatenate([acc_ref[...], xm_ref[...]], axis=1)  # (tm, 2C)
        z = jnp.dot(cat.astype(BF16), w_ref[...],
                    preferred_element_type=F32) + b_ref[...]        # (tm, 4C)
        z_ref[...] = z
        h = z[:, :C]
        s0 = jnp.sum(h, axis=0, keepdims=True)
        s1 = jnp.sum(h * h, axis=0, keepdims=True)
        st_ref[...] = jnp.concatenate([s0, s1], axis=0)[None, :, :]


def local_and_qkv(x, a_mean_bf16, comb_w, comb_b, *, tm=256, tk=512):
    N, C = x.shape
    tm = _row_tile(N, tm)
    tk = _lane_tile(N, tk)
    nm, nk = N // tm, N // tk
    nbytes = (tm * tk * 2 + tk * C * 4 + tm * C * 4 + comb_w.size * 2
              + comb_b.size * 4 + tm * 4 * C * 4 + 2 * C * 4 + tm * C * 4)
    z, st = pl.pallas_call(
        _local_qkv_kernel,
        out_shape=(jax.ShapeDtypeStruct((N, 4 * C), F32),
                   jax.ShapeDtypeStruct((nm, 2, C), F32)),
        grid=(nm, nk),
        in_specs=[pl.BlockSpec((tm, tk), lambda i, k: (i, k)),        # a_mean
                  pl.BlockSpec((tk, C), lambda i, k: (k, 0)),         # x (K tiles)
                  pl.BlockSpec((tm, C), lambda i, k: (i, 0)),         # x (row tiles)
                  pl.BlockSpec((2 * C, 4 * C), lambda i, k: (0, 0)),  # W_comb (bf16)
                  pl.BlockSpec((1, 4 * C), lambda i, k: (0, 0))],     # b_comb
        out_specs=(pl.BlockSpec((tm, 4 * C), lambda i, k: (i, 0)),
                   pl.BlockSpec((1, 2, C), lambda i, k: (i, 0, 0))),
        scratch_shapes=[pltpu.VMEM((tm, C), F32)],
        compiler_params=pltpu.CompilerParams(
            dimension_semantics=("parallel", "arbitrary"),
            vmem_limit_bytes=_vmem_limit(nbytes)),
    )(a_mean_bf16, x, x, comb_w, comb_b)
    return z, st


# ------------------------- attention (dense-batched graphs) -------------------------

def _attention_kernel(qkv_ref, bias_ref, wo_ref, bo_ref, o_ref, cat_sc, *, heads):
    # q already carries the 1/sqrt(hd) scale (folded into in_proj weights).
    G, Nmax, C3 = qkv_ref.shape
    C = C3 // 3
    hd = C // heads
    qkv = qkv_ref[...]                      # (G, Nmax, 3C) bf16
    bias = bias_ref[...]                    # (G, 1, Nmax)  f32
    for h in range(heads):                  # static loop, per-head slices
        q = qkv[:, :, h * hd:(h + 1) * hd]
        k = qkv[:, :, C + h * hd:C + (h + 1) * hd]
        v = qkv[:, :, 2 * C + h * hd:2 * C + (h + 1) * hd]
        s = jnp.einsum('gqd,gkd->gqk', q, k, preferred_element_type=F32)
        s = s + bias                        # key_padding_mask
        m = jnp.max(s, axis=-1, keepdims=True)
        e = jnp.exp(s - m)
        inv = pl.reciprocal(jnp.sum(e, axis=-1, keepdims=True), approx=True)
        pv = jnp.einsum('gqk,gkd->gqd', e.astype(BF16), v,
                        preferred_element_type=F32)
        cat_sc[:, :, h * hd:(h + 1) * hd] = pv * inv    # post-PV normalization
    out = jnp.einsum('gnc,cd->gnd', cat_sc[...].astype(BF16), wo_ref[...],
                     preferred_element_type=F32)
    o_ref[...] = out + bo_ref[...]


def attention(qkv_dense, key_bias, w_out, b_out, heads):
    """qkv_dense: [B, Nmax, 3C] bf16; key_bias: [B, 1, Nmax] f32 -> [B, Nmax, C]."""
    B, Nmax, C3 = qkv_dense.shape
    C = C3 // 3
    G = 2 if (B % 2 == 0 and B >= 2) else 1      # graphs per grid step
    nbytes = (G * Nmax * C3 * 2 + G * Nmax * 4 + C * C * 2 + C * 4
              + 2 * G * Nmax * C * 4)
    return pl.pallas_call(
        partial(_attention_kernel, heads=heads),
        out_shape=jax.ShapeDtypeStruct((B, Nmax, C), F32),
        grid=(B // G,),
        in_specs=[pl.BlockSpec((G, Nmax, C3), lambda g: (g, 0, 0)),
                  pl.BlockSpec((G, 1, Nmax), lambda g: (g, 0, 0)),
                  pl.BlockSpec((C, C), lambda g: (0, 0)),
                  pl.BlockSpec((1, C), lambda g: (0, 0))],
        out_specs=pl.BlockSpec((G, Nmax, C), lambda g: (g, 0, 0)),
        scratch_shapes=[pltpu.VMEM((G, Nmax, C), F32)],
        compiler_params=pltpu.CompilerParams(
            dimension_semantics=("parallel",),
            vmem_limit_bytes=_vmem_limit(nbytes)),
    )(qkv_dense, key_bias, w_out, b_out)


# ------------------------- combine (tiled) -------------------------

def _combine_kernel(z_ref, y2_ref, s1_ref, t1_ref, s2_ref, t2_ref,
                    w1_ref, b1_ref, w2_ref, b2_ref, o_ref, st_ref):
    # hloc = BN1(h); h_attn = BN2(attn + x); out = hloc + h_attn;
    # out2 = out + MLP(out).  Emits per-tile sum/sumsq of out2 for BN3.
    C = y2_ref.shape[1]
    hloc = z_ref[...][:, :C] * s1_ref[...] + t1_ref[...]
    h_attn = y2_ref[...] * s2_ref[...] + t2_ref[...]
    out = hloc + h_attn
    hidden = jnp.maximum(
        jnp.dot(out.astype(BF16), w1_ref[...], preferred_element_type=F32)
        + b1_ref[...], 0.0)
    out2 = out + jnp.dot(hidden.astype(BF16), w2_ref[...],
                         preferred_element_type=F32) + b2_ref[...]
    o_ref[...] = out2
    s0 = jnp.sum(out2, axis=0, keepdims=True)
    s1v = jnp.sum(out2 * out2, axis=0, keepdims=True)
    st_ref[...] = jnp.concatenate([s0, s1v], axis=0)[None, :, :]


def combine(z, y2, s1, t1, s2, t2, lp, *, tm=512):
    N, C = y2.shape
    tm = _row_tile(N, tm)
    nm = N // tm
    nbytes = (tm * 4 * C * 4 + 2 * tm * C * 4 + 8 * C * 4
              + lp["mlp1_w"].size * 2 + lp["mlp2_w"].size * 2 + 3 * C * 4
              + tm * C * 4 + 2 * C * 4)
    out2, st = pl.pallas_call(
        _combine_kernel,
        out_shape=(jax.ShapeDtypeStruct((N, C), F32),
                   jax.ShapeDtypeStruct((nm, 2, C), F32)),
        grid=(nm,),
        in_specs=[pl.BlockSpec((tm, 4 * C), lambda i: (i, 0)),
                  pl.BlockSpec((tm, C), lambda i: (i, 0)),
                  pl.BlockSpec((1, C), lambda i: (0, 0)),
                  pl.BlockSpec((1, C), lambda i: (0, 0)),
                  pl.BlockSpec((1, C), lambda i: (0, 0)),
                  pl.BlockSpec((1, C), lambda i: (0, 0)),
                  pl.BlockSpec((C, 2 * C), lambda i: (0, 0)),
                  pl.BlockSpec((1, 2 * C), lambda i: (0, 0)),
                  pl.BlockSpec((2 * C, C), lambda i: (0, 0)),
                  pl.BlockSpec((1, C), lambda i: (0, 0))],
        out_specs=(pl.BlockSpec((tm, C), lambda i: (i, 0)),
                   pl.BlockSpec((1, 2, C), lambda i: (i, 0, 0))),
        compiler_params=pltpu.CompilerParams(
            dimension_semantics=("parallel",),
            vmem_limit_bytes=_vmem_limit(nbytes)),
    )(z, y2, s1, t1, s2, t2,
      lp["mlp1_w"], lp["mlp1_b"], lp["mlp2_w"], lp["mlp2_b"])
    return out2, st


# ------------------------- head (mean-pool + MLPs), K-tiled -------------------------

def _head_kernel(pool_ref, x_ref, cx_ref, w1_ref, b1_ref, w2_ref, b2_ref,
                 o1_ref, o2_ref, acc_ref):
    k = pl.program_id(0)

    @pl.when(k == 0)
    def _():
        acc_ref[...] = jnp.zeros_like(acc_ref)

    acc_ref[...] += jnp.dot(pool_ref[...].astype(BF16), x_ref[...].astype(BF16),
                            preferred_element_type=F32)

    @pl.when(k == pl.num_programs(0) - 1)
    def _():
        cx = cx_ref[...]
        gcat = jnp.concatenate([acc_ref[...], cx], axis=1)          # (B, 2C)
        o1_ref[...] = jnp.dot(gcat.astype(BF16), w1_ref[...],
                              preferred_element_type=F32) + b1_ref[...]
        o2_ref[...] = jnp.dot(cx.astype(BF16), w2_ref[...],
                              preferred_element_type=F32) + b2_ref[...]


def head(pool, x, c_x, p, *, tk=512):
    B, N = pool.shape
    C = x.shape[1]
    tk = _lane_tile(N, tk)
    nk = N // tk
    nbytes = (B * tk * 4 + tk * C * 4 + B * C * 4 + p["mlp_w"].size * 2
              + p["mlp2_w"].size * 2 + (384 + 768) * 4 + B * (384 + 768) * 4
              + B * C * 4)
    return pl.pallas_call(
        _head_kernel,
        out_shape=(jax.ShapeDtypeStruct((B, 384), F32),
                   jax.ShapeDtypeStruct((B, 768), F32)),
        grid=(nk,),
        in_specs=[pl.BlockSpec((B, tk), lambda k: (0, k)),
                  pl.BlockSpec((tk, C), lambda k: (k, 0)),
                  pl.BlockSpec((B, C), lambda k: (0, 0)),
                  pl.BlockSpec((2 * C, 384), lambda k: (0, 0)),
                  pl.BlockSpec((1, 384), lambda k: (0, 0)),
                  pl.BlockSpec((C, 768), lambda k: (0, 0)),
                  pl.BlockSpec((1, 768), lambda k: (0, 0))],
        out_specs=(pl.BlockSpec((B, 384), lambda k: (0, 0)),
                   pl.BlockSpec((B, 768), lambda k: (0, 0))),
        scratch_shapes=[pltpu.VMEM((B, C), F32)],
        compiler_params=pltpu.CompilerParams(
            dimension_semantics=("arbitrary",),
            vmem_limit_bytes=_vmem_limit(nbytes)),
    )(pool, x, c_x, p["mlp_w"], p["mlp_b"], p["mlp2_w"], p["mlp2_b"])


# ------------------------- parameter init -------------------------

def _w(key, shape, scale=0.1):
    return scale * jax.random.normal(key, shape, F32)


def init_gps_params(key, in_dim, channels, pe_dim, num_layers, heads=8):
    C = channels
    hd = C // heads
    qscale = 1.0 / math.sqrt(hd)
    ks = iter(jax.random.split(key, 4 + 6 * num_layers))

    # block-diagonal [node_emb | pe_lin] weight: cols 0:C-pe from x, C-pe:C from pe
    w_node = _w(next(ks), (in_dim, C - pe_dim))
    w_pe = _w(next(ks), (32, pe_dim))
    emb_w = jnp.zeros((in_dim + 32, C), F32)
    emb_w = emb_w.at[:in_dim, :C - pe_dim].set(w_node)
    emb_w = emb_w.at[in_dim:, C - pe_dim:].set(w_pe)

    p = {
        "emb_w": emb_w.astype(BF16),
        "emb_b": jnp.zeros((1, C), F32),
        "pe_norm_g": jnp.ones((1, 32), F32),
        "pe_norm_b": jnp.zeros((1, 32), F32),
        "mlp_w": _w(next(ks), (2 * C, 384)).astype(BF16),
        "mlp_b": jnp.zeros((1, 384), F32),
        "mlp2_w": _w(next(ks), (C, 768)).astype(BF16),
        "mlp2_b": jnp.zeros((1, 768), F32),
        "layers": [],
    }
    for _ in range(num_layers):
        w_l = _w(next(ks), (C, C))            # SAGE lin_l (mean-aggr neighbors)
        w_r = _w(next(ks), (C, C))            # SAGE lin_r (root features)
        b_sage = jnp.zeros((1, C), F32)
        w_qkv = _w(next(ks), (C, 3 * C))      # MHA in_proj
        b_qkv = jnp.zeros((1, 3 * C), F32)
        # combined [aggr|x] @ W_comb -> [h | q | k | v]; +I folds the residual,
        # the attention 1/sqrt(hd) scale is folded into the q columns.
        comb_w = jnp.zeros((2 * C, 4 * C), F32)
        comb_w = comb_w.at[:C, :C].set(w_l)
        comb_w = comb_w.at[C:, :C].set(w_r + jnp.eye(C, dtype=F32))
        comb_w = comb_w.at[C:, C:].set(w_qkv)
        comb_b = jnp.concatenate([b_sage, b_qkv], axis=1)
        comb_w = comb_w.at[:, C:2 * C].multiply(qscale)
        comb_b = comb_b.at[:, C:2 * C].multiply(qscale)
        p["layers"].append({
            "comb_w": comb_w.astype(BF16),
            "comb_b": comb_b,
            "out_proj_w": _w(next(ks), (C, C)).astype(BF16),
            "out_proj_b": jnp.zeros((1, C), F32),
            "mlp1_w": _w(next(ks), (C, 2 * C)).astype(BF16),
            "mlp1_b": jnp.zeros((1, 2 * C), F32),
            "mlp2_w": _w(next(ks), (2 * C, C)).astype(BF16),
            "mlp2_b": jnp.zeros((1, C), F32),
            "norm1_g": jnp.ones((1, C), F32), "norm1_b": jnp.zeros((1, C), F32),
            "norm2_g": jnp.ones((1, C), F32), "norm2_b": jnp.zeros((1, C), F32),
            "norm3_g": jnp.ones((1, C), F32), "norm3_b": jnp.zeros((1, C), F32),
        })
    return p


# ------------------------- forward pass -------------------------

def gps_conv_layer(lp, x, a_mean, batch, pos, key_bias, B, Nmax, heads):
    N, C = x.shape
    z, st1 = local_and_qkv(x, a_mean, lp["comb_w"], lp["comb_b"])    # [N,4C]
    tot = jnp.sum(st1, axis=0)                                       # (2, C)
    mean1 = tot[0:1] / N
    var1 = tot[1:2] / N - mean1 * mean1
    s1, t1 = _bn_affine(mean1, var1, lp["norm1_g"], lp["norm1_b"])

    # dense batching: one bf16 scatter per layer ([N,3C] -> [B,Nmax,3C])
    # TODO(synk): move this densify/gather into the attention kernel via a
    # scalar-prefetch (per-graph starts/counts) dynamic-slice DMA.
    qkv = z[:, C:].astype(BF16)
    qkv_dense = jnp.zeros((B, Nmax, 3 * C), BF16).at[batch, pos].set(qkv)
    attn_dense = attention(qkv_dense, key_bias,
                           lp["out_proj_w"], lp["out_proj_b"], heads)
    y2 = attn_dense[batch, pos] + x                                  # attn + residual
    mean2 = jnp.mean(y2, axis=0, keepdims=True)
    var2 = jnp.var(y2, axis=0, keepdims=True)
    s2, t2 = _bn_affine(mean2, var2, lp["norm2_g"], lp["norm2_b"])

    out2, st3 = combine(z, y2, s1, t1, s2, t2, lp)
    tot = jnp.sum(st3, axis=0)
    mean3 = tot[0:1] / N
    var3 = tot[1:2] / N - mean3 * mean3
    s3, t3 = _bn_affine(mean3, var3, lp["norm3_g"], lp["norm3_b"])
    # TODO(synk): fold this BN3 affine into the next layer's local kernel loads.
    return out2 * s3 + t3


def gps_forward(params, x, pe, edge_index, batch, center_idx,
                *, num_graphs, Nmax, heads=8):
    N = x.shape[0]
    x_sq = x[..., 0]                                                 # x.squeeze(-1)

    # pe_norm (training-mode batch stats) folded to an affine, applied in-kernel
    pe_mean = jnp.mean(pe, axis=0, keepdims=True)
    pe_var = jnp.var(pe, axis=0, keepdims=True)
    s_pe, t_pe = _bn_affine(pe_mean, pe_var, params["pe_norm_g"], params["pe_norm_b"])
    h = embed(x_sq, pe, s_pe, t_pe, params["emb_w"], params["emb_b"])  # [N, C]

    # graph-structure glue (built once, reused by every layer)
    src, dst = edge_index[0], edge_index[1]
    A = jnp.zeros((N, N), F32).at[dst, src].add(1.0)
    deg = jnp.sum(A, axis=1, keepdims=True)
    a_mean = (A / jnp.maximum(deg, 1.0)).astype(BF16)                # bf16 stream
    # TODO(synk): for large N replace the dense [N,N] mean adjacency with a
    # scalar-prefetched O(E) segment-mean gather kernel.

    onehot = (batch[None, :] == jnp.arange(num_graphs)[:, None]).astype(F32)
    counts = jnp.sum(onehot, axis=1)
    pool = onehot / jnp.maximum(counts[:, None], 1.0)                # mean-pool mat

    starts = jnp.concatenate([jnp.zeros((1,), jnp.int32),
                              jnp.cumsum(counts.astype(jnp.int32))[:-1]])
    pos = jnp.arange(N, dtype=jnp.int32) - starts[batch]             # to_dense_batch
    mask = jnp.zeros((num_graphs, Nmax), bool).at[batch, pos].set(True)
    key_bias = jnp.where(mask, 0.0, -1e9).astype(F32)[:, None, :]    # (B,1,Nmax)

    for lp in params["layers"]:
        h = gps_conv_layer(lp, h, a_mean, batch, pos, key_bias,
                           num_graphs, Nmax, heads)

    c_x = h[center_idx]                                              # [B, C]
    out1, out2 = head(pool, h, c_x, params)                          # [B,384],[B,768]
    return out1, out2


# ------------------------- demo -------------------------

if __name__ == "__main__":
    key = jax.random.PRNGKey(0)
    in_dim, channels, pe_dim, num_layers, heads = 8, 64, 8, 2, 8
    B, nodes_per_graph = 2, 8
    N = B * nodes_per_graph
    Nmax = nodes_per_graph

    k_param, k_x, k_pe = jax.random.split(key, 3)
    params = init_gps_params(k_param, in_dim, channels, pe_dim, num_layers, heads)

    x = jax.random.normal(k_x, (N, in_dim, 1), F32)
    pe = jax.random.normal(k_pe, (N, 32), F32)

    # ring graph inside each of the two graphs (bidirectional edges)
    src, dst = [], []
    for b in range(B):
        for i in range(nodes_per_graph):
            u = b * nodes_per_graph + i
            v = b * nodes_per_graph + (i + 1) % nodes_per_graph
            src += [u, v]
            dst += [v, u]
    edge_index = jnp.array([src, dst], dtype=jnp.int32)
    batch = jnp.repeat(jnp.arange(B, dtype=jnp.int32), nodes_per_graph)
    center_idx = jnp.array([0, nodes_per_graph], dtype=jnp.int32)

    fwd = jax.jit(partial(gps_forward, num_graphs=B, Nmax=Nmax, heads=heads))
    out1, out2 = fwd(params, x, pe, edge_index, batch, center_idx)
    jax.block_until_ready((out1, out2))
    assert out1.shape == (B, 384) and out2.shape == (B, 768)
    assert jnp.all(jnp.isfinite(out1)) and jnp.all(jnp.isfinite(out2))
    print("KERNEL_OK")
</pallas_src>

<mosaic_0001>
module attributes {stable_mosaic.version = 11 : i64} {
  func.func private @main(%arg0: i32) attributes {dimension_semantics = [#tpu.dimension_semantics<core_parallel>], iteration_bounds = array<i64: 2>, tpu.core_type = #tpu.core_type<sc_scalar_subcore>, window_params = []} {
    return
  }
}

module attributes {stable_mosaic.version = 11 : i64} {
  func.func private @main(%arg0: i32) attributes {dimension_semantics = [#tpu.dimension_semantics<core_parallel>], iteration_bounds = array<i64: 2>, tpu.core_type = #tpu.core_type<sc_scalar_subcore>, window_params = []} {
    return
  }
}

module attributes {stable_mosaic.version = 11 : i64} {
  func.func @_embed_kernel(%arg0: i32, %arg1: memref<16x8xf32, #tpu.memory_space<vmem>>, %arg2: memref<16x32xf32, #tpu.memory_space<vmem>>, %arg3: memref<1x32xf32, #tpu.memory_space<vmem>>, %arg4: memref<1x32xf32, #tpu.memory_space<vmem>>, %arg5: memref<40x64xbf16, #tpu.memory_space<vmem>>, %arg6: memref<1x64xf32, #tpu.memory_space<vmem>>, %arg7: memref<16x64xf32, #tpu.memory_space<vmem>>) attributes {dimension_semantics = [#tpu.dimension_semantics<parallel>], iteration_bounds = array<i64: 1>, scalar_prefetch = 0 : i64, scratch_operands = 0 : i64, tpu.core_type = #tpu.core_type<tc>, window_params = [{transform_indices = @transform_0, window_bounds = array<i64: 16, 8>}, {transform_indices = @transform_1, window_bounds = array<i64: 16, 32>}, {pipeline_mode = #tpu.pipeline_mode<synchronous>, transform_indices = @transform_2, window_bounds = array<i64: 1, 32>}, {pipeline_mode = #tpu.pipeline_mode<synchronous>, transform_indices = @transform_3, window_bounds = array<i64: 1, 32>}, {pipeline_mode = #tpu.pipeline_mode<synchronous>, transform_indices = @transform_4, window_bounds = array<i64: 40, 64>}, {pipeline_mode = #tpu.pipeline_mode<synchronous>, transform_indices = @transform_5, window_bounds = array<i64: 1, 64>}, {transform_indices = @transform_6, window_bounds = array<i64: 16, 64>}]} {
    %c0 = arith.constant 0 : index
    %c0_0 = arith.constant 0 : index
    %0 = vector.load %arg2[%c0, %c0_0] : memref<16x32xf32, #tpu.memory_space<vmem>>, vector<16x32xf32>
    %c0_1 = arith.constant 0 : index
    %c0_2 = arith.constant 0 : index
    %1 = vector.load %arg3[%c0_1, %c0_2] : memref<1x32xf32, #tpu.memory_space<vmem>>, vector<1x32xf32>
    %2 = vector.broadcast %1 : vector<1x32xf32> to vector<16x32xf32>
    %3 = arith.mulf %0, %2 : vector<16x32xf32>
    %c0_3 = arith.constant 0 : index
    %c0_4 = arith.constant 0 : index
    %4 = vector.load %arg4[%c0_3, %c0_4] : memref<1x32xf32, #tpu.memory_space<vmem>>, vector<1x32xf32>
    %5 = vector.broadcast %4 : vector<1x32xf32> to vector<16x32xf32>
    %6 = arith.addf %3, %5 : vector<16x32xf32>
    %c0_5 = arith.constant 0 : index
    %c0_6 = arith.constant 0 : index
    %7 = vector.load %arg1[%c0_5, %c0_6] : memref<16x8xf32, #tpu.memory_space<vmem>>, vector<16x8xf32>
    %8 = tpu.concatenate %7, %6 in 1 : vector<16x8xf32>, vector<16x32xf32> -> vector<16x40xf32>
    %9 = arith.truncf %8 : vector<16x40xf32> to vector<16x40xbf16>
    %c0_7 = arith.constant 0 : index
    %c0_8 = arith.constant 0 : index
    %10 = vector.load %arg5[%c0_7, %c0_8] : memref<40x64xbf16, #tpu.memory_space<vmem>>, vector<40x64xbf16>
    %cst = arith.constant dense<0.000000e+00> : vector<16x64xf32>
    %11 = tpu.matmul %9, %10, %cst {dimension_numbers = #tpu.dot_dimension_numbers<[1], [0], [0], [1], [0, 0, 1, 1], [], []>} : vector<16x40xbf16>, vector<40x64xbf16>, vector<16x64xf32> -> vector<16x64xf32>
    %c0_9 = arith.constant 0 : index
    %c0_10 = arith.constant 0 : index
    %12 = vector.load %arg6[%c0_9, %c0_10] : memref<1x64xf32, #tpu.memory_space<vmem>>, vector<1x64xf32>
    %13 = vector.broadcast %12 : vector<1x64xf32> to vector<16x64xf32>
    %14 = arith.addf %11, %13 : vector<16x64xf32>
    %c0_11 = arith.constant 0 : index
    %c0_12 = arith.constant 0 : index
    %15 = vector.load %arg7[%c0_11, %c0_12] : memref<16x64xf32, #tpu.memory_space<vmem>>, vector<16x64xf32>
    tpu.vector_store %arg7[%c0_11, %c0_12], %14 {strides = array<i32>} : memref<16x64xf32, #tpu.memory_space<vmem>>, vector<16x64xf32>,
    return
  }
  func.func @transform_0(%arg0: i32) -> (i32, i32) {
    %c0_i32 = arith.constant 0 : i32
    %c0_i32_0 = arith.constant 0 : i32
    return %arg0, %c0_i32 : i32, i32
  }
  func.func @transform_1(%arg0: i32) -> (i32, i32) {
    %c0_i32 = arith.constant 0 : i32
    %c0_i32_0 = arith.constant 0 : i32
    return %arg0, %c0_i32 : i32, i32
  }
  func.func @transform_2(%arg0: i32) -> (i32, i32) {
    %c0_i32 = arith.constant 0 : i32
    %c0_i32_0 = arith.constant 0 : i32
    %c0_i32_1 = arith.constant 0 : i32
    return %c0_i32, %c0_i32_0 : i32, i32
  }
  func.func @transform_3(%arg0: i32) -> (i32, i32) {
    %c0_i32 = arith.constant 0 : i32
    %c0_i32_0 = arith.constant 0 : i32
    %c0_i32_1 = arith.constant 0 : i32
    return %c0_i32, %c0_i32_0 : i32, i32
  }
  func.func @transform_4(%arg0: i32) -> (i32, i32) {
    %c0_i32 = arith.constant 0 : i32
    %c0_i32_0 = arith.constant 0 : i32
    %c0_i32_1 = arith.constant 0 : i32
    return %c0_i32, %c0_i32_0 : i32, i32
  }
  func.func @transform_5(%arg0: i32) -> (i32, i32) {
    %c0_i32 = arith.constant 0 : i32
    %c0_i32_0 = arith.constant 0 : i32
    %c0_i32_1 = arith.constant 0 : i32
    return %c0_i32, %c0_i32_0 : i32, i32
  }
  func.func @transform_6(%arg0: i32) -> (i32, i32) {
    %c0_i32 = arith.constant 0 : i32
    %c0_i32_0 = arith.constant 0 : i32
    return %arg0, %c0_i32 : i32, i32
  }
}

module attributes {stable_mosaic.version = 11 : i64} {
  func.func @_local_qkv_kernel(%arg0: i32, %arg1: i32, %arg2: memref<16x16xbf16, #tpu.memory_space<vmem>>, %arg3: memref<16x64xf32, #tpu.memory_space<vmem>>, %arg4: memref<16x64xf32, #tpu.memory_space<vmem>>, %arg5: memref<128x256xbf16, #tpu.memory_space<vmem>>, %arg6: memref<1x256xf32, #tpu.memory_space<vmem>>, %arg7: memref<16x256xf32, #tpu.memory_space<vmem>>, %arg8: memref<1x2x64xf32, #tpu.memory_space<vmem>>, %arg9: memref<16x64xf32, #tpu.memory_space<vmem>>) attributes {dimension_semantics = [#tpu.dimension_semantics<parallel>, #tpu.dimension_semantics<arbitrary>], iteration_bounds = array<i64: 1, 1>, scalar_prefetch = 0 : i64, scratch_operands = 1 : i64, tpu.core_type = #tpu.core_type<tc>, window_params = [{transform_indices = @transform_0, window_bounds = array<i64: 16, 16>}, {transform_indices = @transform_1, window_bounds = array<i64: 16, 64>}, {transform_indices = @transform_2, window_bounds = array<i64: 16, 64>}, {pipeline_mode = #tpu.pipeline_mode<synchronous>, transform_indices = @transform_3, window_bounds = array<i64: 128, 256>}, {pipeline_mode = #tpu.pipeline_mode<synchronous>, transform_indices = @transform_4, window_bounds = array<i64: 1, 256>}, {transform_indices = @transform_5, window_bounds = array<i64: 16, 256>}, {transform_indices = @transform_6, window_bounds = array<i64: 1, 2, 64>}]} {
    %c0_i32 = arith.constant 0 : i32
    %0 = arith.cmpi eq, %arg1, %c0_i32 : i32
    %1 = arith.extui %0 : i1 to i32
    %c0_i32_0 = arith.constant 0 : i32
    %2 = arith.cmpi ne, %1, %c0_i32_0 : i32
    scf.if %2 {
      %cst_10 = arith.constant 0.000000e+00 : f32
      %13 = vector.broadcast %cst_10 : f32 to vector<16x64xf32>
      %c0_11 = arith.constant 0 : index
      %c0_12 = arith.constant 0 : index
      %14 = vector.load %arg9[%c0_11, %c0_12] : memref<16x64xf32, #tpu.memory_space<vmem>>, vector<16x64xf32>
      tpu.vector_store %arg9[%c0_11, %c0_12], %13 {strides = array<i32>} : memref<16x64xf32, #tpu.memory_space<vmem>>, vector<16x64xf32>,
    } else {
    }
    %c0 = arith.constant 0 : index
    %c0_1 = arith.constant 0 : index
    %3 = vector.load %arg9[%c0, %c0_1] : memref<16x64xf32, #tpu.memory_space<vmem>>, vector<16x64xf32>
    %c0_2 = arith.constant 0 : index
    %c0_3 = arith.constant 0 : index
    %4 = vector.load %arg2[%c0_2, %c0_3] : memref<16x16xbf16, #tpu.memory_space<vmem>>, vector<16x16xbf16>
    %c0_4 = arith.constant 0 : index
    %c0_5 = arith.constant 0 : index
    %5 = vector.load %arg3[%c0_4, %c0_5] : memref<16x64xf32, #tpu.memory_space<vmem>>, vector<16x64xf32>
    %6 = arith.truncf %5 : vector<16x64xf32> to vector<16x64xbf16>
    %cst = arith.constant dense<0.000000e+00> : vector<16x64xf32>
    %7 = tpu.matmul %4, %6, %cst {dimension_numbers = #tpu.dot_dimension_numbers<[1], [0], [0], [1], [0, 0, 1, 1], [], []>} : vector<16x16xbf16>, vector<16x64xbf16>, vector<16x64xf32> -> vector<16x64xf32>
    %8 = arith.addf %3, %7 : vector<16x64xf32>
    %c0_6 = arith.constant 0 : index
    %c0_7 = arith.constant 0 : index
    %9 = vector.load %arg9[%c0_6, %c0_7] : memref<16x64xf32, #tpu.memory_space<vmem>>, vector<16x64xf32>
    tpu.vector_store %arg9[%c0_6, %c0_7], %8 {strides = array<i32>} : memref<16x64xf32, #tpu.memory_space<vmem>>, vector<16x64xf32>,
    %c0_i32_8 = arith.constant 0 : i32
    %10 = arith.cmpi eq, %arg1, %c0_i32_8 : i32
    %11 = arith.extui %10 : i1 to i32
    %c0_i32_9 = arith.constant 0 : i32
    %12 = arith.cmpi ne, %11, %c0_i32_9 : i32
    scf.if %12 {
      %c0_10 = arith.constant 0 : index
      %c0_11 = arith.constant 0 : index
      %13 = vector.load %arg9[%c0_10, %c0_11] : memref<16x64xf32, #tpu.memory_space<vmem>>, vector<16x64xf32>
      %c0_12 = arith.constant 0 : index
      %c0_13 = arith.constant 0 : index
      %14 = vector.load %arg4[%c0_12, %c0_13] : memref<16x64xf32, #tpu.memory_space<vmem>>, vector<16x64xf32>
      %15 = tpu.concatenate %13, %14 in 1 : vector<16x64xf32>, vector<16x64xf32> -> vector<16x128xf32>
      %16 = arith.truncf %15 : vector<16x128xf32> to vector<16x128xbf16>
      %c0_14 = arith.constant 0 : index
      %c0_15 = arith.constant 0 : index
      %17 = vector.load %arg5[%c0_14, %c0_15] : memref<128x256xbf16, #tpu.memory_space<vmem>>, vector<128x256xbf16>
      %cst_16 = arith.constant dense<0.000000e+00> : vector<16x256xf32>
      %18 = tpu.matmul %16, %17, %cst_16 {dimension_numbers = #tpu.dot_dimension_numbers<[1], [0], [0], [1], [0, 0, 1, 1], [], []>} : vector<16x128xbf16>, vector<128x256xbf16>, vector<16x256xf32> -> vector<16x256xf32>
      %c0_17 = arith.constant 0 : index
      %c0_18 = arith.constant 0 : index
      %19 = vector.load %arg6[%c0_17, %c0_18] : memref<1x256xf32, #tpu.memory_space<vmem>>, vector<1x256xf32>
      %20 = vector.broadcast %19 : vector<1x256xf32> to vector<16x256xf32>
      %21 = arith.addf %18, %20 : vector<16x256xf32>
      %c0_19 = arith.constant 0 : index
      %c0_20 = arith.constant 0 : index
      %22 = vector.load %arg7[%c0_19, %c0_20] : memref<16x256xf32, #tpu.memory_space<vmem>>, vector<16x256xf32>
      tpu.vector_store %arg7[%c0_19, %c0_20], %21 {strides = array<i32>} : memref<16x256xf32, #tpu.memory_space<vmem>>, vector<16x256xf32>,
      %23 = vector.extract_strided_slice %21 {offsets = [0, 0], sizes = [16, 64], strides = [1, 1]} : vector<16x256xf32> to vector<16x64xf32>
      %cst_21 = arith.constant dense<0.000000e+00> : vector<64xf32>
      %24 = vector.multi_reduction <add>, %23, %cst_21 [0] : vector<16x64xf32> to vector<64xf32>
      %25 = vector.shape_cast %24 : vector<64xf32> to vector<1x64xf32>
      %26 = arith.mulf %23, %23 : vector<16x64xf32>
      %cst_22 = arith.constant dense<0.000000e+00> : vector<64xf32>
      %27 = vector.multi_reduction <add>, %26, %cst_22 [0] : vector<16x64xf32> to vector<64xf32>
      %28 = vector.shape_cast %27 : vector<64xf32> to vector<1x64xf32>
      %29 = tpu.concatenate %25, %28 in 0 : vector<1x64xf32>, vector<1x64xf32> -> vector<2x64xf32>
      %30 = vector.shape_cast %29 : vector<2x64xf32> to vector<1x2x64xf32>
      %c0_23 = arith.constant 0 : index
      %c0_24 = arith.constant 0 : index
      %c0_25 = arith.constant 0 : index
      %31 = vector.load %arg8[%c0_23, %c0_24, %c0_25] : memref<1x2x64xf32, #tpu.memory_space<vmem>>, vector<1x2x64xf32>
      tpu.vector_store %arg8[%c0_23, %c0_24, %c0_25], %30 {strides = array<i32>} : memref<1x2x64xf32, #tpu.memory_space<vmem>>, vector<1x2x64xf32>,
    } else {
    }
    return
  }
  func.func @transform_0(%arg0: i32, %arg1: i32) -> (i32, i32) {
    %c0_i32 = arith.constant 0 : i32
    return %arg0, %arg1 : i32, i32
  }
  func.func @transform_1(%arg0: i32, %arg1: i32) -> (i32, i32) {
    %c0_i32 = arith.constant 0 : i32
    %c0_i32_0 = arith.constant 0 : i32
    return %arg1, %c0_i32 : i32, i32
  }
  func.func @transform_2(%arg0: i32, %arg1: i32) -> (i32, i32) {
    %c0_i32 = arith.constant 0 : i32
    %c0_i32_0 = arith.constant 0 : i32
    return %arg0, %c0_i32 : i32, i32
  }
  func.func @transform_3(%arg0: i32, %arg1: i32) -> (i32, i32) {
    %c0_i32 = arith.constant 0 : i32
    %c0_i32_0 = arith.constant 0 : i32
    %c0_i32_1 = arith.constant 0 : i32
    return %c0_i32, %c0_i32_0 : i32, i32
  }
  func.func @transform_4(%arg0: i32, %arg1: i32) -> (i32, i32) {
    %c0_i32 = arith.constant 0 : i32
    %c0_i32_0 = arith.constant 0 : i32
    %c0_i32_1 = arith.constant 0 : i32
    return %c0_i32, %c0_i32_0 : i32, i32
  }
  func.func @transform_5(%arg0: i32, %arg1: i32) -> (i32, i32) {
    %c0_i32 = arith.constant 0 : i32
    %c0_i32_0 = arith.constant 0 : i32
    return %arg0, %c0_i32 : i32, i32
  }
  func.func @transform_6(%arg0: i32, %arg1: i32) -> (i32, i32, i32) {
    %c0_i32 = arith.constant 0 : i32
    %c0_i32_0 = arith.constant 0 : i32
    %c0_i32_1 = arith.constant 0 : i32
    return %arg0, %c0_i32, %c0_i32_0 : i32, i32, i32
  }
}

module attributes {stable_mosaic.version = 11 : i64} {
  func.func @_attention_kernel(%arg0: i32, %arg1: memref<2x8x192xbf16, #tpu.memory_space<vmem>>, %arg2: memref<2x1x8xf32, #tpu.memory_space<vmem>>, %arg3: memref<64x64xbf16, #tpu.memory_space<vmem>>, %arg4: memref<1x64xf32, #tpu.memory_space<vmem>>, %arg5: memref<2x8x64xf32, #tpu.memory_space<vmem>>, %arg6: memref<2x8x64xf32, #tpu.memory_space<vmem>>) attributes {dimension_semantics = [#tpu.dimension_semantics<parallel>], iteration_bounds = array<i64: 1>, scalar_prefetch = 0 : i64, scratch_operands = 1 : i64, tpu.core_type = #tpu.core_type<tc>, window_params = [{transform_indices = @transform_0, window_bounds = array<i64: 2, 8, 192>}, {transform_indices = @transform_1, window_bounds = array<i64: 2, 1, 8>}, {pipeline_mode = #tpu.pipeline_mode<synchronous>, transform_indices = @transform_2, window_bounds = array<i64: 64, 64>}, {pipeline_mode = #tpu.pipeline_mode<synchronous>, transform_indices = @transform_3, window_bounds = array<i64: 1, 64>}, {transform_indices = @transform_4, window_bounds = array<i64: 2, 8, 64>}]} {
    %c0 = arith.constant 0 : index
    %c0_0 = arith.constant 0 : index
    %c0_1 = arith.constant 0 : index
    %0 = vector.load %arg1[%c0, %c0_0, %c0_1] : memref<2x8x192xbf16, #tpu.memory_space<vmem>>, vector<2x8x192xbf16>
    %c0_2 = arith.constant 0 : index
    %c0_3 = arith.constant 0 : index
    %c0_4 = arith.constant 0 : index
    %1 = vector.load %arg2[%c0_2, %c0_3, %c0_4] : memref<2x1x8xf32, #tpu.memory_space<vmem>>, vector<2x1x8xf32>
    %2 = vector.extract_strided_slice %0 {offsets = [0, 0, 0], sizes = [2, 8, 8], strides = [1, 1, 1]} : vector<2x8x192xbf16> to vector<2x8x8xbf16>
    %3 = vector.extract_strided_slice %0 {offsets = [0, 0, 64], sizes = [2, 8, 8], strides = [1, 1, 1]} : vector<2x8x192xbf16> to vector<2x8x8xbf16>
    %4 = vector.extract_strided_slice %0 {offsets = [0, 0, 128], sizes = [2, 8, 8], strides = [1, 1, 1]} : vector<2x8x192xbf16> to vector<2x8x8xbf16>
    "tpu.trace_start"() <{level = 10 : i32, message = "gqd,gkd->gqk"}> : () -> ()
    %cst = arith.constant dense<0.000000e+00> : vector<2x8x8xf32>
    %5 = tpu.matmul %2, %3, %cst {dimension_numbers = #tpu.dot_dimension_numbers<[2], [2], [1], [1], [0, 0, 0, 1, 1, 1], [0], [0]>} : vector<2x8x8xbf16>, vector<2x8x8xbf16>, vector<2x8x8xf32> -> vector<2x8x8xf32>
    "tpu.trace_stop"() : () -> ()
    %6 = vector.broadcast %1 : vector<2x1x8xf32> to vector<2x8x8xf32>
    %7 = arith.addf %5, %6 : vector<2x8x8xf32>
    %cst_5 = arith.constant dense<0xFF800000> : vector<2x8xf32>
    %8 = vector.multi_reduction <maximumf>, %7, %cst_5 [2] : vector<2x8x8xf32> to vector<2x8xf32>
    %9 = vector.shape_cast %8 : vector<2x8xf32> to vector<2x8x1xf32>
    %10 = vector.broadcast %9 : vector<2x8x1xf32> to vector<2x8x8xf32>
    %11 = arith.subf %7, %10 : vector<2x8x8xf32>
    %12 = math.exp %11 : vector<2x8x8xf32>
    %cst_6 = arith.constant dense<0.000000e+00> : vector<2x8xf32>
    %13 = vector.multi_reduction <add>, %12, %cst_6 [2] : vector<2x8x8xf32> to vector<2x8xf32>
    %14 = vector.shape_cast %13 : vector<2x8xf32> to vector<2x8x1xf32>
    %15 = tpu.reciprocal %14 {approx = true} : vector<2x8x1xf32> -> vector<2x8x1xf32>
    %16 = arith.truncf %12 : vector<2x8x8xf32> to vector<2x8x8xbf16>
    "tpu.trace_start"() <{level = 10 : i32, message = "gqk,gkd->gqd"}> : () -> ()
    %cst_7 = arith.constant dense<0.000000e+00> : vector<2x8x8xf32>
    %17 = tpu.matmul %16, %4, %cst_7 {dimension_numbers = #tpu.dot_dimension_numbers<[2], [1], [1], [2], [0, 0, 0, 1, 1, 2], [0], [0]>} : vector<2x8x8xbf16>, vector<2x8x8xbf16>, vector<2x8x8xf32> -> vector<2x8x8xf32>
    "tpu.trace_stop"() : () -> ()
    %18 = vector.broadcast %15 : vector<2x8x1xf32> to vector<2x8x8xf32>
    %19 = arith.mulf %17, %18 : vector<2x8x8xf32>
    %c0_8 = arith.constant 0 : index
    %c0_9 = arith.constant 0 : index
    %c0_10 = arith.constant 0 : index
    %20 = vector.load %arg6[%c0_8, %c0_9, %c0_10] : memref<2x8x64xf32, #tpu.memory_space<vmem>>, vector<2x8x8xf32>
    tpu.vector_store %arg6[%c0_8, %c0_9, %c0_10], %19 {strides = array<i32>} : memref<2x8x64xf32, #tpu.memory_space<vmem>>, vector<2x8x8xf32>,
    %21 = vector.extract_strided_slice %0 {offsets = [0, 0, 8], sizes = [2, 8, 8], strides = [1, 1, 1]} : vector<2x8x192xbf16> to vector<2x8x8xbf16>
    %22 = vector.extract_strided_slice %0 {offsets = [0, 0, 72], sizes = [2, 8, 8], strides = [1, 1, 1]} : vector<2x8x192xbf16> to vector<2x8x8xbf16>
    %23 = vector.extract_strided_slice %0 {offsets = [0, 0, 136], sizes = [2, 8, 8], strides = [1, 1, 1]} : vector<2x8x192xbf16> to vector<2x8x8xbf16>
    "tpu.trace_start"() <{level = 10 : i32, message = "gqd,gkd->gqk"}> : () -> ()
    %cst_11 = arith.constant dense<0.000000e+00> : vector<2x8x8xf32>
    %24 = tpu.matmul %21, %22, %cst_11 {dimension_numbers = #tpu.dot_dimension_numbers<[2], [2], [1], [1], [0, 0, 0, 1, 1, 1], [0], [0]>} : vector<2x8x8xbf16>, vector<2x8x8xbf16>, vector<2x8x8xf32> -> vector<2x8x8xf32>
    "tpu.trace_stop"() : () -> ()
    %25 = vector.broadcast %1 : vector<2x1x8xf32> to vector<2x8x8xf32>
    %26 = arith.addf %24, %25 : vector<2x8x8xf32>
    %cst_12 = arith.constant dense<0xFF800000> : vector<2x8xf32>
    %27 = vector.multi_reduction <maximumf>, %26, %cst_12 [2] : vector<2x8x8xf32> to vector<2x8xf32>
    %28 = vector.shape_cast %27 : vector<2x8xf32> to vector<2x8x1xf32>
    %29 = vector.broadcast %28 : vector<2x8x1xf32> to vector<2x8x8xf32>
    %30 = arith.subf %26, %29 : vector<2x8x8xf32>
    %31 = math.exp %30 : vector<2x8x8xf32>
    %cst_13 = arith.constant dense<0.000000e+00> : vector<2x8xf32>
    %32 = vector.multi_reduction <add>, %31, %cst_13 [2] : vector<2x8x8xf32> to vector<2x8xf32>
    %33 = vector.shape_cast %32 : vector<2x8xf32> to vector<2x8x1xf32>
    %34 = tpu.reciprocal %33 {approx = true} : vector<2x8x1xf32> -> vector<2x8x1xf32>
    %35 = arith.truncf %31 : vector<2x8x8xf32> to vector<2x8x8xbf16>
    "tpu.trace_start"() <{level = 10 : i32, message = "gqk,gkd->gqd"}> : () -> ()
    %cst_14 = arith.constant dense<0.000000e+00> : vector<2x8x8xf32>
    %36 = tpu.matmul %35, %23, %cst_14 {dimension_numbers = #tpu.dot_dimension_numbers<[2], [1], [1], [2], [0, 0, 0, 1, 1, 2], [0], [0]>} : vector<2x8x8xbf16>, vector<2x8x8xbf16>, vector<2x8x8xf32> -> vector<2x8x8xf32>
    "tpu.trace_stop"() : () -> ()
    %37 = vector.broadcast %34 : vector<2x8x1xf32> to vector<2x8x8xf32>
    %38 = arith.mulf %36, %37 : vector<2x8x8xf32>
    %c0_15 = arith.constant 0 : index
    %c0_16 = arith.constant 0 : index
    %c8 = arith.constant 8 : index
    %39 = vector.load %arg6[%c0_15, %c0_16, %c8] : memref<2x8x64xf32, #tpu.memory_space<vmem>>, vector<2x8x8xf32>
    tpu.vector_store %arg6[%c0_15, %c0_16, %c8], %38 {strides = array<i32>} : memref<2x8x64xf32, #tpu.memory_space<vmem>>, vector<2x8x8xf32>,
    %40 = vector.extract_strided_slice %0 {offsets = [0, 0, 16], sizes = [2, 8, 8], strides = [1, 1, 1]} : vector<2x8x192xbf16> to vector<2x8x8xbf16>
    %41 = vector.extract_strided_slice %0 {offsets = [0, 0, 80], sizes = [2, 8, 8], strides = [1, 1, 1]} : vector<2x8x192xbf16> to vector<2x8x8xbf16>
    %42 = vector.extract_strided_slice %0 {offsets = [0, 0, 144], sizes = [2, 8, 8], strides = [1, 1, 1]} : vector<2x8x192xbf16> to vector<2x8x8xbf16>
    "tpu.trace_start"() <{level = 10 : i32, message = "gqd,gkd->gqk"}> : () -> ()
    %cst_17 = arith.constant dense<0.000000e+00> : vector<2x8x8xf32>
    %43 = tpu.matmul %40, %41, %cst_17 {dimension_numbers = #tpu.dot_dimension_numbers<[2], [2], [1], [1], [0, 0, 0, 1, 1, 1], [0], [0]>} : vector<2x8x8xbf16>, vector<2x8x8xbf16>, vector<2x8x8xf32> -> vector<2x8x8xf32>
    "tpu.trace_stop"() : () -> ()
    %44 = vector.broadcast %1 : vector<2x1x8xf32> to vector<2x8x8xf32>
    %45 = arith.addf %43, %44 : vector<2x8x8xf32>
    %cst_18 = arith.constant dense<0xFF800000> : vector<2x8xf32>
    %46 = vector.multi_reduction <maximumf>, %45, %cst_18 [2] : vector<2x8x8xf32> to vector<2x8xf32>
    %47 = vector.shape_cast %46 : vector<2x8xf32> to vector<2x8x1xf32>
    %48 = vector.broadcast %47 : vector<2x8x1xf32> to vector<2x8x8xf32>
    %49 = arith.subf %45, %48 : vector<2x8x8xf32>
    %50 = math.exp %49 : vector<2x8x8xf32>
    %cst_19 = arith.constant dense<0.000000e+00> : vector<2x8xf32>
    %51 = vector.multi_reduction <add>, %50, %cst_19 [2] : vector<2x8x8xf32> to vector<2x8xf32>
    %52 = vector.shape_cast %51 : vector<2x8xf32> to vector<2x8x1xf32>
    %53 = tpu.reciprocal %52 {approx = true} : vector<2x8x1xf32> -> vector<2x8x1xf32>
    %54 = arith.truncf %50 : vector<2x8x8xf32> to vector<2x8x8xbf16>
    "tpu.trace_start"() <{level = 10 : i32, message = "gqk,gkd->gqd"}> : () -> ()
    %cst_20 = arith.constant dense<0.000000e+00> : vector<2x8x8xf32>
    %55 = tpu.matmul %54, %42, %cst_20 {dimension_numbers = #tpu.dot_dimension_numbers<[2], [1], [1], [2], [0, 0, 0, 1, 1, 2], [0], [0]>} : vector<2x8x8xbf16>, vector<2x8x8xbf16>, vector<2x8x8xf32> -> vector<2x8x8xf32>
    "tpu.trace_stop"() : () -> ()
    %56 = vector.broadcast %53 : vector<2x8x1xf32> to vector<2x8x8xf32>
    %57 = arith.mulf %55, %56 : vector<2x8x8xf32>
    %c0_21 = arith.constant 0 : index
    %c0_22 = arith.constant 0 : index
    %c16 = arith.constant 16 : index
    %58 = vector.load %arg6[%c0_21, %c0_22, %c16] : memref<2x8x64xf32, #tpu.memory_space<vmem>>, vector<2x8x8xf32>
    tpu.vector_store %arg6[%c0_21, %c0_22, %c16], %57 {strides = array<i32>} : memref<2x8x64xf32, #tpu.memory_space<vmem>>, vector<2x8x8xf32>,
    %59 = vector.extract_strided_slice %0 {offsets = [0, 0, 24], sizes = [2, 8, 8], strides = [1, 1, 1]} : vector<2x8x192xbf16> to vector<2x8x8xbf16>
    %60 = vector.extract_strided_slice %0 {offsets = [0, 0, 88], sizes = [2, 8, 8], strides = [1, 1, 1]} : vector<2x8x192xbf16> to vector<2x8x8xbf16>
    %61 = vector.extract_strided_slice %0 {offsets = [0, 0, 152], sizes = [2, 8, 8], strides = [1, 1, 1]} : vector<2x8x192xbf16> to vector<2x8x8xbf16>
    "tpu.trace_start"() <{level = 10 : i32, message = "gqd,gkd->gqk"}> : () -> ()
    %cst_23 = arith.constant dense<0.000000e+00> : vector<2x8x8xf32>
    %62 = tpu.matmul %59, %60, %cst_23 {dimension_numbers = #tpu.dot_dimension_numbers<[2], [2], [1], [1], [0, 0, 0, 1, 1, 1], [0], [0]>} : vector<2x8x8xbf16>, vector<2x8x8xbf16>, vector<2x8x8xf32> -> vector<2x8x8xf32>
    "tpu.trace_stop"() : () -> ()
    %63 = vector.broadcast %1 : vector<2x1x8xf32> to vector<2x8x8xf32>
    %64 = arith.addf %62, %63 : vector<2x8x8xf32>
    %cst_24 = arith.constant dense<0xFF800000> : vector<2x8xf32>
    %65 = vector.multi_reduction <maximumf>, %64, %cst_24 [2] : vector<2x8x8xf32> to vector<2x8xf32>
    %66 = vector.shape_cast %65 : vector<2x8xf32> to vector<2x8x1xf32>
    %67 = vector.broadcast %66 : vector<2x8x1xf32> to vector<2x8x8xf32>
    %68 = arith.subf %64, %67 : vector<2x8x8xf32>
    %69 = math.exp %68 : vector<2x8x8xf32>
    %cst_25 = arith.constant dense<0.000000e+00> : vector<2x8xf32>
    %70 = vector.multi_reduction <add>, %69, %cst_25 [2] : vector<2x8x8xf32> to vector<2x8xf32>
    %71 = vector.shape_cast %70 : vector<2x8xf32> to vector<2x8x1xf32>
    %72 = tpu.reciprocal %71 {approx = true} : vector<2x8x1xf32> -> vector<2x8x1xf32>
    %73 = arith.truncf %69 : vector<2x8x8xf32> to vector<2x8x8xbf16>
    "tpu.trace_start"() <{level = 10 : i32, message = "gqk,gkd->gqd"}> : () -> ()
    %cst_26 = arith.constant dense<0.000000e+00> : vector<2x8x8xf32>
    %74 = tpu.matmul %73, %61, %cst_26 {dimension_numbers = #tpu.dot_dimension_numbers<[2], [1], [1], [2], [0, 0, 0, 1, 1, 2], [0], [0]>} : vector<2x8x8xbf16>, vector<2x8x8xbf16>, vector<2x8x8xf32> -> vector<2x8x8xf32>
    "tpu.trace_stop"() : () -> ()
    %75 = vector.broadcast %72 : vector<2x8x1xf32> to vector<2x8x8xf32>
    %76 = arith.mulf %74, %75 : vector<2x8x8xf32>
    %c0_27 = arith.constant 0 : index
    %c0_28 = arith.constant 0 : index
    %c24 = arith.constant 24 : index
    %77 = vector.load %arg6[%c0_27, %c0_28, %c24] : memref<2x8x64xf32, #tpu.memory_space<vmem>>, vector<2x8x8xf32>
    tpu.vector_store %arg6[%c0_27, %c0_28, %c24], %76 {strides = array<i32>} : memref<2x8x64xf32, #tpu.memory_space<vmem>>, vector<2x8x8xf32>,
    %78 = vector.extract_strided_slice %0 {offsets = [0, 0, 32], sizes = [2, 8, 8], strides = [1, 1, 1]} : vector<2x8x192xbf16> to vector<2x8x8xbf16>
    %79 = vector.extract_strided_slice %0 {offsets = [0, 0, 96], sizes = [2, 8, 8], strides = [1, 1, 1]} : vector<2x8x192xbf16> to vector<2x8x8xbf16>
    %80 = vector.extract_strided_slice %0 {offsets = [0, 0, 160], sizes = [2, 8, 8], strides = [1, 1, 1]} : vector<2x8x192xbf16> to vector<2x8x8xbf16>
    "tpu.trace_start"() <{level = 10 : i32, message = "gqd,gkd->gqk"}> : () -> ()
    %cst_29 = arith.constant dense<0.000000e+00> : vector<2x8x8xf32>
    %81 = tpu.matmul %78, %79, %cst_29 {dimension_numbers = #tpu.dot_dimension_numbers<[2], [2], [1], [1], [0, 0, 0, 1, 1, 1], [0], [0]>} : vector<2x8x8xbf16>, vector<2x8x8xbf16>, vector<2x8x8xf32> -> vector<2x8x8xf32>
    "tpu.trace_stop"() : () -> ()
    %82 = vector.broadcast %1 : vector<2x1x8xf32> to vector<2x8x8xf32>
    %83 = arith.addf %81, %82 : vector<2x8x8xf32>
    %cst_30 = arith.constant dense<0xFF800000> : vector<2x8xf32>
    %84 = vector.multi_reduction <maximumf>, %83, %cst_30 [2] : vector<2x8x8xf32> to vector<2x8xf32>
    %85 = vector.shape_cast %84 : vector<2x8xf32> to vector<2x8x1xf32>
    %86 = vector.broadcast %85 : vector<2x8x1xf32> to vector<2x8x8xf32>
    %87 = arith.subf %83, %86 : vector<2x8x8xf32>
    %88 = math.exp %87 : vector<2x8x8xf32>
    %cst_31 = arith.constant dense<0.000000e+00> : vector<2x8xf32>
    %89 = vector.multi_reduction <add>, %88, %cst_31 [2] : vector<2x8x8xf32> to vector<2x8xf32>
    %90 = vector.shape_cast %89 : vector<2x8xf32> to vector<2x8x1xf32>
    %91 = tpu.reciprocal %90 {approx = true} : vector<2x8x1xf32> -> vector<2x8x1xf32>
    %92 = arith.truncf %88 : vector<2x8x8xf32> to vector<2x8x8xbf16>
    "tpu.trace_start"() <{level = 10 : i32, message = "gqk,gkd->gqd"}> : () -> ()
    %cst_32 = arith.constant dense<0.000000e+00> : vector<2x8x8xf32>
    %93 = tpu.matmul %92, %80, %cst_32 {dimension_numbers = #tpu.dot_dimension_numbers<[2], [1], [1], [2], [0, 0, 0, 1, 1, 2], [0], [0]>} : vector<2x8x8xbf16>, vector<2x8x8xbf16>, vector<2x8x8xf32> -> vector<2x8x8xf32>
    "tpu.trace_stop"() : () -> ()
    %94 = vector.broadcast %91 : vector<2x8x1xf32> to vector<2x8x8xf32>
    %95 = arith.mulf %93, %94 : vector<2x8x8xf32>
    %c0_33 = arith.constant 0 : index
    %c0_34 = arith.constant 0 : index
    %c32 = arith.constant 32 : index
    %96 = vector.load %arg6[%c0_33, %c0_34, %c32] : memref<2x8x64xf32, #tpu.memory_space<vmem>>, vector<2x8x8xf32>
    tpu.vector_store %arg6[%c0_33, %c0_34, %c32], %95 {strides = array<i32>} : memref<2x8x64xf32, #tpu.memory_space<vmem>>, vector<2x8x8xf32>,
    %97 = vector.extract_strided_slice %0 {offsets = [0, 0, 40], sizes = [2, 8, 8], strides = [1, 1, 1]} : vector<2x8x192xbf16> to vector<2x8x8xbf16>
    %98 = vector.extract_strided_slice %0 {offsets = [0, 0, 104], sizes = [2, 8, 8], strides = [1, 1, 1]} : vector<2x8x192xbf16> to vector<2x8x8xbf16>
    %99 = vector.extract_strided_slice %0 {offsets = [0, 0, 168], sizes = [2, 8, 8], strides = [1, 1, 1]} : vector<2x8x192xbf16> to vector<2x8x8xbf16>
    "tpu.trace_start"() <{level = 10 : i32, message = "gqd,gkd->gqk"}> : () -> ()
    %cst_35 = arith.constant dense<0.000000e+00> : vector<2x8x8xf32>
    %100 = tpu.matmul %97, %98, %cst_35 {dimension_numbers = #tpu.dot_dimension_numbers<[2], [2], [1], [1], [0, 0, 0, 1, 1, 1], [0], [0]>} : vector<2x8x8xbf16>, vector<2x8x8xbf16>, vector<2x8x8xf32> -> vector<2x8x8xf32>
    "tpu.trace_stop"() : () -> ()
    %101 = vector.broadcast %1 : vector<2x1x8xf32> to vector<2x8x8xf32>
    %102 = arith.addf %100, %101 : vector<2x8x8xf32>
    %cst_36 = arith.constant dense<0xFF800000> : vector<2x8xf32>
    %103 = vector.multi_reduction <maximumf>, %102, %cst_36 [2] : vector<2x8x8xf32> to vector<2x8xf32>
    %104 = vector.shape_cast %103 : vector<2x8xf32> to vector<2x8x1xf32>
    %105 = vector.broadcast %104 : vector<2x8x1xf32> to vector<2x8x8xf32>
    %106 = arith.subf %102, %105 : vector<2x8x8xf32>
    %107 = math.exp %106 : vector<2x8x8xf32>
    %cst_37 = arith.constant dense<0.000000e+00> : vector<2x8xf32>
    %108 = vector.multi_reduction <add>, %107, %cst_37 [2] : vector<2x8x8xf32> to vector<2x8xf32>
    %109 = vector.shape_cast %108 : vector<2x8xf32> to vector<2x8x1xf32>
    %110 = tpu.reciprocal %109 {approx = true} : vector<2x8x1xf32> -> vector<2x8x1xf32>
    %111 = arith.truncf %107 : vector<2x8x8xf32> to vector<2x8x8xbf16>
    "tpu.trace_start"() <{level = 10 : i32, message = "gqk,gkd->gqd"}> : () -> ()
    %cst_38 = arith.constant dense<0.000000e+00> : vector<2x8x8xf32>
    %112 = tpu.matmul %111, %99, %cst_38 {dimension_numbers = #tpu.dot_dimension_numbers<[2], [1], [1], [2], [0, 0, 0, 1, 1, 2], [0], [0]>} : vector<2x8x8xbf16>, vector<2x8x8xbf16>, vector<2x8x8xf32> -> vector<2x8x8xf32>
    "tpu.trace_stop"() : () -> ()
    %113 = vector.broadcast %110 : vector<2x8x1xf32> to vector<2x8x8xf32>
    %114 = arith.mulf %112, %113 : vector<2x8x8xf32>
    %c0_39 = arith.constant 0 : index
    %c0_40 = arith.constant 0 : index
    %c40 = arith.constant 40 : index
    %115 = vector.load %arg6[%c0_39, %c0_40, %c40] : memref<2x8x64xf32, #tpu.memory_space<vmem>>, vector<2x8x8xf32>
    tpu.vector_store %arg6[%c0_39, %c0_40, %c40], %114 {strides = array<i32>} : memref<2x8x64xf32, #tpu.memory_space<vmem>>, vector<2x8x8xf32>,
    %116 = vector.extract_strided_slice %0 {offsets = [0, 0, 48], sizes = [2, 8, 8], strides = [1, 1, 1]} : vector<2x8x192xbf16> to vector<2x8x8xbf16>
    %117 = vector.extract_strided_slice %0 {offsets = [0, 0, 112], sizes = [2, 8, 8], strides = [1, 1, 1]} : vector<2x8x192xbf16> to vector<2x8x8xbf16>
    %118 = vector.extract_strided_slice %0 {offsets = [0, 0, 176], sizes = [2, 8, 8], strides = [1, 1, 1]} : vector<2x8x192xbf16> to vector<2x8x8xbf16>
    "tpu.trace_start"() <{level = 10 : i32, message = "gqd,gkd->gqk"}> : () -> ()
    %cst_41 = arith.constant dense<0.000000e+00> : vector<2x8x8xf32>
    %119 = tpu.matmul %116, %117, %cst_41 {dimension_numbers = #tpu.dot_dimension_numbers<[2], [2], [1], [1], [0, 0, 0, 1, 1, 1], [0], [0]>} : vector<2x8x8xbf16>, vector<2x8x8xbf16>, vector<2x8x8xf32> -> vector<2x8x8xf32>
    "tpu.trace_stop"() : () -> ()
    %120 = vector.broadcast %1 : vector<2x1x8xf32> to vector<2x8x8xf32>
    %121 = arith.addf %119, %120 : vector<2x8x8xf32>
    %cst_42 = arith.constant dense<0xFF800000> : vector<2x8xf32>
    %122 = vector.multi_reduction <maximumf>, %121, %cst_42 [2] : vector<2x8x8xf32> to vector<2x8xf32>
    %123 = vector.shape_cast %122 : vector<2x8xf32> to vector<2x8x1xf32>
    %124 = vector.broadcast %123 : vector<2x8x1xf32> to vector<2x8x8xf32>
    %125 = arith.subf %121, %124 : vector<2x8x8xf32>
    %126 = math.exp %125 : vector<2x8x8xf32>
    %cst_43 = arith.constant dense<0.000000e+00> : vector<2x8xf32>
    %127 = vector.multi_reduction <add>, %126, %cst_43 [2] : vector<2x8x8xf32> to vector<2x8xf32>
    %128 = vector.shape_cast %127 : vector<2x8xf32> to vector<2x8x1xf32>
    %129 = tpu.reciprocal %128 {approx = true} : vector<2x8x1xf32> -> vector<2x8x1xf32>
    %130 = arith.truncf %126 : vector<2x8x8xf32> to vector<2x8x8xbf16>
    "tpu.trace_start"() <{level = 10 : i32, message = "gqk,gkd->gqd"}> : () -> ()
    %cst_44 = arith.constant dense<0.000000e+00> : vector<2x8x8xf32>
    %131 = tpu.matmul %130, %118, %cst_44 {dimension_numbers = #tpu.dot_dimension_numbers<[2], [1], [1], [2], [0, 0, 0, 1, 1, 2], [0], [0]>} : vector<2x8x8xbf16>, vector<2x8x8xbf16>, vector<2x8x8xf32> -> vector<2x8x8xf32>
    "tpu.trace_stop"() : () -> ()
    %132 = vector.broadcast %129 : vector<2x8x1xf32> to vector<2x8x8xf32>
    %133 = arith.mulf %131, %132 : vector<2x8x8xf32>
    %c0_45 = arith.constant 0 : index
    %c0_46 = arith.constant 0 : index
    %c48 = arith.constant 48 : index
    %134 = vector.load %arg6[%c0_45, %c0_46, %c48] : memref<2x8x64xf32, #tpu.memory_space<vmem>>, vector<2x8x8xf32>
    tpu.vector_store %arg6[%c0_45, %c0_46, %c48], %133 {strides = array<i32>} : memref<2x8x64xf32, #tpu.memory_space<vmem>>, vector<2x8x8xf32>,
    %135 = vector.extract_strided_slice %0 {offsets = [0, 0, 56], sizes = [2, 8, 8], strides = [1, 1, 1]} : vector<2x8x192xbf16> to vector<2x8x8xbf16>
    %136 = vector.extract_strided_slice %0 {offsets = [0, 0, 120], sizes = [2, 8, 8], strides = [1, 1, 1]} : vector<2x8x192xbf16> to vector<2x8x8xbf16>
    %137 = vector.extract_strided_slice %0 {offsets = [0, 0, 184], sizes = [2, 8, 8], strides = [1, 1, 1]} : vector<2x8x192xbf16> to vector<2x8x8xbf16>
    "tpu.trace_start"() <{level = 10 : i32, message = "gqd,gkd->gqk"}> : () -> ()
    %cst_47 = arith.constant dense<0.000000e+00> : vector<2x8x8xf32>
    %138 = tpu.matmul %135, %136, %cst_47 {dimension_numbers = #tpu.dot_dimension_numbers<[2], [2], [1], [1], [0, 0, 0, 1, 1, 1], [0], [0]>} : vector<2x8x8xbf16>, vector<2x8x8xbf16>, vector<2x8x8xf32> -> vector<2x8x8xf32>
    "tpu.trace_stop"() : () -> ()
    %139 = vector.broadcast %1 : vector<2x1x8xf32> to vector<2x8x8xf32>
    %140 = arith.addf %138, %139 : vector<2x8x8xf32>
    %cst_48 = arith.constant dense<0xFF800000> : vector<2x8xf32>
    %141 = vector.multi_reduction <maximumf>, %140, %cst_48 [2] : vector<2x8x8xf32> to vector<2x8xf32>
    %142 = vector.shape_cast %141 : vector<2x8xf32> to vector<2x8x1xf32>
    %143 = vector.broadcast %142 : vector<2x8x1xf32> to vector<2x8x8xf32>
    %144 = arith.subf %140, %143 : vector<2x8x8xf32>
    %145 = math.exp %144 : vector<2x8x8xf32>
    %cst_49 = arith.constant dense<0.000000e+00> : vector<2x8xf32>
    %146 = vector.multi_reduction <add>, %145, %cst_49 [2] : vector<2x8x8xf32> to vector<2x8xf32>
    %147 = vector.shape_cast %146 : vector<2x8xf32> to vector<2x8x1xf32>
    %148 = tpu.reciprocal %147 {approx = true} : vector<2x8x1xf32> -> vector<2x8x1xf32>
    %149 = arith.truncf %145 : vector<2x8x8xf32> to vector<2x8x8xbf16>
    "tpu.trace_start"() <{level = 10 : i32, message = "gqk,gkd->gqd"}> : () -> ()
    %cst_50 = arith.constant dense<0.000000e+00> : vector<2x8x8xf32>
    %150 = tpu.matmul %149, %137, %cst_50 {dimension_numbers = #tpu.dot_dimension_numbers<[2], [1], [1], [2], [0, 0, 0, 1, 1, 2], [0], [0]>} : vector<2x8x8xbf16>, vector<2x8x8xbf16>, vector<2x8x8xf32> -> vector<2x8x8xf32>
    "tpu.trace_stop"() : () -> ()
    %151 = vector.broadcast %148 : vector<2x8x1xf32> to vector<2x8x8xf32>
    %152 = arith.mulf %150, %151 : vector<2x8x8xf32>
    %c0_51 = arith.constant 0 : index
    %c0_52 = arith.constant 0 : index
    %c56 = arith.constant 56 : index
    %153 = vector.load %arg6[%c0_51, %c0_52, %c56] : memref<2x8x64xf32, #tpu.memory_space<vmem>>, vector<2x8x8xf32>
    tpu.vector_store %arg6[%c0_51, %c0_52, %c56], %152 {strides = array<i32>} : memref<2x8x64xf32, #tpu.memory_space<vmem>>, vector<2x8x8xf32>,
    %c0_53 = arith.constant 0 : index
    %c0_54 = arith.constant 0 : index
    %c0_55 = arith.constant 0 : index
    %154 = vector.load %arg6[%c0_53, %c0_54, %c0_55] : memref<2x8x64xf32, #tpu.memory_space<vmem>>, vector<2x8x64xf32>
    %155 = arith.truncf %154 : vector<2x8x64xf32> to vector<2x8x64xbf16>
    %c0_56 = arith.constant 0 : index
    %c0_57 = arith.constant 0 : index
    %156 = vector.load %arg3[%c0_56, %c0_57] : memref<64x64xbf16, #tpu.memory_space<vmem>>, vector<64x64xbf16>
    "tpu.trace_start"() <{level = 10 : i32, message = "gnc,cd->gnd"}> : () -> ()
    %cst_58 = arith.constant dense<0.000000e+00> : vector<2x8x64xf32>
    %157 = tpu.matmul %155, %156, %cst_58 {dimension_numbers = #tpu.dot_dimension_numbers<[2], [0], [0, 1], [1], [0, 0, 0, 1, 1, 1], [], []>} : vector<2x8x64xbf16>, vector<64x64xbf16>, vector<2x8x64xf32> -> vector<2x8x64xf32>
    "tpu.trace_stop"() : () -> ()
    %c0_59 = arith.constant 0 : index
    %c0_60 = arith.constant 0 : index
    %158 = vector.load %arg4[%c0_59, %c0_60] : memref<1x64xf32, #tpu.memory_space<vmem>>, vector<1x64xf32>
    %159 = vector.shape_cast %158 : vector<1x64xf32> to vector<1x1x64xf32>
    %160 = vector.broadcast %159 : vector<1x1x64xf32> to vector<2x8x64xf32>
    %161 = arith.addf %157, %160 : vector<2x8x64xf32>
    %c0_61 = arith.constant 0 : index
    %c0_62 = arith.constant 0 : index
    %c0_63 = arith.constant 0 : index
    %162 = vector.load %arg5[%c0_61, %c0_62, %c0_63] : memref<2x8x64xf32, #tpu.memory_space<vmem>>, vector<2x8x64xf32>
    tpu.vector_store %arg5[%c0_61, %c0_62, %c0_63], %161 {strides = array<i32>} : memref<2x8x64xf32, #tpu.memory_space<vmem>>, vector<2x8x64xf32>,
    return
  }
  func.func @transform_0(%arg0: i32) -> (i32, i32, i32) {
    %c0_i32 = arith.constant 0 : i32
    %c0_i32_0 = arith.constant 0 : i32
    %c0_i32_1 = arith.constant 0 : i32
    return %arg0, %c0_i32, %c0_i32_0 : i32, i32, i32
  }
  func.func @transform_1(%arg0: i32) -> (i32, i32, i32) {
    %c0_i32 = arith.constant 0 : i32
    %c0_i32_0 = arith.constant 0 : i32
    %c0_i32_1 = arith.constant 0 : i32
    return %arg0, %c0_i32, %c0_i32_0 : i32, i32, i32
  }
  func.func @transform_2(%arg0: i32) -> (i32, i32) {
    %c0_i32 = arith.constant 0 : i32
    %c0_i32_0 = arith.constant 0 : i32
    %c0_i32_1 = arith.constant 0 : i32
    return %c0_i32, %c0_i32_0 : i32, i32
  }
  func.func @transform_3(%arg0: i32) -> (i32, i32) {
    %c0_i32 = arith.constant 0 : i32
    %c0_i32_0 = arith.constant 0 : i32
    %c0_i32_1 = arith.constant 0 : i32
    return %c0_i32, %c0_i32_0 : i32, i32
  }
  func.func @transform_4(%arg0: i32) -> (i32, i32, i32) {
    %c0_i32 = arith.constant 0 : i32
    %c0_i32_0 = arith.constant 0 : i32
    %c0_i32_1 = arith.constant 0 : i32
    return %arg0, %c0_i32, %c0_i32_0 : i32, i32, i32
  }
}

module attributes {stable_mosaic.version = 11 : i64} {
  func.func @_combine_kernel(%arg0: i32, %arg1: memref<16x256xf32, #tpu.memory_space<vmem>>, %arg2: memref<16x64xf32, #tpu.memory_space<vmem>>, %arg3: memref<1x64xf32, #tpu.memory_space<vmem>>, %arg4: memref<1x64xf32, #tpu.memory_space<vmem>>, %arg5: memref<1x64xf32, #tpu.memory_space<vmem>>, %arg6: memref<1x64xf32, #tpu.memory_space<vmem>>, %arg7: memref<64x128xbf16, #tpu.memory_space<vmem>>, %arg8: memref<1x128xf32, #tpu.memory_space<vmem>>, %arg9: memref<128x64xbf16, #tpu.memory_space<vmem>>, %arg10: memref<1x64xf32, #tpu.memory_space<vmem>>, %arg11: memref<16x64xf32, #tpu.memory_space<vmem>>, %arg12: memref<1x2x64xf32, #tpu.memory_space<vmem>>) attributes {dimension_semantics = [#tpu.dimension_semantics<parallel>], iteration_bounds = array<i64: 1>, scalar_prefetch = 0 : i64, scratch_operands = 0 : i64, tpu.core_type = #tpu.core_type<tc>, window_params = [{transform_indices = @transform_0, window_bounds = array<i64: 16, 256>}, {transform_indices = @transform_1, window_bounds = array<i64: 16, 64>}, {pipeline_mode = #tpu.pipeline_mode<synchronous>, transform_indices = @transform_2, window_bounds = array<i64: 1, 64>}, {pipeline_mode = #tpu.pipeline_mode<synchronous>, transform_indices = @transform_3, window_bounds = array<i64: 1, 64>}, {pipeline_mode = #tpu.pipeline_mode<synchronous>, transform_indices = @transform_4, window_bounds = array<i64: 1, 64>}, {pipeline_mode = #tpu.pipeline_mode<synchronous>, transform_indices = @transform_5, window_bounds = array<i64: 1, 64>}, {pipeline_mode = #tpu.pipeline_mode<synchronous>, transform_indices = @transform_6, window_bounds = array<i64: 64, 128>}, {pipeline_mode = #tpu.pipeline_mode<synchronous>, transform_indices = @transform_7, window_bounds = array<i64: 1, 128>}, {pipeline_mode = #tpu.pipeline_mode<synchronous>, transform_indices = @transform_8, window_bounds = array<i64: 128, 64>}, {pipeline_mode = #tpu.pipeline_mode<synchronous>, transform_indices = @transform_9, window_bounds = array<i64: 1, 64>}, {transform_indices = @transform_10, window_bounds = array<i64: 16, 64>}, {transform_indices = @transform_11, window_bounds = array<i64: 1, 2, 64>}]} {
    %c0 = arith.constant 0 : index
    %c0_0 = arith.constant 0 : index
    %0 = vector.load %arg1[%c0, %c0_0] : memref<16x256xf32, #tpu.memory_space<vmem>>, vector<16x256xf32>
    %1 = vector.extract_strided_slice %0 {offsets = [0, 0], sizes = [16, 64], strides = [1, 1]} : vector<16x256xf32> to vector<16x64xf32>
    %c0_1 = arith.constant 0 : index
    %c0_2 = arith.constant 0 : index
    %2 = vector.load %arg3[%c0_1, %c0_2] : memref<1x64xf32, #tpu.memory_space<vmem>>, vector<1x64xf32>
    %3 = vector.broadcast %2 : vector<1x64xf32> to vector<16x64xf32>
    %4 = arith.mulf %1, %3 : vector<16x64xf32>
    %c0_3 = arith.constant 0 : index
    %c0_4 = arith.constant 0 : index
    %5 = vector.load %arg4[%c0_3, %c0_4] : memref<1x64xf32, #tpu.memory_space<vmem>>, vector<1x64xf32>
    %6 = vector.broadcast %5 : vector<1x64xf32> to vector<16x64xf32>
    %7 = arith.addf %4, %6 : vector<16x64xf32>
    %c0_5 = arith.constant 0 : index
    %c0_6 = arith.constant 0 : index
    %8 = vector.load %arg2[%c0_5, %c0_6] : memref<16x64xf32, #tpu.memory_space<vmem>>, vector<16x64xf32>
    %c0_7 = arith.constant 0 : index
    %c0_8 = arith.constant 0 : index
    %9 = vector.load %arg5[%c0_7, %c0_8] : memref<1x64xf32, #tpu.memory_space<vmem>>, vector<1x64xf32>
    %10 = vector.broadcast %9 : vector<1x64xf32> to vector<16x64xf32>
    %11 = arith.mulf %8, %10 : vector<16x64xf32>
    %c0_9 = arith.constant 0 : index
    %c0_10 = arith.constant 0 : index
    %12 = vector.load %arg6[%c0_9, %c0_10] : memref<1x64xf32, #tpu.memory_space<vmem>>, vector<1x64xf32>
    %13 = vector.broadcast %12 : vector<1x64xf32> to vector<16x64xf32>
    %14 = arith.addf %11, %13 : vector<16x64xf32>
    %15 = arith.addf %7, %14 : vector<16x64xf32>
    %16 = arith.truncf %15 : vector<16x64xf32> to vector<16x64xbf16>
    %c0_11 = arith.constant 0 : index
    %c0_12 = arith.constant 0 : index
    %17 = vector.load %arg7[%c0_11, %c0_12] : memref<64x128xbf16, #tpu.memory_space<vmem>>, vector<64x128xbf16>
    %cst = arith.constant dense<0.000000e+00> : vector<16x128xf32>
    %18 = tpu.matmul %16, %17, %cst {dimension_numbers = #tpu.dot_dimension_numbers<[1], [0], [0], [1], [0, 0, 1, 1], [], []>} : vector<16x64xbf16>, vector<64x128xbf16>, vector<16x128xf32> -> vector<16x128xf32>
    %c0_13 = arith.constant 0 : index
    %c0_14 = arith.constant 0 : index
    %19 = vector.load %arg8[%c0_13, %c0_14] : memref<1x128xf32, #tpu.memory_space<vmem>>, vector<1x128xf32>
    %20 = vector.broadcast %19 : vector<1x128xf32> to vector<16x128xf32>
    %21 = arith.addf %18, %20 : vector<16x128xf32>
    %cst_15 = arith.constant 0.000000e+00 : f32
    %22 = vector.broadcast %cst_15 : f32 to vector<16x128xf32>
    %23 = arith.maximumf %21, %22 : vector<16x128xf32>
    %24 = arith.truncf %23 : vector<16x128xf32> to vector<16x128xbf16>
    %c0_16 = arith.constant 0 : index
    %c0_17 = arith.constant 0 : index
    %25 = vector.load %arg9[%c0_16, %c0_17] : memref<128x64xbf16, #tpu.memory_space<vmem>>, vector<128x64xbf16>
    %cst_18 = arith.constant dense<0.000000e+00> : vector<16x64xf32>
    %26 = tpu.matmul %24, %25, %cst_18 {dimension_numbers = #tpu.dot_dimension_numbers<[1], [0], [0], [1], [0, 0, 1, 1], [], []>} : vector<16x128xbf16>, vector<128x64xbf16>, vector<16x64xf32> -> vector<16x64xf32>
    %27 = arith.addf %15, %26 : vector<16x64xf32>
    %c0_19 = arith.constant 0 : index
    %c0_20 = arith.constant 0 : index
    %28 = vector.load %arg10[%c0_19, %c0_20] : memref<1x64xf32, #tpu.memory_space<vmem>>, vector<1x64xf32>
    %29 = vector.broadcast %28 : vector<1x64xf32> to vector<16x64xf32>
    %30 = arith.addf %27, %29 : vector<16x64xf32>
    %c0_21 = arith.constant 0 : index
    %c0_22 = arith.constant 0 : index
    %31 = vector.load %arg11[%c0_21, %c0_22] : memref<16x64xf32, #tpu.memory_space<vmem>>, vector<16x64xf32>
    tpu.vector_store %arg11[%c0_21, %c0_22], %30 {strides = array<i32>} : memref<16x64xf32, #tpu.memory_space<vmem>>, vector<16x64xf32>,
    %cst_23 = arith.constant dense<0.000000e+00> : vector<64xf32>
    %32 = vector.multi_reduction <add>, %30, %cst_23 [0] : vector<16x64xf32> to vector<64xf32>
    %33 = vector.shape_cast %32 : vector<64xf32> to vector<1x64xf32>
    %34 = arith.mulf %30, %30 : vector<16x64xf32>
    %cst_24 = arith.constant dense<0.000000e+00> : vector<64xf32>
    %35 = vector.multi_reduction <add>, %34, %cst_24 [0] : vector<16x64xf32> to vector<64xf32>
    %36 = vector.shape_cast %35 : vector<64xf32> to vector<1x64xf32>
    %37 = tpu.concatenate %33, %36 in 0 : vector<1x64xf32>, vector<1x64xf32> -> vector<2x64xf32>
    %38 = vector.shape_cast %37 : vector<2x64xf32> to vector<1x2x64xf32>
    %c0_25 = arith.constant 0 : index
    %c0_26 = arith.constant 0 : index
    %c0_27 = arith.constant 0 : index
    %39 = vector.load %arg12[%c0_25, %c0_26, %c0_27] : memref<1x2x64xf32, #tpu.memory_space<vmem>>, vector<1x2x64xf32>
    tpu.vector_store %arg12[%c0_25, %c0_26, %c0_27], %38 {strides = array<i32>} : memref<1x2x64xf32, #tpu.memory_space<vmem>>, vector<1x2x64xf32>,
    return
  }
  func.func @transform_0(%arg0: i32) -> (i32, i32) {
    %c0_i32 = arith.constant 0 : i32
    %c0_i32_0 = arith.constant 0 : i32
    return %arg0, %c0_i32 : i32, i32
  }
  func.func @transform_1(%arg0: i32) -> (i32, i32) {
    %c0_i32 = arith.constant 0 : i32
    %c0_i32_0 = arith.constant 0 : i32
    return %arg0, %c0_i32 : i32, i32
  }
  func.func @transform_2(%arg0: i32) -> (i32, i32) {
    %c0_i32 = arith.constant 0 : i32
    %c0_i32_0 = arith.constant 0 : i32
    %c0_i32_1 = arith.constant 0 : i32
    return %c0_i32, %c0_i32_0 : i32, i32
  }
  func.func @transform_3(%arg0: i32) -> (i32, i32) {
    %c0_i32 = arith.constant 0 : i32
    %c0_i32_0 = arith.constant 0 : i32
    %c0_i32_1 = arith.constant 0 : i32
    return %c0_i32, %c0_i32_0 : i32, i32
  }
  func.func @transform_4(%arg0: i32) -> (i32, i32) {
    %c0_i32 = arith.constant 0 : i32
    %c0_i32_0 = arith.constant 0 : i32
    %c0_i32_1 = arith.constant 0 : i32
    return %c0_i32, %c0_i32_0 : i32, i32
  }
  func.func @transform_5(%arg0: i32) -> (i32, i32) {
    %c0_i32 = arith.constant 0 : i32
    %c0_i32_0 = arith.constant 0 : i32
    %c0_i32_1 = arith.constant 0 : i32
    return %c0_i32, %c0_i32_0 : i32, i32
  }
  func.func @transform_6(%arg0: i32) -> (i32, i32) {
    %c0_i32 = arith.constant 0 : i32
    %c0_i32_0 = arith.constant 0 : i32
    %c0_i32_1 = arith.constant 0 : i32
    return %c0_i32, %c0_i32_0 : i32, i32
  }
  func.func @transform_7(%arg0: i32) -> (i32, i32) {
    %c0_i32 = arith.constant 0 : i32
    %c0_i32_0 = arith.constant 0 : i32
    %c0_i32_1 = arith.constant 0 : i32
    return %c0_i32, %c0_i32_0 : i32, i32
  }
  func.func @transform_8(%arg0: i32) -> (i32, i32) {
    %c0_i32 = arith.constant 0 : i32
    %c0_i32_0 = arith.constant 0 : i32
    %c0_i32_1 = arith.constant 0 : i32
    return %c0_i32, %c0_i32_0 : i32, i32
  }
  func.func @transform_9(%arg0: i32) -> (i32, i32) {
    %c0_i32 = arith.constant 0 : i32
    %c0_i32_0 = arith.constant 0 : i32
    %c0_i32_1 = arith.constant 0 : i32
    return %c0_i32, %c0_i32_0 : i32, i32
  }
  func.func @transform_10(%arg0: i32) -> (i32, i32) {
    %c0_i32 = arith.constant 0 : i32
    %c0_i32_0 = arith.constant 0 : i32
    return %arg0, %c0_i32 : i32, i32
  }
  func.func @transform_11(%arg0: i32) -> (i32, i32, i32) {
    %c0_i32 = arith.constant 0 : i32
    %c0_i32_0 = arith.constant 0 : i32
    %c0_i32_1 = arith.constant 0 : i32
    return %arg0, %c0_i32, %c0_i32_0 : i32, i32, i32
  }
}

module attributes {stable_mosaic.version = 11 : i64} {
  func.func @_head_kernel(%arg0: i32, %arg1: memref<2x16xf32, #tpu.memory_space<vmem>>, %arg2: memref<16x64xf32, #tpu.memory_space<vmem>>, %arg3: memref<2x64xf32, #tpu.memory_space<vmem>>, %arg4: memref<128x384xbf16, #tpu.memory_space<vmem>>, %arg5: memref<1x384xf32, #tpu.memory_space<vmem>>, %arg6: memref<64x768xbf16, #tpu.memory_space<vmem>>, %arg7: memref<1x768xf32, #tpu.memory_space<vmem>>, %arg8: memref<2x384xf32, #tpu.memory_space<vmem>>, %arg9: memref<2x768xf32, #tpu.memory_space<vmem>>, %arg10: memref<2x64xf32, #tpu.memory_space<vmem>>) attributes {dimension_semantics = [#tpu.dimension_semantics<arbitrary>], iteration_bounds = array<i64: 1>, scalar_prefetch = 0 : i64, scratch_operands = 1 : i64, tpu.core_type = #tpu.core_type<tc>, window_params = [{transform_indices = @transform_0, window_bounds = array<i64: 2, 16>}, {transform_indices = @transform_1, window_bounds = array<i64: 16, 64>}, {pipeline_mode = #tpu.pipeline_mode<synchronous>, transform_indices = @transform_2, window_bounds = array<i64: 2, 64>}, {pipeline_mode = #tpu.pipeline_mode<synchronous>, transform_indices = @transform_3, window_bounds = array<i64: 128, 384>}, {pipeline_mode = #tpu.pipeline_mode<synchronous>, transform_indices = @transform_4, window_bounds = array<i64: 1, 384>}, {pipeline_mode = #tpu.pipeline_mode<synchronous>, transform_indices = @transform_5, window_bounds = array<i64: 64, 768>}, {pipeline_mode = #tpu.pipeline_mode<synchronous>, transform_indices = @transform_6, window_bounds = array<i64: 1, 768>}, {pipeline_mode = #tpu.pipeline_mode<synchronous>, transform_indices = @transform_7, window_bounds = array<i64: 2, 384>}, {pipeline_mode = #tpu.pipeline_mode<synchronous>, transform_indices = @transform_8, window_bounds = array<i64: 2, 768>}]} {
    %c0_i32 = arith.constant 0 : i32
    %0 = arith.cmpi eq, %arg0, %c0_i32 : i32
    %1 = arith.extui %0 : i1 to i32
    %c0_i32_0 = arith.constant 0 : i32
    %2 = arith.cmpi ne, %1, %c0_i32_0 : i32
    scf.if %2 {
      %cst_10 = arith.constant 0.000000e+00 : f32
      %14 = vector.broadcast %cst_10 : f32 to vector<2x64xf32>
      %c0_11 = arith.constant 0 : index
      %c0_12 = arith.constant 0 : index
      %15 = vector.load %arg10[%c0_11, %c0_12] : memref<2x64xf32, #tpu.memory_space<vmem>>, vector<2x64xf32>
      tpu.vector_store %arg10[%c0_11, %c0_12], %14 {strides = array<i32>} : memref<2x64xf32, #tpu.memory_space<vmem>>, vector<2x64xf32>,
    } else {
    }
    %c0 = arith.constant 0 : index
    %c0_1 = arith.constant 0 : index
    %3 = vector.load %arg10[%c0, %c0_1] : memref<2x64xf32, #tpu.memory_space<vmem>>, vector<2x64xf32>
    %c0_2 = arith.constant 0 : index
    %c0_3 = arith.constant 0 : index
    %4 = vector.load %arg1[%c0_2, %c0_3] : memref<2x16xf32, #tpu.memory_space<vmem>>, vector<2x16xf32>
    %5 = arith.truncf %4 : vector<2x16xf32> to vector<2x16xbf16>
    %c0_4 = arith.constant 0 : index
    %c0_5 = arith.constant 0 : index
    %6 = vector.load %arg2[%c0_4, %c0_5] : memref<16x64xf32, #tpu.memory_space<vmem>>, vector<16x64xf32>
    %7 = arith.truncf %6 : vector<16x64xf32> to vector<16x64xbf16>
    %cst = arith.constant dense<0.000000e+00> : vector<2x64xf32>
    %8 = tpu.matmul %5, %7, %cst {dimension_numbers = #tpu.dot_dimension_numbers<[1], [0], [0], [1], [0, 0, 1, 1], [], []>} : vector<2x16xbf16>, vector<16x64xbf16>, vector<2x64xf32> -> vector<2x64xf32>
    %9 = arith.addf %3, %8 : vector<2x64xf32>
    %c0_6 = arith.constant 0 : index
    %c0_7 = arith.constant 0 : index
    %10 = vector.load %arg10[%c0_6, %c0_7] : memref<2x64xf32, #tpu.memory_space<vmem>>, vector<2x64xf32>
    tpu.vector_store %arg10[%c0_6, %c0_7], %9 {strides = array<i32>} : memref<2x64xf32, #tpu.memory_space<vmem>>, vector<2x64xf32>,
    %c0_i32_8 = arith.constant 0 : i32
    %11 = arith.cmpi eq, %arg0, %c0_i32_8 : i32
    %12 = arith.extui %11 : i1 to i32
    %c0_i32_9 = arith.constant 0 : i32
    %13 = arith.cmpi ne, %12, %c0_i32_9 : i32
    scf.if %13 {
      %c0_10 = arith.constant 0 : index
      %c0_11 = arith.constant 0 : index
      %14 = vector.load %arg3[%c0_10, %c0_11] : memref<2x64xf32, #tpu.memory_space<vmem>>, vector<2x64xf32>
      %c0_12 = arith.constant 0 : index
      %c0_13 = arith.constant 0 : index
      %15 = vector.load %arg10[%c0_12, %c0_13] : memref<2x64xf32, #tpu.memory_space<vmem>>, vector<2x64xf32>
      %16 = tpu.concatenate %15, %14 in 1 : vector<2x64xf32>, vector<2x64xf32> -> vector<2x128xf32>
      %17 = arith.truncf %16 : vector<2x128xf32> to vector<2x128xbf16>
      %c0_14 = arith.constant 0 : index
      %c0_15 = arith.constant 0 : index
      %18 = vector.load %arg4[%c0_14, %c0_15] : memref<128x384xbf16, #tpu.memory_space<vmem>>, vector<128x384xbf16>
      %cst_16 = arith.constant dense<0.000000e+00> : vector<2x384xf32>
      %19 = tpu.matmul %17, %18, %cst_16 {dimension_numbers = #tpu.dot_dimension_numbers<[1], [0], [0], [1], [0, 0, 1, 1], [], []>} : vector<2x128xbf16>, vector<128x384xbf16>, vector<2x384xf32> -> vector<2x384xf32>
      %c0_17 = arith.constant 0 : index
      %c0_18 = arith.constant 0 : index
      %20 = vector.load %arg5[%c0_17, %c0_18] : memref<1x384xf32, #tpu.memory_space<vmem>>, vector<1x384xf32>
      %21 = vector.broadcast %20 : vector<1x384xf32> to vector<2x384xf32>
      %22 = arith.addf %19, %21 : vector<2x384xf32>
      %c0_19 = arith.constant 0 : index
      %c0_20 = arith.constant 0 : index
      %23 = vector.load %arg8[%c0_19, %c0_20] : memref<2x384xf32, #tpu.memory_space<vmem>>, vector<2x384xf32>
      tpu.vector_store %arg8[%c0_19, %c0_20], %22 {strides = array<i32>} : memref<2x384xf32, #tpu.memory_space<vmem>>, vector<2x384xf32>,
      %24 = arith.truncf %14 : vector<2x64xf32> to vector<2x64xbf16>
      %c0_21 = arith.constant 0 : index
      %c0_22 = arith.constant 0 : index
      %25 = vector.load %arg6[%c0_21, %c0_22] : memref<64x768xbf16, #tpu.memory_space<vmem>>, vector<64x768xbf16>
      %cst_23 = arith.constant dense<0.000000e+00> : vector<2x768xf32>
      %26 = tpu.matmul %24, %25, %cst_23 {dimension_numbers = #tpu.dot_dimension_numbers<[1], [0], [0], [1], [0, 0, 1, 1], [], []>} : vector<2x64xbf16>, vector<64x768xbf16>, vector<2x768xf32> -> vector<2x768xf32>
      %c0_24 = arith.constant 0 : index
      %c0_25 = arith.constant 0 : index
      %27 = vector.load %arg7[%c0_24, %c0_25] : memref<1x768xf32, #tpu.memory_space<vmem>>, vector<1x768xf32>
      %28 = vector.broadcast %27 : vector<1x768xf32> to vector<2x768xf32>
      %29 = arith.addf %26, %28 : vector<2x768xf32>
      %c0_26 = arith.constant 0 : index
      %c0_27 = arith.constant 0 : index
      %30 = vector.load %arg9[%c0_26, %c0_27] : memref<2x768xf32, #tpu.memory_space<vmem>>, vector<2x768xf32>
      tpu.vector_store %arg9[%c0_26, %c0_27], %29 {strides = array<i32>} : memref<2x768xf32, #tpu.memory_space<vmem>>, vector<2x768xf32>,
    } else {
    }
    return
  }
  func.func @transform_0(%arg0: i32) -> (i32, i32) {
    %c0_i32 = arith.constant 0 : i32
    %c0_i32_0 = arith.constant 0 : i32
    return %c0_i32, %arg0 : i32, i32
  }
  func.func @transform_1(%arg0: i32) -> (i32, i32) {
    %c0_i32 = arith.constant 0 : i32
    %c0_i32_0 = arith.constant 0 : i32
    return %arg0, %c0_i32 : i32, i32
  }
  func.func @transform_2(%arg0: i32) -> (i32, i32) {
    %c0_i32 = arith.constant 0 : i32
    %c0_i32_0 = arith.constant 0 : i32
    %c0_i32_1 = arith.constant 0 : i32
    return %c0_i32, %c0_i32_0 : i32, i32
  }
  func.func @transform_3(%arg0: i32) -> (i32, i32) {
    %c0_i32 = arith.constant 0 : i32
    %c0_i32_0 = arith.constant 0 : i32
    %c0_i32_1 = arith.constant 0 : i32
    return %c0_i32, %c0_i32_0 : i32, i32
  }
  func.func @transform_4(%arg0: i32) -> (i32, i32) {
    %c0_i32 = arith.constant 0 : i32
    %c0_i32_0 = arith.constant 0 : i32
    %c0_i32_1 = arith.constant 0 : i32
    return %c0_i32, %c0_i32_0 : i32, i32
  }
  func.func @transform_5(%arg0: i32) -> (i32, i32) {
    %c0_i32 = arith.constant 0 : i32
    %c0_i32_0 = arith.constant 0 : i32
    %c0_i32_1 = arith.constant 0 : i32
    return %c0_i32, %c0_i32_0 : i32, i32
  }
  func.func @transform_6(%arg0: i32) -> (i32, i32) {
    %c0_i32 = arith.constant 0 : i32
    %c0_i32_0 = arith.constant 0 : i32
    %c0_i32_1 = arith.constant 0 : i32
    return %c0_i32, %c0_i32_0 : i32, i32
  }
  func.func @transform_7(%arg0: i32) -> (i32, i32) {
    %c0_i32 = arith.constant 0 : i32
    %c0_i32_0 = arith.constant 0 : i32
    %c0_i32_1 = arith.constant 0 : i32
    return %c0_i32, %c0_i32_0 : i32, i32
  }
  func.func @transform_8(%arg0: i32) -> (i32, i32) {
    %c0_i32 = arith.constant 0 : i32
    %c0_i32_0 = arith.constant 0 : i32
    %c0_i32_1 = arith.constant 0 : i32
    return %c0_i32, %c0_i32_0 : i32, i32
  }
}

</mosaic_0001>

<llo_original>
// kernel: gps_forward.8
$region0: #{gps_forward.8}
  #allocation0 [shape = 'u32[]', space=smem, size = 0x4, offset = 0x4, fixed_abs, tag = 'smem constant byte address 0x4 - core index']
  #allocation1 [shape = 'u32[144,128]{1,0:T(1,128)}', space=vmem, size = 0x12000, scoped, tag = 'internal scratch']
  %s0 = inlined_call_operand.vmem [shape: f32[16,8], index: 0, kind: input, shape index: {}]
  %s1 = inlined_call_operand.vmem [shape: f32[16,32], index: 1, kind: input, shape index: {}]
  %s2 = inlined_call_operand.vmem [shape: f32[1,32], index: 2, kind: input, shape index: {}]
  %s3 = inlined_call_operand.vmem [shape: f32[1,32], index: 3, kind: input, shape index: {}]
  %s4 = inlined_call_operand.vmem [shape: bf16[40,64], index: 4, kind: input, shape index: {}]
  %s5 = inlined_call_operand.vmem [shape: f32[1,64], index: 5, kind: input, shape index: {}]
  %s6 = inlined_call_operand.vmem [shape: f32[16,64], index: 6, kind: output, shape index: {}]
  %s7 = sld [smem:[#allocation0]]
  $region34: #{gps_forward.8} parent=0
    _
  %s9 = ssub.s32 1, %s7
  %s10 = scalar_select 0, %s9, %s7
  // Predicated region
  $region2: #{gps_forward.8} parent=0 // pred_check
    _
  $region3: #{gps_forward.8} parent=0 // pred_check_branch
    %12 = sbr.rel (0) target = $region5
  $region4: #{gps_forward.8} parent=0 // pred_region
    _
  $region5: #{gps_forward.8} parent=0 // pred_fallthru
    _
  // Predicated region
  $region6: #{gps_forward.8} parent=0 // pred_check
    _
  $region7: #{gps_forward.8} parent=0 // pred_check_branch
    %14 = sbr.rel (0) target = $region9
  $region8: #{gps_forward.8} parent=0 // pred_region
    _
  $region9: #{gps_forward.8} parent=0 // pred_fallthru
    _
  // Predicated region
  $region10: #{gps_forward.8} parent=0 // pred_check
    _
  $region11: #{gps_forward.8} parent=0 // pred_check_branch
    %16 = sbr.rel (0) target = $region13
  $region12: #{gps_forward.8} parent=0 // pred_region
    _
  $region13: #{gps_forward.8} parent=0 // pred_fallthru
    _
  // Predicated region
  $region14: #{gps_forward.8} parent=0 // pred_check
    _
  $region15: #{gps_forward.8} parent=0 // pred_check_branch
    %18 = sbr.rel (0) target = $region17
  $region16: #{gps_forward.8} parent=0 // pred_region
    _
  $region17: #{gps_forward.8} parent=0 // pred_fallthru
    _
  // Predicated region
  $region18: #{gps_forward.8} parent=0 // pred_check
    _
  $region19: #{gps_forward.8} parent=0 // pred_check_branch
    %20 = sbr.rel (0) target = $region21
  $region20: #{gps_forward.8} parent=0 // pred_region
    _
  $region21: #{gps_forward.8} parent=0 // pred_fallthru
    _
  // Predicated region
  $region22: #{gps_forward.8} parent=0 // pred_check
    _
  $region23: #{gps_forward.8} parent=0 // pred_check_branch
    %22 = sbr.rel (0) target = $region25
  $region24: #{gps_forward.8} parent=0 // pred_region
    _
  $region25: #{gps_forward.8} parent=0 // pred_fallthru
    _
  %v24 = vld [vmem:[%s1] sm:$0xff]
  %v25 = vld [vmem:[%s1 + $0x8] sm:$0xff]
  %v26 = vld [vmem:[%s2] sm:$0x1]
  %v28 = vlaneseq
  %v29 = vshrl.u32 %v28, 7
  %v30 = vsub.s32 0, %v29
  %v31 = vrot.slane %v26, %v30
  %v33 = vmul.f32 %v24, %v31
  %v34 = vmul.f32 %v25, %v31
  %v35 = vld [vmem:[%s3] sm:$0x1]
  %v37 = vlaneseq
  %v38 = vshrl.u32 %v37, 7
  %v39 = vsub.s32 0, %v38
  %v40 = vrot.slane %v35, %v39
  %v42 = vadd.f32 %v33, %v40
  %v43 = vadd.f32 %v34, %v40
  %v44 = vld [vmem:[%s0] sm:$0xff]
  %v45 = vld [vmem:[%s0 + $0x8] sm:$0xff]
  %48 = vrot.lane.b32.xlu0 %v42, 8
  %v49 = vpop.permute.xlu0 %48
  %50 = vrot.lane.b32.xlu0 %v43, 8
  %v51 = vpop.permute.xlu0 %50
  %vm54 = vcmask 64512
  %v55 = vsel %vm54, %v44, %v49
  %v56 = vsel %vm54, %v45, %v51
  %v57 = vpack.c.bf16 %v56, %v55
  %v58 = vld [vmem:[%s4] sm:$0xf]
  %v59 = vld [vmem:[%s4 + $0x4] sm:$0xf]
  %v60 = vld [vmem:[%s4 + $0x8] sm:$0xf]
  %v61 = vld [vmem:[%s4 + $0xc] sm:$0xf]
  %v62 = vld [vmem:[%s4 + $0x10] sm:$0xf]
  %v63 = vld [vmem:[%s5] sm:$0x1]
  %v65 = vlaneseq
  %v66 = vshrl.u32 %v65, 7
  %v67 = vsub.s32 0, %v66
  %v68 = vrot.slane %v63, %v67
  %v75 = vunpack.c.l.b16 %v58
  %v76 = vunpack.c.l.b16 %v59
  %v77 = vunpack.c.l.b16 %v60
  %v78 = vunpack.c.l.b16 %v61
  %v79 = vunpack.c.l.b16 %v62
  %v80 = vpack.c.b16 %v76, %v75
  %v81 = vpack.c.b16 %v78, %v77
  %v82 = vpack.c.b16 %v79, %v79
  %vm85 = vcmask 326656
  %v87 = vsel %vm85, %v57, 0
  %vm89 = vcmask 1043456
  %v91 = vsel %vm89, %v82, 0
  %93 = vmatprep.subr.bf16.mxu0 0
  %94 = vmatpush1.bf16.msra.mxu0 0
  %95 = vmatprep.subr.bf16.mxu0 0
  %96 = vmatpush1.bf16.msra.mxu0 0
  %97 = vmatprep.subr.bf16.mxu0 0
  %98 = vmatpush1.bf16.msra.mxu0 0
  %99 = vmatprep.subr.bf16.mxu0 0
  %100 = vmatpush1.bf16.msra.mxu0 0
  %101 = vmatprep.subr.bf16.mxu0 0
  %102 = vmatpush1.bf16.msra.mxu0 0
  %103 = vmatprep.subr.bf16.mxu0 0
  %104 = vmatpush1.bf16.msra.mxu0 %v91
  %105 = vmatprep.subr.bf16.mxu0 0
  %106 = vmatpush1.bf16.msra.mxu0 %v81
  %107 = vmatprep.subr.bf16.mxu0 0
  %108 = vmatpush1.bf16.msra.mxu0 %v80
  %109 = vmatprep.subr.bf16.mxu0 0
  %110 = vmatpush2.bf16.msra.mxu0 0
  %111 = vmatprep.subr.bf16.mxu0 0
  %112 = vmatpush2.bf16.msra.mxu0 0
  %113 = vmatprep.subr.bf16.mxu0 0
  %114 = vmatpush2.bf16.msra.mxu0 0
  %115 = vmatprep.subr.bf16.mxu0 0
  %116 = vmatpush2.bf16.msra.mxu0 0
  %117 = vmatprep.subr.bf16.mxu0 0
  %118 = vmatpush2.bf16.msra.mxu0 0
  %119 = vmatprep.subr.bf16.mxu0 0
  %120 = vmatpush2.bf16.msra.mxu0 0
  %121 = vmatprep.subr.bf16.mxu0 0
  %122 = vmatpush2.bf16.msra.mxu0 0
  %123 = vmatprep.subr.bf16.mxu0 0
  %124 = vmatpush2.bf16.msra.mxu0 0
  %125 = vmatprep.mubr.bf16.mxu0 0
  %126 = vmatmul.mubr.bf16.gmra.mxu0 %v87
  %v127 = vpop.f32.mrf.mxu0
  %v128 = vadd.f32 %v68, %v127
  %v129 = vpop.f32.mrf.mxu0
  %v130 = vpop.f32.mrf.mxu0
  %v131 = vadd.f32 %v68, %v130
  %v132 = vpop.f32.mrf.mxu0
  %133 = vdwg.mxu0
  %vm134 = vcmask 523264
  %135 = vst.msk [vmem:[%s6] sm:$0xff] %vm134, %v128
  %136 = vst.msk [vmem:[%s6 + $0x8] sm:$0xff] %vm134, %v131
  // Predicated region
  $region26: #{gps_forward.8} parent=0 // pred_check
    _
  $region27: #{gps_forward.8} parent=0 // pred_check_branch
    %138 = sbr.rel (0) target = $region29
  $region28: #{gps_forward.8} parent=0 // pred_region
    _
  $region29: #{gps_forward.8} parent=0 // pred_fallthru
    _
  // Predicated region
  $region30: #{gps_forward.8} parent=0 // pred_check
    _
  $region31: #{gps_forward.8} parent=0 // pred_check_branch
    %140 = sbr.rel (0) target = $region33
  $region32: #{gps_forward.8} parent=0 // pred_region
    _
  $region33: #{gps_forward.8} parent=0 // pred_fallthru
    _

// kernel: gps_forward.9
$region0: #{gps_forward.9}
  #allocation0 [shape = 'u32[]', space=smem, size = 0x4, offset = 0x4, fixed_abs, tag = 'smem constant byte address 0x4 - core index']
  #allocation1 [shape = 'u32[144,128]{1,0:T(1,128)}', space=vmem, size = 0x12000, scoped, tag = 'internal scratch']
  #allocation2 [shape = 'f32[16,64]{1,0:T(8,128)}', space=vmem, size = 0x2000, scoped, tag = 'scratch operand']
  %s0 = inlined_call_operand.vmem [shape: bf16[16,16], index: 0, kind: input, shape index: {}]
  %s1 = inlined_call_operand.vmem [shape: f32[16,64], index: 1, kind: input, shape index: {}, may-alias: {1,2}]
  %s2 = inlined_call_operand.vmem [shape: f32[16,64], index: 2, kind: input, shape index: {}, may-alias: {1,2}]
  %s3 = inlined_call_operand.vmem [shape: bf16[128,256], index: 3, kind: input, shape index: {}]
  %s4 = inlined_call_operand.vmem [shape: f32[1,256], index: 4, kind: input, shape index: {}]
  %s5 = inlined_call_operand.vmem [shape: f32[16,256], index: 5, kind: output, shape index: {0}]
  %s6 = inlined_call_operand.vmem [shape: f32[1,2,64], index: 6, kind: output, shape index: {1}]
  %7 = xla_tuple %s5, %s6
  %s8 = sld [smem:[#allocation0]]
  $region46: #{gps_forward.9} parent=0
    _
  %s10 = ssub.s32 1, %s8
  %s11 = scalar_select 0, %s10, %s8
  // Predicated region
  $region2: #{gps_forward.9} parent=0 // pred_check
    _
  $region3: #{gps_forward.9} parent=0 // pred_check_branch
    %13 = sbr.rel (0) target = $region5
  $region4: #{gps_forward.9} parent=0 // pred_region
    _
  $region5: #{gps_forward.9} parent=0 // pred_fallthru
    _
  // Predicated region
  $region6: #{gps_forward.9} parent=0 // pred_check
    _
  $region7: #{gps_forward.9} parent=0 // pred_check_branch
    %15 = sbr.rel (0) target = $region9
  $region8: #{gps_forward.9} parent=0 // pred_region
    _
  $region9: #{gps_forward.9} parent=0 // pred_fallthru
    _
  // Predicated region
  $region10: #{gps_forward.9} parent=0 // pred_check
    _
  $region11: #{gps_forward.9} parent=0 // pred_check_branch
    %17 = sbr.rel (0) target = $region13
  $region12: #{gps_forward.9} parent=0 // pred_region
    _
  $region13: #{gps_forward.9} parent=0 // pred_fallthru
    _
  // Predicated region
  $region14: #{gps_forward.9} parent=0 // pred_check
    _
  $region15: #{gps_forward.9} parent=0 // pred_check_branch
    %19 = sbr.rel (0) target = $region17
  $region16: #{gps_forward.9} parent=0 // pred_region
    _
  $region17: #{gps_forward.9} parent=0 // pred_fallthru
    _
  // Predicated region
  $region18: #{gps_forward.9} parent=0 // pred_check
    _
  $region19: #{gps_forward.9} parent=0 // pred_check_branch
    %21 = sbr.rel (0) target = $region21
  $region20: #{gps_forward.9} parent=0 // pred_region
    _
  $region21: #{gps_forward.9} parent=0 // pred_fallthru
    _
  %p23 = scmp.eq.s32.totalorder 0, 0
  // Predicated region
  $region22: #{gps_forward.9} parent=0 // pred_check
    %p24 = pneg %p23
  $region23: #{gps_forward.9} parent=0 // pred_check_branch
    %26 = sbr.rel (%p24) target = $region25
  $region24: #{gps_forward.9} parent=0 // pred_region
    %vm27 = vcmask 523264
    %28 = vst.msk [vmem:[#allocation2] sm:$0xff] %vm27, 0.0
    %29 = vst.msk [vmem:[#allocation2 + $0x8] sm:$0xff] %vm27, 0.0
  $region25: #{gps_forward.9} parent=0 // pred_fallthru
    _
  %v30 = vld [vmem:[#allocation2] sm:$0xff]
  %v31 = vld [vmem:[#allocation2 + $0x8] sm:$0xff]
  %v32 = vld [vmem:[%s0] sm:$0xf]
  %v33 = vld [vmem:[%s0 + $0x4] sm:$0xf]
  %v34 = vld [vmem:[%s1] sm:$0xff]
  %v35 = vld [vmem:[%s1 + $0x8] sm:$0xff]
  %v36 = vpack.c.bf16 %v35, %v34
  %v39 = vunpack.c.l.b16 %v32
  %v40 = vunpack.c.l.b16 %v33
  %v41 = vpack.c.b16 %v40, %v39
  %vm42 = vcmask 130048
  %v44 = vsel %vm42, %v41, 0
  %46 = vmatprep.subr.bf16.mxu0 0
  %47 = vmatpush1.bf16.msra.mxu0 0
  %48 = vmatprep.subr.bf16.mxu0 0
  %49 = vmatpush1.bf16.msra.mxu0 0
  %50 = vmatprep.subr.bf16.mxu0 0
  %51 = vmatpush1.bf16.msra.mxu0 0
  %52 = vmatprep.subr.bf16.mxu0 0
  %53 = vmatpush1.bf16.msra.mxu0 0
  %54 = vmatprep.subr.bf16.mxu0 0
  %55 = vmatpush1.bf16.msra.mxu0 0
  %56 = vmatprep.subr.bf16.mxu0 0
  %57 = vmatpush1.bf16.msra.mxu0 0
  %58 = vmatprep.subr.bf16.mxu0 0
  %59 = vmatpush1.bf16.msra.mxu0 0
  %60 = vmatprep.subr.bf16.mxu0 0
  %61 = vmatpush1.bf16.msra.mxu0 %v36
  %62 = vmatprep.subr.bf16.mxu0 0
  %63 = vmatpush2.bf16.msra.mxu0 0
  %64 = vmatprep.subr.bf16.mxu0 0
  %65 = vmatpush2.bf16.msra.mxu0 0
  %66 = vmatprep.subr.bf16.mxu0 0
  %67 = vmatpush2.bf16.msra.mxu0 0
  %68 = vmatprep.subr.bf16.mxu0 0
  %69 = vmatpush2.bf16.msra.mxu0 0
  %70 = vmatprep.subr.bf16.mxu0 0
  %71 = vmatpush2.bf16.msra.mxu0 0
  %72 = vmatprep.subr.bf16.mxu0 0
  %73 = vmatpush2.bf16.msra.mxu0 0
  %74 = vmatprep.subr.bf16.mxu0 0
  %75 = vmatpush2.bf16.msra.mxu0 0
  %76 = vmatprep.subr.bf16.mxu0 0
  %77 = vmatpush2.bf16.msra.mxu0 0
  %78 = vmatprep.mubr.bf16.mxu0 0
  %79 = vmatmul.mubr.bf16.gmra.mxu0 %v44
  %v80 = vpop.f32.mrf.mxu0
  %v81 = vadd.f32 0.0, %v80
  %v82 = vpop.f32.mrf.mxu0
  %v83 = vpop.f32.mrf.mxu0
  %v84 = vadd.f32 0.0, %v83
  %v85 = vpop.f32.mrf.mxu0
  %86 = vdwg.mxu0
  %v87 = vadd.f32 %v30, %v81
  %v88 = vadd.f32 %v31, %v84
  %vm89 = vcmask 523264
  %90 = vst.msk [vmem:[#allocation2] sm:$0xff] %vm89, %v87
  %91 = vst.msk [vmem:[#allocation2 + $0x8] sm:$0xff] %vm89, %v88
  // Predicated region
  $region26: #{gps_forward.9} parent=0 // pred_check
    %p92 = pneg %p23
  $region27: #{gps_forward.9} parent=0 // pred_check_branch
    %94 = sbr.rel (%p92) target = $region29
  $region28: #{gps_forward.9} parent=0 // pred_region
    %v95 = vld [vmem:[#allocation2] sm:$0xff]
    %v96 = vld [vmem:[#allocation2 + $0x8] sm:$0xff]
    %v97 = vld [vmem:[%s2] sm:$0xff]
    %v98 = vld [vmem:[%s2 + $0x8] sm:$0xff]
    %101 = vrot.lane.b32.xlu0 %v97, 64
    %v102 = vpop.permute.xlu0 %101
    %103 = vrot.lane.b32.xlu0 %v98, 64
    %v104 = vpop.permute.xlu0 %103
    %v107 = vsel %vm89, %v95, %v102
    %v108 = vsel %vm89, %v96, %v104
    %v109 = vpack.c.bf16 %v108, %v107
    %v110 = vld [vmem:[%s3] sm:$0xff]
    %v111 = vld [vmem:[%s3 + $0x8] sm:$0xff]
    %v112 = vld [vmem:[%s3 + $0x10] sm:$0xff]
    %v113 = vld [vmem:[%s3 + $0x18] sm:$0xff]
    %v114 = vld [vmem:[%s3 + $0x20] sm:$0xff]
    %v115 = vld [vmem:[%s3 + $0x28] sm:$0xff]
    %v116 = vld [vmem:[%s3 + $0x30] sm:$0xff]
    %v117 = vld [vmem:[%s3 + $0x38] sm:$0xff]
    %v118 = vld [vmem:[%s3 + $0x40] sm:$0xff]
    %v119 = vld [vmem:[%s3 + $0x48] sm:$0xff]
    %v120 = vld [vmem:[%s3 + $0x50] sm:$0xff]
    %v121 = vld [vmem:[%s3 + $0x58] sm:$0xff]
    %v122 = vld [vmem:[%s3 + $0x60] sm:$0xff]
    %v123 = vld [vmem:[%s3 + $0x68] sm:$0xff]
    %v124 = vld [vmem:[%s3 + $0x70] sm:$0xff]
    %v125 = vld [vmem:[%s3 + $0x78] sm:$0xff]
    %v126 = vld [vmem:[%s4] sm:$0x3]
    %v128 = vlaneseq
    %v129 = vshrl.u32 %v128, 7
    %v130 = vsub.s32 0, %v129
    %v131 = vrot.slane %v126, %v130
    %v132 = vlaneseq
    %v133 = vshrl.u32 %v132, 7
    %v134 = vsub.s32 1, %v133
    %v135 = vrot.slane %v126, %v134
    %v154 = vunpack.c.l.b16 %v110
    %v155 = vunpack.c.h.b16 %v110
    %v156 = vunpack.c.l.b16 %v111
    %v157 = vunpack.c.h.b16 %v111
    %v158 = vunpack.c.l.b16 %v112
    %v159 = vunpack.c.h.b16 %v112
    %v160 = vunpack.c.l.b16 %v113
    %v161 = vunpack.c.h.b16 %v113
    %v162 = vunpack.c.l.b16 %v114
    %v163 = vunpack.c.h.b16 %v114
    %v164 = vunpack.c.l.b16 %v115
    %v165 = vunpack.c.h.b16 %v115
    %v166 = vunpack.c.l.b16 %v116
    %v167 = vunpack.c.h.b16 %v116
    %v168 = vunpack.c.l.b16 %v117
    %v169 = vunpack.c.h.b16 %v117
    %v170 = vunpack.c.l.b16 %v118
    %v171 = vunpack.c.h.b16 %v118
    %v172 = vunpack.c.l.b16 %v119
    %v173 = vunpack.c.h.b16 %v119
    %v174 = vunpack.c.l.b16 %v120
    %v175 = vunpack.c.h.b16 %v120
    %v176 = vunpack.c.l.b16 %v121
    %v177 = vunpack.c.h.b16 %v121
    %v178 = vunpack.c.l.b16 %v122
    %v179 = vunpack.c.h.b16 %v122
    %v180 = vunpack.c.l.b16 %v123
    %v181 = vunpack.c.h.b16 %v123
    %v182 = vunpack.c.l.b16 %v124
    %v183 = vunpack.c.h.b16 %v124
    %v184 = vunpack.c.l.b16 %v125
    %v185 = vunpack.c.h.b16 %v125
    %v186 = vpack.c.b16 %v156, %v154
    %v187 = vpack.c.b16 %v157, %v155
    %v188 = vpack.c.b16 %v160, %v158
    %v189 = vpack.c.b16 %v161, %v159
    %v190 = vpack.c.b16 %v164, %v162
    %v191 = vpack.c.b16 %v165, %v163
    %v192 = vpack.c.b16 %v168, %v166
    %v193 = vpack.c.b16 %v169, %v167
    %v194 = vpack.c.b16 %v172, %v170
    %v195 = vpack.c.b16 %v173, %v171
    %v196 = vpack.c.b16 %v176, %v174
    %v197 = vpack.c.b16 %v177, %v175
    %v198 = vpack.c.b16 %v180, %v178
    %v199 = vpack.c.b16 %v181, %v179
    %v200 = vpack.c.b16 %v184, %v182
    %v201 = vpack.c.b16 %v185, %v183
    %218 = vmatprep.subr.bf16.mxu0 %v201
    %219 = vmatpush1.bf16.msra.mxu0 %v200
    %220 = vmatprep.subr.bf16.mxu0 %v199
    %221 = vmatpush1.bf16.msra.mxu0 %v198
    %222 = vmatprep.subr.bf16.mxu0 %v197
    %223 = vmatpush1.bf16.msra.mxu0 %v196
    %224 = vmatprep.subr.bf16.mxu0 %v195
    %225 = vmatpush1.bf16.msra.mxu0 %v194
    %226 = vmatprep.subr.bf16.mxu0 %v193
    %227 = vmatpush1.bf16.msra.mxu0 %v192
    %228 = vmatprep.subr.bf16.mxu0 %v191
    %229 = vmatpush1.bf16.msra.mxu0 %v190
    %230 = vmatprep.subr.bf16.mxu0 %v189
    %231 = vmatpush1.bf16.msra.mxu0 %v188
    %232 = vmatprep.subr.bf16.mxu0 %v187
    %233 = vmatpush1.bf16.msra.mxu0 %v186
    %234 = vmatprep.subr.bf16.mxu0 0
    %235 = vmatpush2.bf16.msra.mxu0 0
    %236 = vmatprep.subr.bf16.mxu0 0
    %237 = vmatpush2.bf16.msra.mxu0 0
    %238 = vmatprep.subr.bf16.mxu0 0
    %239 = vmatpush2.bf16.msra.mxu0 0
    %240 = vmatprep.subr.bf16.mxu0 0
    %241 = vmatpush2.bf16.msra.mxu0 0
    %242 = vmatprep.subr.bf16.mxu0 0
    %243 = vmatpush2.bf16.msra.mxu0 0
    %244 = vmatprep.subr.bf16.mxu0 0
    %245 = vmatpush2.bf16.msra.mxu0 0
    %246 = vmatprep.subr.bf16.mxu0 0
    %247 = vmatpush2.bf16.msra.mxu0 0
    %248 = vmatprep.subr.bf16.mxu0 0
    %249 = vmatpush2.bf16.msra.mxu0 0
    %250 = vmatprep.mubr.bf16.mxu0 0
    %251 = vmatmul.mubr.bf16.gmra.mxu0 %v109
    %v252 = vpop.f32.mrf.mxu0
    %v253 = vadd.f32 %v131, %v252
    %v254 = vpop.f32.mrf.mxu0
    %v255 = vadd.f32 %v135, %v254
    %v256 = vpop.f32.mrf.mxu0
    %v257 = vadd.f32 %v131, %v256
    %v258 = vpop.f32.mrf.mxu0
    %v259 = vadd.f32 %v135, %v258
    %260 = vdwg.mxu0
    %261 = vst [vmem:[%s5] sm:$0xff] %v253
    %262 = vst [vmem:[%s5 + $0x8] sm:$0xff] %v255
    %263 = vst [vmem:[%s5 + $0x10] sm:$0xff] %v257
    %264 = vst [vmem:[%s5 + $0x18] sm:$0xff] %v259
    %v265 = vsel %vm89, %v253, 0.0
    %v266 = vsel %vm89, %v257, 0.0
    %v267 = vadd.f32 %v265, %v266
    %v268 = vrot.slane %v267, 4
    %v269 = vadd.f32 %v267, %v268
    %v270 = vrot.slane %v269, 2
    %v271 = vadd.f32 %v269, %v270
    %v272 = vrot.slane %v271, 1
    %v273 = vadd.f32 %v271, %v272
    %v274 = vmul.f32 %v253, %v253
    %v275 = vmul.f32 %v257, %v257
    %v276 = vsel %vm89, %v274, 0.0
    %v277 = vsel %vm89, %v275, 0.0
    %v278 = vadd.f32 %v276, %v277
    %v279 = vrot.slane %v278, 4
    %v280 = vadd.f32 %v278, %v279
    %v281 = vrot.slane %v280, 2
    %v282 = vadd.f32 %v280, %v281
    %v283 = vrot.slane %v282, 1
    %v284 = vadd.f32 %v282, %v283
    %vm285 = vcmask 1040384
    %v286 = vsel %vm285, %v273, %v284
    %vm287 = vcmask 517120
    %288 = vst.msk [vmem:[%s6] sm:$0x3] %vm287, %v286
  $region29: #{gps_forward.9} parent=0 // pred_fallthru
    _
  // Predicated region
  $region30: #{gps_forward.9} parent=0 // pred_check
    _
  $region31: #{gps_forward.9} parent=0 // pred_check_branch
    %290 = sbr.rel (0) target = $region33
  $region32: #{gps_forward.9} parent=0 // pred_region
    _
  $region33: #{gps_forward.9} parent=0 // pred_fallthru
    _
  // Predicated region
  $region34: #{gps_forward.9} parent=0 // pred_check
    _
  $region35: #{gps_forward.9} parent=0 // pred_check_branch
    %292 = sbr.rel (0) target = $region37
  $region36: #{gps_forward.9} parent=0 // pred_region
    _
  $region37: #{gps_forward.9} parent=0 // pred_fallthru
    _
  // Predicated region
  $region38: #{gps_forward.9} parent=0 // pred_check
    _
  $region39: #{gps_forward.9} parent=0 // pred_check_branch
    %294 = sbr.rel (0) target = $region41
  $region40: #{gps_forward.9} parent=0 // pred_region
    _
  $region41: #{gps_forward.9} parent=0 // pred_fallthru
    _
  // Predicated region
  $region42: #{gps_forward.9} parent=0 // pred_check
    _
  $region43: #{gps_forward.9} parent=0 // pred_check_branch
    %296 = sbr.rel (0) target = $region45
  $region44: #{gps_forward.9} parent=0 // pred_region
    _
  $region45: #{gps_forward.9} parent=0 // pred_fallthru
    _

// kernel: gps_forward.11
$region0: #{gps_forward.11}
  #allocation0 [shape = 'u32[]', space=smem, size = 0x4, offset = 0x4, fixed_abs, tag = 'smem constant byte address 0x4 - core index']
  #allocation1 [shape = 'u32[144,128]{1,0:T(1,128)}', space=vmem, size = 0x12000, scoped, tag = 'internal scratch']
  %s0 = inlined_call_operand.vmem [shape: f32[16,256], index: 0, kind: input, shape index: {}]
  %s1 = inlined_call_operand.vmem [shape: f32[16,64], index: 1, kind: input, shape index: {}]
  %s2 = inlined_call_operand.vmem [shape: f32[1,64], index: 2, kind: input, shape index: {}]
  %s3 = inlined_call_operand.vmem [shape: f32[1,64], index: 3, kind: input, shape index: {}]
  %s4 = inlined_call_operand.vmem [shape: f32[1,64], index: 4, kind: input, shape index: {}]
  %s5 = inlined_call_operand.vmem [shape: f32[1,64], index: 5, kind: input, shape index: {}]
  %s6 = inlined_call_operand.vmem [shape: bf16[64,128], index: 6, kind: input, shape index: {}]
  %s7 = inlined_call_operand.vmem [shape: f32[1,128], index: 7, kind: input, shape index: {}]
  %s8 = inlined_call_operand.vmem [shape: bf16[128,64], index: 8, kind: input, shape index: {}]
  %s9 = inlined_call_operand.vmem [shape: f32[1,64], index: 9, kind: input, shape index: {}]
  %s10 = inlined_call_operand.vmem [shape: f32[16,64], index: 10, kind: output, shape index: {0}]
  %s11 = inlined_call_operand.vmem [shape: f32[1,2,64], index: 11, kind: output, shape index: {1}]
  %12 = xla_tuple %s10, %s11
  %s13 = sld [smem:[#allocation0]]
  $region58: #{gps_forward.11} parent=0
    _
  %s15 = ssub.s32 1, %s13
  %s16 = scalar_select 0, %s15, %s13
  // Predicated region
  $region2: #{gps_forward.11} parent=0 // pred_check
    _
  $region3: #{gps_forward.11} parent=0 // pred_check_branch
    %18 = sbr.rel (0) target = $region5
  $region4: #{gps_forward.11} parent=0 // pred_region
    _
  $region5: #{gps_forward.11} parent=0 // pred_fallthru
    _
  // Predicated region
  $region6: #{gps_forward.11} parent=0 // pred_check
    _
  $region7: #{gps_forward.11} parent=0 // pred_check_branch
    %20 = sbr.rel (0) target = $region9
  $region8: #{gps_forward.11} parent=0 // pred_region
    _
  $region9: #{gps_forward.11} parent=0 // pred_fallthru
    _
  // Predicated region
  $region10: #{gps_forward.11} parent=0 // pred_check
    _
  $region11: #{gps_forward.11} parent=0 // pred_check_branch
    %22 = sbr.rel (0) target = $region13
  $region12: #{gps_forward.11} parent=0 // pred_region
    _
  $region13: #{gps_forward.11} parent=0 // pred_fallthru
    _
  // Predicated region
  $region14: #{gps_forward.11} parent=0 // pred_check
    _
  $region15: #{gps_forward.11} parent=0 // pred_check_branch
    %24 = sbr.rel (0) target = $region17
  $region16: #{gps_forward.11} parent=0 // pred_region
    _
  $region17: #{gps_forward.11} parent=0 // pred_fallthru
    _
  // Predicated region
  $region18: #{gps_forward.11} parent=0 // pred_check
    _
  $region19: #{gps_forward.11} parent=0 // pred_check_branch
    %26 = sbr.rel (0) target = $region21
  $region20: #{gps_forward.11} parent=0 // pred_region
    _
  $region21: #{gps_forward.11} parent=0 // pred_fallthru
    _
  // Predicated region
  $region22: #{gps_forward.11} parent=0 // pred_check
    _
  $region23: #{gps_forward.11} parent=0 // pred_check_branch
    %28 = sbr.rel (0) target = $region25
  $region24: #{gps_forward.11} parent=0 // pred_region
    _
  $region25: #{gps_forward.11} parent=0 // pred_fallthru
    _
  // Predicated region
  $region26: #{gps_forward.11} parent=0 // pred_check
    _
  $region27: #{gps_forward.11} parent=0 // pred_check_branch
    %30 = sbr.rel (0) target = $region29
  $region28: #{gps_forward.11} parent=0 // pred_region
    _
  $region29: #{gps_forward.11} parent=0 // pred_fallthru
    _
  // Predicated region
  $region30: #{gps_forward.11} parent=0 // pred_check
    _
  $region31: #{gps_forward.11} parent=0 // pred_check_branch
    %32 = sbr.rel (0) target = $region33
  $region32: #{gps_forward.11} parent=0 // pred_region
    _
  $region33: #{gps_forward.11} parent=0 // pred_fallthru
    _
  // Predicated region
  $region34: #{gps_forward.11} parent=0 // pred_check
    _
  $region35: #{gps_forward.11} parent=0 // pred_check_branch
    %34 = sbr.rel (0) target = $region37
  $region36: #{gps_forward.11} parent=0 // pred_region
    _
  $region37: #{gps_forward.11} parent=0 // pred_fallthru
    _
  // Predicated region
  $region38: #{gps_forward.11} parent=0 // pred_check
    _
  $region39: #{gps_forward.11} parent=0 // pred_check_branch
    %36 = sbr.rel (0) target = $region41
  $region40: #{gps_forward.11} parent=0 // pred_region
    _
  $region41: #{gps_forward.11} parent=0 // pred_fallthru
    _
  %v38 = vld [vmem:[%s0] sm:$0xff]
  %v39 = vld [vmem:[%s0 + $0x10] sm:$0xff]
  %v40 = vld [vmem:[%s2] sm:$0x1]
  %v42 = vlaneseq
  %v43 = vshrl.u32 %v42, 7
  %v44 = vsub.s32 0, %v43
  %v45 = vrot.slane %v40, %v44
  %v47 = vmul.f32 %v38, %v45
  %v48 = vmul.f32 %v39, %v45
  %v49 = vld [vmem:[%s3] sm:$0x1]
  %v51 = vlaneseq
  %v52 = vshrl.u32 %v51, 7
  %v53 = vsub.s32 0, %v52
  %v54 = vrot.slane %v49, %v53
  %v56 = vadd.f32 %v47, %v54
  %v57 = vadd.f32 %v48, %v54
  %v58 = vld [vmem:[%s1] sm:$0xff]
  %v59 = vld [vmem:[%s1 + $0x8] sm:$0xff]
  %v60 = vld [vmem:[%s4] sm:$0x1]
  %v62 = vlaneseq
  %v63 = vshrl.u32 %v62, 7
  %v64 = vsub.s32 0, %v63
  %v65 = vrot.slane %v60, %v64
  %v67 = vmul.f32 %v58, %v65
  %v68 = vmul.f32 %v59, %v65
  %v69 = vld [vmem:[%s5] sm:$0x1]
  %v71 = vlaneseq
  %v72 = vshrl.u32 %v71, 7
  %v73 = vsub.s32 0, %v72
  %v74 = vrot.slane %v69, %v73
  %v76 = vadd.f32 %v67, %v74
  %v77 = vadd.f32 %v68, %v74
  %v78 = vadd.f32 %v56, %v76
  %v79 = vadd.f32 %v57, %v77
  %v80 = vpack.c.bf16 %v79, %v78
  %v81 = vld [vmem:[%s6] sm:$0xf]
  %v82 = vld [vmem:[%s6 + $0x4] sm:$0xf]
  %v83 = vld [vmem:[%s6 + $0x8] sm:$0xf]
  %v84 = vld [vmem:[%s6 + $0xc] sm:$0xf]
  %v85 = vld [vmem:[%s6 + $0x10] sm:$0xf]
  %v86 = vld [vmem:[%s6 + $0x14] sm:$0xf]
  %v87 = vld [vmem:[%s6 + $0x18] sm:$0xf]
  %v88 = vld [vmem:[%s6 + $0x1c] sm:$0xf]
  %v89 = vld [vmem:[%s7] sm:$0x1]
  %v91 = vlaneseq
  %v92 = vshrl.u32 %v91, 7
  %v93 = vsub.s32 0, %v92
  %v94 = vrot.slane %v89, %v93
  %v104 = vunpack.c.l.b16 %v81
  %v105 = vunpack.c.l.b16 %v82
  %v106 = vunpack.c.l.b16 %v83
  %v107 = vunpack.c.l.b16 %v84
  %v108 = vunpack.c.l.b16 %v85
  %v109 = vunpack.c.l.b16 %v86
  %v110 = vunpack.c.l.b16 %v87
  %v111 = vunpack.c.l.b16 %v88
  %v112 = vpack.c.b16 %v105, %v104
  %v113 = vpack.c.b16 %v107, %v106
  %v114 = vpack.c.b16 %v109, %v108
  %v115 = vpack.c.b16 %v111, %v110
  %vm120 = vcmask 523264
  %v122 = vsel %vm120, %v80, 0
  %124 = vmatprep.subr.bf16.mxu0 0
  %125 = vmatpush1.bf16.msra.mxu0 0
  %126 = vmatprep.subr.bf16.mxu0 0
  %127 = vmatpush1.bf16.msra.mxu0 0
  %128 = vmatprep.subr.bf16.mxu0 0
  %129 = vmatpush1.bf16.msra.mxu0 0
  %130 = vmatprep.subr.bf16.mxu0 0
  %131 = vmatpush1.bf16.msra.mxu0 0
  %132 = vmatprep.subr.bf16.mxu0 0
  %133 = vmatpush1.bf16.msra.mxu0 %v115
  %134 = vmatprep.subr.bf16.mxu0 0
  %135 = vmatpush1.bf16.msra.mxu0 %v114
  %136 = vmatprep.subr.bf16.mxu0 0
  %137 = vmatpush1.bf16.msra.mxu0 %v113
  %138 = vmatprep.subr.bf16.mxu0 0
  %139 = vmatpush1.bf16.msra.mxu0 %v112
  %140 = vmatprep.subr.bf16.mxu0 0
  %141 = vmatpush2.bf16.msra.mxu0 0
  %142 = vmatprep.subr.bf16.mxu0 0
  %143 = vmatpush2.bf16.msra.mxu0 0
  %144 = vmatprep.subr.bf16.mxu0 0
  %145 = vmatpush2.bf16.msra.mxu0 0
  %146 = vmatprep.subr.bf16.mxu0 0
  %147 = vmatpush2.bf16.msra.mxu0 0
  %148 = vmatprep.subr.bf16.mxu0 0
  %149 = vmatpush2.bf16.msra.mxu0 0
  %150 = vmatprep.subr.bf16.mxu0 0
  %151 = vmatpush2.bf16.msra.mxu0 0
  %152 = vmatprep.subr.bf16.mxu0 0
  %153 = vmatpush2.bf16.msra.mxu0 0
  %154 = vmatprep.subr.bf16.mxu0 0
  %155 = vmatpush2.bf16.msra.mxu0 0
  %156 = vmatprep.mubr.bf16.mxu0 0
  %157 = vmatmul.mubr.bf16.gmra.mxu0 %v122
  %v158 = vpop.f32.mrf.mxu0
  %v159 = vadd.f32 %v94, %v158
  %v160 = vpop.f32.mrf.mxu0
  %v161 = vpop.f32.mrf.mxu0
  %v162 = vadd.f32 %v94, %v161
  %v163 = vpop.f32.mrf.mxu0
  %164 = vdwg.mxu0
  %v165 = vmax.f32 %v159, 0.0
  %v166 = vmax.f32 %v162, 0.0
  %v167 = vpack.c.bf16 %v166, %v165
  %v168 = vld [vmem:[%s8] sm:$0xf]
  %v169 = vld [vmem:[%s8 + $0x4] sm:$0xf]
  %v170 = vld [vmem:[%s8 + $0x8] sm:$0xf]
  %v171 = vld [vmem:[%s8 + $0xc] sm:$0xf]
  %v172 = vld [vmem:[%s8 + $0x10] sm:$0xf]
  %v173 = vld [vmem:[%s8 + $0x14] sm:$0xf]
  %v174 = vld [vmem:[%s8 + $0x18] sm:$0xf]
  %v175 = vld [vmem:[%s8 + $0x1c] sm:$0xf]
  %v176 = vld [vmem:[%s8 + $0x20] sm:$0xf]
  %v177 = vld [vmem:[%s8 + $0x24] sm:$0xf]
  %v178 = vld [vmem:[%s8 + $0x28] sm:$0xf]
  %v179 = vld [vmem:[%s8 + $0x2c] sm:$0xf]
  %v180 = vld [vmem:[%s8 + $0x30] sm:$0xf]
  %v181 = vld [vmem:[%s8 + $0x34] sm:$0xf]
  %v182 = vld [vmem:[%s8 + $0x38] sm:$0xf]
  %v183 = vld [vmem:[%s8 + $0x3c] sm:$0xf]
  %v200 = vunpack.c.l.b16 %v168
  %v201 = vunpack.c.l.b16 %v169
  %v202 = vunpack.c.l.b16 %v170
  %v203 = vunpack.c.l.b16 %v171
  %v204 = vunpack.c.l.b16 %v172
  %v205 = vunpack.c.l.b16 %v173
  %v206 = vunpack.c.l.b16 %v174
  %v207 = vunpack.c.l.b16 %v175
  %v208 = vunpack.c.l.b16 %v176
  %v209 = vunpack.c.l.b16 %v177
  %v210 = vunpack.c.l.b16 %v178
  %v211 = vunpack.c.l.b16 %v179
  %v212 = vunpack.c.l.b16 %v180
  %v213 = vunpack.c.l.b16 %v181
  %v214 = vunpack.c.l.b16 %v182
  %v215 = vunpack.c.l.b16 %v183
  %v216 = vpack.c.b16 %v201, %v200
  %v217 = vpack.c.b16 %v203, %v202
  %v218 = vpack.c.b16 %v205, %v204
  %v219 = vpack.c.b16 %v207, %v206
  %v220 = vpack.c.b16 %v209, %v208
  %v221 = vpack.c.b16 %v211, %v210
  %v222 = vpack.c.b16 %v213, %v212
  %v223 = vpack.c.b16 %v215, %v214
  %232 = vmatprep.subr.bf16.mxu0 0
  %233 = vmatpush1.bf16.msra.mxu0 %v223
  %234 = vmatprep.subr.bf16.mxu0 0
  %235 = vmatpush1.bf16.msra.mxu0 %v222
  %236 = vmatprep.subr.bf16.mxu0 0
  %237 = vmatpush1.bf16.msra.mxu0 %v221
  %238 = vmatprep.subr.bf16.mxu0 0
  %239 = vmatpush1.bf16.msra.mxu0 %v220
  %240 = vmatprep.subr.bf16.mxu0 0
  %241 = vmatpush1.bf16.msra.mxu0 %v219
  %242 = vmatprep.subr.bf16.mxu0 0
  %243 = vmatpush1.bf16.msra.mxu0 %v218
  %244 = vmatprep.subr.bf16.mxu0 0
  %245 = vmatpush1.bf16.msra.mxu0 %v217
  %246 = vmatprep.subr.bf16.mxu0 0
  %247 = vmatpush1.bf16.msra.mxu0 %v216
  %248 = vmatprep.subr.bf16.mxu0 0
  %249 = vmatpush2.bf16.msra.mxu0 0
  %250 = vmatprep.subr.bf16.mxu0 0
  %251 = vmatpush2.bf16.msra.mxu0 0
  %252 = vmatprep.subr.bf16.mxu0 0
  %253 = vmatpush2.bf16.msra.mxu0 0
  %254 = vmatprep.subr.bf16.mxu0 0
  %255 = vmatpush2.bf16.msra.mxu0 0
  %256 = vmatprep.subr.bf16.mxu0 0
  %257 = vmatpush2.bf16.msra.mxu0 0
  %258 = vmatprep.subr.bf16.mxu0 0
  %259 = vmatpush2.bf16.msra.mxu0 0
  %260 = vmatprep.subr.bf16.mxu0 0
  %261 = vmatpush2.bf16.msra.mxu0 0
  %262 = vmatprep.subr.bf16.mxu0 0
  %263 = vmatpush2.bf16.msra.mxu0 0
  %264 = vmatprep.mubr.bf16.mxu0 0
  %265 = vmatmul.mubr.bf16.gmra.mxu0 %v167
  %v266 = vpop.f32.mrf.mxu0
  %v267 = vadd.f32 0.0, %v266
  %v268 = vpop.f32.mrf.mxu0
  %v269 = vpop.f32.mrf.mxu0
  %v270 = vadd.f32 0.0, %v269
  %v271 = vpop.f32.mrf.mxu0
  %272 = vdwg.mxu0
  %v273 = vadd.f32 %v78, %v267
  %v274 = vadd.f32 %v79, %v270
  %v275 = vld [vmem:[%s9] sm:$0x1]
  %v277 = vlaneseq
  %v278 = vshrl.u32 %v277, 7
  %v279 = vsub.s32 0, %v278
  %v280 = vrot.slane %v275, %v279
  %v282 = vadd.f32 %v273, %v280
  %v283 = vadd.f32 %v274, %v280
  %284 = vst.msk [vmem:[%s10] sm:$0xff] %vm120, %v282
  %285 = vst.msk [vmem:[%s10 + $0x8] sm:$0xff] %vm120, %v283
  %v286 = vsel %vm120, %v282, 0.0
  %v287 = vsel %vm120, %v283, 0.0
  %v288 = vadd.f32 %v286, %v287
  %v289 = vrot.slane %v288, 4
  %v290 = vadd.f32 %v288, %v289
  %v291 = vrot.slane %v290, 2
  %v292 = vadd.f32 %v290, %v291
  %v293 = vrot.slane %v292, 1
  %v294 = vadd.f32 %v292, %v293
  %v295 = vmul.f32 %v282, %v282
  %v296 = vmul.f32 %v283, %v283
  %v297 = vsel %vm120, %v295, 0.0
  %v298 = vsel %vm120, %v296, 0.0
  %v299 = vadd.f32 %v297, %v298
  %v300 = vrot.slane %v299, 4
  %v301 = vadd.f32 %v299, %v300
  %v302 = vrot.slane %v301, 2
  %v303 = vadd.f32 %v301, %v302
  %v304 = vrot.slane %v303, 1
  %v305 = vadd.f32 %v303, %v304
  %vm306 = vcmask 1040384
  %v307 = vsel %vm306, %v294, %v305
  %vm308 = vcmask 517120
  %309 = vst.msk [vmem:[%s11] sm:$0x3] %vm308, %v307
  // Predicated region
  $region42: #{gps_forward.11} parent=0 // pred_check
    _
  $region43: #{gps_forward.11} parent=0 // pred_check_branch
    %311 = sbr.rel (0) target = $region45
  $region44: #{gps_forward.11} parent=0 // pred_region
    _
  $region45: #{gps_forward.11} parent=0 // pred_fallthru
    _
  // Predicated region
  $region46: #{gps_forward.11} parent=0 // pred_check
    _
  $region47: #{gps_forward.11} parent=0 // pred_check_branch
    %313 = sbr.rel (0) target = $region49
  $region48: #{gps_forward.11} parent=0 // pred_region
    _
  $region49: #{gps_forward.11} parent=0 // pred_fallthru
    _
  // Predicated region
  $region50: #{gps_forward.11} parent=0 // pred_check
    _
  $region51: #{gps_forward.11} parent=0 // pred_check_branch
    %315 = sbr.rel (0) target = $region53
  $region52: #{gps_forward.11} parent=0 // pred_region
    _
  $region53: #{gps_forward.11} parent=0 // pred_fallthru
    _
  // Predicated region
  $region54: #{gps_forward.11} parent=0 // pred_check
    _
  $region55: #{gps_forward.11} parent=0 // pred_check_branch
    %317 = sbr.rel (0) target = $region57
  $region56: #{gps_forward.11} parent=0 // pred_region
    _
  $region57: #{gps_forward.11} parent=0 // pred_fallthru
    _

// kernel: gps_forward.15
$region0: #{gps_forward.15}
  #allocation0 [shape = 'u32[]', space=smem, size = 0x4, offset = 0x4, fixed_abs, tag = 'smem constant byte address 0x4 - core index']
  #allocation1 [shape = 'u32[144,128]{1,0:T(1,128)}', space=vmem, size = 0x12000, scoped, tag = 'internal scratch']
  #allocation2 [shape = 'f32[2,64]{1,0:T(2,128)}', space=vmem, size = 0x400, scoped, tag = 'scratch operand']
  %s0 = inlined_call_operand.vmem [shape: f32[2,16], index: 0, kind: input, shape index: {}]
  %s1 = inlined_call_operand.vmem [shape: f32[16,64], index: 1, kind: input, shape index: {}]
  %s2 = inlined_call_operand.vmem [shape: f32[2,64], index: 2, kind: input, shape index: {}]
  %s3 = inlined_call_operand.vmem [shape: bf16[128,384], index: 3, kind: input, shape index: {}]
  %s4 = inlined_call_operand.vmem [shape: f32[1,384], index: 4, kind: input, shape index: {}]
  %s5 = inlined_call_operand.vmem [shape: bf16[64,768], index: 5, kind: input, shape index: {}]
  %s6 = inlined_call_operand.vmem [shape: f32[1,768], index: 6, kind: input, shape index: {}]
  %s7 = inlined_call_operand.hbm [shape: f32[2,384], index: 7, kind: output, shape index: {0}]
  %s8 = inlined_call_operand.hbm [shape: f32[2,768], index: 8, kind: output, shape index: {1}]
  %9 = xla_tuple %s7, %s8
  %s10 = sld [smem:[#allocation0]]
  $region54: #{gps_forward.15} parent=0
    _
  %s12 = ssub.s32 1, %s10
  %s13 = scalar_select 0, %s12, %s10
  $region1: #{gps_forward.15} parent=0
    #allocation3 [shape = 'u8[3072]{0}', space=vmem, size = 0xc00, scoped, tag = 'output window, operand 0, single buffered']
    #allocation4 [shape = 's32[1]{0}', space=sflag, size = 0x4, scoped, tag = 'scoped memory for gps_forward.15']
    #allocation5 [shape = 'u8[6144]{0}', space=vmem, size = 0x1800, scoped, tag = 'output window, operand 1, single buffered']
    #allocation6 [shape = 's32[1]{0}', space=sflag, size = 0x4, scoped, tag = 'scoped memory for gps_forward.15']
    %14 = vsyncpa [#allocation4], 0
    %15 = vsyncpa [#allocation6], 0
    // Predicated region
    $region2: #{gps_forward.15} parent=1 // pred_check
      _
    $region3: #{gps_forward.15} parent=1 // pred_check_branch
      %17 = sbr.rel (0) target = $region5
    $region4: #{gps_forward.15} parent=1 // pred_region
      _
    $region5: #{gps_forward.15} parent=1 // pred_fallthru
      _
    // Predicated region
    $region6: #{gps_forward.15} parent=1 // pred_check
      _
    $region7: #{gps_forward.15} parent=1 // pred_check_branch
      %19 = sbr.rel (0) target = $region9
    $region8: #{gps_forward.15} parent=1 // pred_region
      _
    $region9: #{gps_forward.15} parent=1 // pred_fallthru
      _
    // Predicated region
    $region10: #{gps_forward.15} parent=1 // pred_check
      _
    $region11: #{gps_forward.15} parent=1 // pred_check_branch
      %21 = sbr.rel (0) target = $region13
    $region12: #{gps_forward.15} parent=1 // pred_region
      _
    $region13: #{gps_forward.15} parent=1 // pred_fallthru
      _
    // Predicated region
    $region14: #{gps_forward.15} parent=1 // pred_check
      _
    $region15: #{gps_forward.15} parent=1 // pred_check_branch
      %23 = sbr.rel (0) target = $region17
    $region16: #{gps_forward.15} parent=1 // pred_region
      _
    $region17: #{gps_forward.15} parent=1 // pred_fallthru
      _
    // Predicated region
    $region18: #{gps_forward.15} parent=1 // pred_check
      _
    $region19: #{gps_forward.15} parent=1 // pred_check_branch
      %25 = sbr.rel (0) target = $region21
    $region20: #{gps_forward.15} parent=1 // pred_region
      _
    $region21: #{gps_forward.15} parent=1 // pred_fallthru
      _
    // Predicated region
    $region22: #{gps_forward.15} parent=1 // pred_check
      _
    $region23: #{gps_forward.15} parent=1 // pred_check_branch
      %27 = sbr.rel (0) target = $region25
    $region24: #{gps_forward.15} parent=1 // pred_region
      _
    $region25: #{gps_forward.15} parent=1 // pred_fallthru
      _
    // Predicated region
    $region26: #{gps_forward.15} parent=1 // pred_check
      _
    $region27: #{gps_forward.15} parent=1 // pred_check_branch
      %29 = sbr.rel (0) target = $region29
    $region28: #{gps_forward.15} parent=1 // pred_region
      _
    $region29: #{gps_forward.15} parent=1 // pred_fallthru
      _
    %p31 = scmp.eq.s32.totalorder 0, 0
    // Predicated region
    $region30: #{gps_forward.15} parent=1 // pred_check
      %p32 = pneg %p31
    $region31: #{gps_forward.15} parent=1 // pred_check_branch
      %34 = sbr.rel (%p32) target = $region33
    $region32: #{gps_forward.15} parent=1 // pred_region
      %vm35 = vcmask 517120
      %36 = vst.msk [vmem:[#allocation2] sm:$0x3] %vm35, 0.0
    $region33: #{gps_forward.15} parent=1 // pred_fallthru
      _
    %v37 = vld [vmem:[#allocation2] sm:$0x3]
    %v38 = vld [vmem:[%s0] sm:$0x3]
    %v39 = vpack.c.bf16 %v38, %v38
    %v40 = vld [vmem:[%s1] sm:$0xff]
    %v41 = vld [vmem:[%s1 + $0x8] sm:$0xff]
    %v42 = vpack.c.bf16 %v41, %v40
    %vm43 = vcmask 130048
    %v45 = vsel %vm43, %v39, 0
    %47 = vmatprep.subr.bf16.mxu0 0
    %48 = vmatpush1.bf16.msra.mxu0 0
    %49 = vmatprep.subr.bf16.mxu0 0
    %50 = vmatpush1.bf16.msra.mxu0 0
    %51 = vmatprep.subr.bf16.mxu0 0
    %52 = vmatpush1.bf16.msra.mxu0 0
    %53 = vmatprep.subr.bf16.mxu0 0
    %54 = vmatpush1.bf16.msra.mxu0 0
    %55 = vmatprep.subr.bf16.mxu0 0
    %56 = vmatpush1.bf16.msra.mxu0 0
    %57 = vmatprep.subr.bf16.mxu0 0
    %58 = vmatpush1.bf16.msra.mxu0 0
    %59 = vmatprep.subr.bf16.mxu0 0
    %60 = vmatpush1.bf16.msra.mxu0 0
    %61 = vmatprep.subr.bf16.mxu0 0
    %62 = vmatpush1.bf16.msra.mxu0 %v42
    %63 = vmatprep.subr.bf16.mxu0 0
    %64 = vmatpush2.bf16.msra.mxu0 0
    %65 = vmatprep.subr.bf16.mxu0 0
    %66 = vmatpush2.bf16.msra.mxu0 0
    %67 = vmatprep.subr.bf16.mxu0 0
    %68 = vmatpush2.bf16.msra.mxu0 0
    %69 = vmatprep.subr.bf16.mxu0 0
    %70 = vmatpush2.bf16.msra.mxu0 0
    %71 = vmatprep.subr.bf16.mxu0 0
    %72 = vmatpush2.bf16.msra.mxu0 0
    %73 = vmatprep.subr.bf16.mxu0 0
    %74 = vmatpush2.bf16.msra.mxu0 0
    %75 = vmatprep.subr.bf16.mxu0 0
    %76 = vmatpush2.bf16.msra.mxu0 0
    %77 = vmatprep.subr.bf16.mxu0 0
    %78 = vmatpush2.bf16.msra.mxu0 0
    %79 = vmatprep.mubr.bf16.mxu0 0
    %80 = vmatmul.mubr.bf16.gmra.mxu0 %v45
    %v81 = vpop.f32.mrf.mxu0
    %v82 = vadd.f32 0.0, %v81
    %v83 = vpop.f32.mrf.mxu0
    %v84 = vpop.f32.mrf.mxu0
    %v85 = vpop.f32.mrf.mxu0
    %86 = vdwg.mxu0
    %v87 = vadd.f32 %v37, %v82
    %vm88 = vcmask 517120
    %89 = vst.msk [vmem:[#allocation2] sm:$0x3] %vm88, %v87
    // Predicated region
    $region34: #{gps_forward.15} parent=1 // pred_check
      %p90 = pneg %p31
    $region35: #{gps_forward.15} parent=1 // pred_check_branch
      %92 = sbr.rel (%p90) target = $region37
    $region36: #{gps_forward.15} parent=1 // pred_region
      %v93 = vld [vmem:[%s2] sm:$0x3]
      %v94 = vld [vmem:[#allocation2] sm:$0x3]
      %96 = vrot.lane.b32.xlu0 %v93, 64
      %v97 = vpop.permute.xlu0 %96
      %vm99 = vcmask 523264
      %v100 = vsel %vm99, %v94, %v97
      %v101 = vpack.c.bf16 %v100, %v100
      %v102 = vld [vmem:[%s3] sm:$0xff]
      %v103 = vld [vmem:[%s3 + $0x8] sm:$0xf]
      %v104 = vld [vmem:[%s3 + $0xc] sm:$0xff]
      %v105 = vld [vmem:[%s3 + $0x14] sm:$0xf]
      %v106 = vld [vmem:[%s3 + $0x18] sm:$0xff]
      %v107 = vld [vmem:[%s3 + $0x20] sm:$0xf]
      %v108 = vld [vmem:[%s3 + $0x24] sm:$0xff]
      %v109 = vld [vmem:[%s3 + $0x2c] sm:$0xf]
      %v110 = vld [vmem:[%s3 + $0x30] sm:$0xff]
      %v111 = vld [vmem:[%s3 + $0x38] sm:$0xf]
      %v112 = vld [vmem:[%s3 + $0x3c] sm:$0xff]
      %v113 = vld [vmem:[%s3 + $0x44] sm:$0xf]
      %v114 = vld [vmem:[%s3 + $0x48] sm:$0xff]
      %v115 = vld [vmem:[%s3 + $0x50] sm:$0xf]
      %v116 = vld [vmem:[%s3 + $0x54] sm:$0xff]
      %v117 = vld [vmem:[%s3 + $0x5c] sm:$0xf]
      %v118 = vld [vmem:[%s3 + $0x60] sm:$0xff]
      %v119 = vld [vmem:[%s3 + $0x68] sm:$0xf]
      %v120 = vld [vmem:[%s3 + $0x6c] sm:$0xff]
      %v121 = vld [vmem:[%s3 + $0x74] sm:$0xf]
      %v122 = vld [vmem:[%s3 + $0x78] sm:$0xff]
      %v123 = vld [vmem:[%s3 + $0x80] sm:$0xf]
      %v124 = vld [vmem:[%s3 + $0x84] sm:$0xff]
      %v125 = vld [vmem:[%s3 + $0x8c] sm:$0xf]
      %v126 = vld [vmem:[%s3 + $0x90] sm:$0xff]
      %v127 = vld [vmem:[%s3 + $0x98] sm:$0xf]
      %v128 = vld [vmem:[%s3 + $0x9c] sm:$0xff]
      %v129 = vld [vmem:[%s3 + $0xa4] sm:$0xf]
      %v130 = vld [vmem:[%s3 + $0xa8] sm:$0xff]
      %v131 = vld [vmem:[%s3 + $0xb0] sm:$0xf]
      %v132 = vld [vmem:[%s3 + $0xb4] sm:$0xff]
      %v133 = vld [vmem:[%s3 + $0xbc] sm:$0xf]
      %v134 = vld [vmem:[%s4] sm:$0x7]
      %v136 = vlaneseq
      %v137 = vshrl.u32 %v136, 7
      %v138 = vsub.s32 0, %v137
      %v139 = vrot.slane %v134, %v138
      %v140 = vlaneseq
      %v141 = vshrl.u32 %v140, 7
      %v142 = vsub.s32 1, %v141
      %v143 = vrot.slane %v134, %v142
      %v144 = vlaneseq
      %v145 = vshrl.u32 %v144, 7
      %v146 = vsub.s32 2, %v145
      %v147 = vrot.slane %v134, %v146
      %v183 = vunpack.c.l.b16 %v102
      %v184 = vunpack.c.h.b16 %v102
      %v185 = vunpack.c.l.b16 %v103
      %v186 = vunpack.c.l.b16 %v104
      %v187 = vunpack.c.h.b16 %v104
      %v188 = vunpack.c.l.b16 %v105
      %v189 = vunpack.c.l.b16 %v106
      %v190 = vunpack.c.h.b16 %v106
      %v191 = vunpack.c.l.b16 %v107
      %v192 = vunpack.c.l.b16 %v108
      %v193 = vunpack.c.h.b16 %v108
      %v194 = vunpack.c.l.b16 %v109
      %v195 = vunpack.c.l.b16 %v110
      %v196 = vunpack.c.h.b16 %v110
      %v197 = vunpack.c.l.b16 %v111
      %v198 = vunpack.c.l.b16 %v112
      %v199 = vunpack.c.h.b16 %v112
      %v200 = vunpack.c.l.b16 %v113
      %v201 = vunpack.c.l.b16 %v114
      %v202 = vunpack.c.h.b16 %v114
      %v203 = vunpack.c.l.b16 %v115
      %v204 = vunpack.c.l.b16 %v116
      %v205 = vunpack.c.h.b16 %v116
      %v206 = vunpack.c.l.b16 %v117
      %v207 = vunpack.c.l.b16 %v118
      %v208 = vunpack.c.h.b16 %v118
      %v209 = vunpack.c.l.b16 %v119
      %v210 = vunpack.c.l.b16 %v120
      %v211 = vunpack.c.h.b16 %v120
      %v212 = vunpack.c.l.b16 %v121
      %v213 = vunpack.c.l.b16 %v122
      %v214 = vunpack.c.h.b16 %v122
      %v215 = vunpack.c.l.b16 %v123
      %v216 = vunpack.c.l.b16 %v124
      %v217 = vunpack.c.h.b16 %v124
      %v218 = vunpack.c.l.b16 %v125
      %v219 = vunpack.c.l.b16 %v126
      %v220 = vunpack.c.h.b16 %v126
      %v221 = vunpack.c.l.b16 %v127
      %v222 = vunpack.c.l.b16 %v128
      %v223 = vunpack.c.h.b16 %v128
      %v224 = vunpack.c.l.b16 %v129
      %v225 = vunpack.c.l.b16 %v130
      %v226 = vunpack.c.h.b16 %v130
      %v227 = vunpack.c.l.b16 %v131
      %v228 = vunpack.c.l.b16 %v132
      %v229 = vunpack.c.h.b16 %v132
      %v230 = vunpack.c.l.b16 %v133
      %v231 = vpack.c.b16 %v186, %v183
      %v232 = vpack.c.b16 %v187, %v184
      %v233 = vpack.c.b16 %v188, %v185
      %v234 = vpack.c.b16 %v192, %v189
      %v235 = vpack.c.b16 %v193, %v190
      %v236 = vpack.c.b16 %v194, %v191
      %v237 = vpack.c.b16 %v198, %v195
      %v238 = vpack.c.b16 %v199, %v196
      %v239 = vpack.c.b16 %v200, %v197
      %v240 = vpack.c.b16 %v204, %v201
      %v241 = vpack.c.b16 %v205, %v202
      %v242 = vpack.c.b16 %v206, %v203
      %v243 = vpack.c.b16 %v210, %v207
      %v244 = vpack.c.b16 %v211, %v208
      %v245 = vpack.c.b16 %v212, %v209
      %v246 = vpack.c.b16 %v216, %v213
      %v247 = vpack.c.b16 %v217, %v214
      %v248 = vpack.c.b16 %v218, %v215
      %v249 = vpack.c.b16 %v222, %v219
      %v250 = vpack.c.b16 %v223, %v220
      %v251 = vpack.c.b16 %v224, %v221
      %v252 = vpack.c.b16 %v228, %v225
      %v253 = vpack.c.b16 %v229, %v226
      %v254 = vpack.c.b16 %v230, %v227
      %279 = vmatprep.subr.bf16.mxu0 %v253
      %280 = vmatpush1.bf16.msra.mxu0 %v252
      %281 = vmatprep.subr.bf16.mxu0 %v250
      %282 = vmatpush1.bf16.msra.mxu0 %v249
      %283 = vmatprep.subr.bf16.mxu0 %v247
      %284 = vmatpush1.bf16.msra.mxu0 %v246
      %285 = vmatprep.subr.bf16.mxu0 %v244
      %286 = vmatpush1.bf16.msra.mxu0 %v243
      %287 = vmatprep.subr.bf16.mxu0 %v241
      %288 = vmatpush1.bf16.msra.mxu0 %v240
      %289 = vmatprep.subr.bf16.mxu0 %v238
      %290 = vmatpush1.bf16.msra.mxu0 %v237
      %291 = vmatprep.subr.bf16.mxu0 %v235
      %292 = vmatpush1.bf16.msra.mxu0 %v234
      %293 = vmatprep.subr.bf16.mxu0 %v232
      %294 = vmatpush1.bf16.msra.mxu0 %v231
      %295 = vmatprep.subr.bf16.mxu0 0
      %296 = vmatpush2.bf16.msra.mxu0 0
      %297 = vmatprep.subr.bf16.mxu0 0
      %298 = vmatpush2.bf16.msra.mxu0 0
      %299 = vmatprep.subr.bf16.mxu0 0
      %300 = vmatpush2.bf16.msra.mxu0 0
      %301 = vmatprep.subr.bf16.mxu0 0
      %302 = vmatpush2.bf16.msra.mxu0 0
      %303 = vmatprep.subr.bf16.mxu0 0
      %304 = vmatpush2.bf16.msra.mxu0 0
      %305 = vmatprep.subr.bf16.mxu0 0
      %306 = vmatpush2.bf16.msra.mxu0 0
      %307 = vmatprep.subr.bf16.mxu0 0
      %308 = vmatpush2.bf16.msra.mxu0 0
      %309 = vmatprep.subr.bf16.mxu0 0
      %310 = vmatpush2.bf16.msra.mxu0 0
      %311 = vmatprep.mubr.bf16.mxu0 0
      %312 = vmatmul.mubr.bf16.gmra.mxu0 %v101
      %v313 = vpop.f32.mrf.mxu0
      %v314 = vadd.f32 %v139, %v313
      %v315 = vpop.f32.mrf.mxu0
      %v316 = vadd.f32 %v143, %v315
      %v317 = vpop.f32.mrf.mxu0
      %v318 = vpop.f32.mrf.mxu0
      %319 = vdwg.mxu0
      %320 = vmatprep.subr.bf16.mxu0 0
      %321 = vmatpush1.bf16.msra.mxu0 %v254
      %322 = vmatprep.subr.bf16.mxu0 0
      %323 = vmatpush1.bf16.msra.mxu0 %v251
      %324 = vmatprep.subr.bf16.mxu0 0
      %325 = vmatpush1.bf16.msra.mxu0 %v248
      %326 = vmatprep.subr.bf16.mxu0 0
      %327 = vmatpush1.bf16.msra.mxu0 %v245
      %328 = vmatprep.subr.bf16.mxu0 0
      %329 = vmatpush1.bf16.msra.mxu0 %v242
      %330 = vmatprep.subr.bf16.mxu0 0
      %331 = vmatpush1.bf16.msra.mxu0 %v239
      %332 = vmatprep.subr.bf16.mxu0 0
      %333 = vmatpush1.bf16.msra.mxu0 %v236
      %334 = vmatprep.subr.bf16.mxu0 0
      %335 = vmatpush1.bf16.msra.mxu0 %v233
      %336 = vmatprep.subr.bf16.mxu0 0
      %337 = vmatpush2.bf16.msra.mxu0 0
      %338 = vmatprep.subr.bf16.mxu0 0
      %339 = vmatpush2.bf16.msra.mxu0 0
      %340 = vmatprep.subr.bf16.mxu0 0
      %341 = vmatpush2.bf16.msra.mxu0 0
      %342 = vmatprep.subr.bf16.mxu0 0
      %343 = vmatpush2.bf16.msra.mxu0 0
      %344 = vmatprep.subr.bf16.mxu0 0
      %345 = vmatpush2.bf16.msra.mxu0 0
      %346 = vmatprep.subr.bf16.mxu0 0
      %347 = vmatpush2.bf16.msra.mxu0 0
      %348 = vmatprep.subr.bf16.mxu0 0
      %349 = vmatpush2.bf16.msra.mxu0 0
      %350 = vmatprep.subr.bf16.mxu0 0
      %351 = vmatpush2.bf16.msra.mxu0 0
      %352 = vmatprep.mubr.bf16.mxu0 0
      %353 = vmatmul.mubr.bf16.gmra.mxu0 %v101
      %v354 = vpop.f32.mrf.mxu0
      %v355 = vadd.f32 %v147, %v354
      %v356 = vpop.f32.mrf.mxu0
      %v357 = vpop.f32.mrf.mxu0
      %v358 = vpop.f32.mrf.mxu0
      %359 = vdwg.mxu0
      %v363 = vcombine.low %v314, %v316
      %v365 = vunpack.c.l.s4 1983009808
      %v366 = vunpack.c.0.s8 %v365
      %v367 = vlaneseq
      %v368 = vshrl.u32 %v367, 7
      %v369 = vsub.s32 %v366, %v368
      %v370 = vrot.slane %v363, %v369
      %v372 = vunpack.c.l.s4 1983009808
      %v373 = vunpack.c.0.s8 %v372
      %v374 = vlaneseq
      %v375 = vshrl.u32 %v374, 7
      %v376 = vsub.s32 %v373, %v375
      %v377 = vrot.slane %v355, %v376
      %v378 = vcombine.low %v370, %v377
      %380 = vst [vmem:[#allocation3] sm:$0x3f] %v378
      %v381 = vpack.c.bf16 %v93, %v93
      %v382 = vld [vmem:[%s5] sm:$0xff]
      %v383 = vld [vmem:[%s5 + $0x8] sm:$0xff]
      %v384 = vld [vmem:[%s5 + $0x10] sm:$0xff]
      %v385 = vld [vmem:[%s5 + $0x18] sm:$0xff]
      %v386 = vld [vmem:[%s5 + $0x20] sm:$0xff]
      %v387 = vld [vmem:[%s5 + $0x28] sm:$0xff]
      %v388 = vld [vmem:[%s5 + $0x30] sm:$0xff]
      %v389 = vld [vmem:[%s5 + $0x38] sm:$0xff]
      %v390 = vld [vmem:[%s5 + $0x40] sm:$0xff]
      %v391 = vld [vmem:[%s5 + $0x48] sm:$0xff]
      %v392 = vld [vmem:[%s5 + $0x50] sm:$0xff]
      %v393 = vld [vmem:[%s5 + $0x58] sm:$0xff]
      %v394 = vld [vmem:[%s5 + $0x60] sm:$0xff]
      %v395 = vld [vmem:[%s5 + $0x68] sm:$0xff]
      %v396 = vld [vmem:[%s5 + $0x70] sm:$0xff]
      %v397 = vld [vmem:[%s5 + $0x78] sm:$0xff]
      %v398 = vld [vmem:[%s5 + $0x80] sm:$0xff]
      %v399 = vld [vmem:[%s5 + $0x88] sm:$0xff]
      %v400 = vld [vmem:[%s5 + $0x90] sm:$0xff]
      %v401 = vld [vmem:[%s5 + $0x98] sm:$0xff]
      %v402 = vld [vmem:[%s5 + $0xa0] sm:$0xff]
      %v403 = vld [vmem:[%s5 + $0xa8] sm:$0xff]
      %v404 = vld [vmem:[%s5 + $0xb0] sm:$0xff]
      %v405 = vld [vmem:[%s5 + $0xb8] sm:$0xff]
      %v406 = vld [vmem:[%s6] sm:$0x3f]
      %v408 = vlaneseq
      %v409 = vshrl.u32 %v408, 7
      %v410 = vsub.s32 0, %v409
      %v411 = vrot.slane %v406, %v410
      %v412 = vlaneseq
      %v413 = vshrl.u32 %v412, 7
      %v414 = vsub.s32 1, %v413
      %v415 = vrot.slane %v406, %v414
      %v416 = vlaneseq
      %v417 = vshrl.u32 %v416, 7
      %v418 = vsub.s32 2, %v417
      %v419 = vrot.slane %v406, %v418
      %v420 = vlaneseq
      %v421 = vshrl.u32 %v420, 7
      %v422 = vsub.s32 3, %v421
      %v423 = vrot.slane %v406, %v422
      %v424 = vlaneseq
      %v425 = vshrl.u32 %v424, 7
      %v426 = vsub.s32 4, %v425
      %v427 = vrot.slane %v406, %v426
      %v428 = vlaneseq
      %v429 = vshrl.u32 %v428, 7
      %v430 = vsub.s32 5, %v429
      %v431 = vrot.slane %v406, %v430
      %v462 = vunpack.c.l.b16 %v382
      %v463 = vunpack.c.h.b16 %v382
      %v464 = vunpack.c.l.b16 %v383
      %v465 = vunpack.c.h.b16 %v383
      %v466 = vunpack.c.l.b16 %v384
      %v467 = vunpack.c.h.b16 %v384
      %v468 = vunpack.c.l.b16 %v385
      %v469 = vunpack.c.h.b16 %v385
      %v470 = vunpack.c.l.b16 %v386
      %v471 = vunpack.c.h.b16 %v386
      %v472 = vunpack.c.l.b16 %v387
      %v473 = vunpack.c.h.b16 %v387
      %v474 = vunpack.c.l.b16 %v388
      %v475 = vunpack.c.h.b16 %v388
      %v476 = vunpack.c.l.b16 %v389
      %v477 = vunpack.c.h.b16 %v389
      %v478 = vunpack.c.l.b16 %v390
      %v479 = vunpack.c.h.b16 %v390
      %v480 = vunpack.c.l.b16 %v391
      %v481 = vunpack.c.h.b16 %v391
      %v482 = vunpack.c.l.b16 %v392
      %v483 = vunpack.c.h.b16 %v392
      %v484 = vunpack.c.l.b16 %v393
      %v485 = vunpack.c.h.b16 %v393
      %v486 = vunpack.c.l.b16 %v394
      %v487 = vunpack.c.h.b16 %v394
      %v488 = vunpack.c.l.b16 %v395
      %v489 = vunpack.c.h.b16 %v395
      %v490 = vunpack.c.l.b16 %v396
      %v491 = vunpack.c.h.b16 %v396
      %v492 = vunpack.c.l.b16 %v397
      %v493 = vunpack.c.h.b16 %v397
      %v494 = vunpack.c.l.b16 %v398
      %v495 = vunpack.c.h.b16 %v398
      %v496 = vunpack.c.l.b16 %v399
      %v497 = vunpack.c.h.b16 %v399
      %v498 = vunpack.c.l.b16 %v400
      %v499 = vunpack.c.h.b16 %v400
      %v500 = vunpack.c.l.b16 %v401
      %v501 = vunpack.c.h.b16 %v401
      %v502 = vunpack.c.l.b16 %v402
      %v503 = vunpack.c.h.b16 %v402
      %v504 = vunpack.c.l.b16 %v403
      %v505 = vunpack.c.h.b16 %v403
      %v506 = vunpack.c.l.b16 %v404
      %v507 = vunpack.c.h.b16 %v404
      %v508 = vunpack.c.l.b16 %v405
      %v509 = vunpack.c.h.b16 %v405
      %v510 = vpack.c.b16 %v468, %v462
      %v511 = vpack.c.b16 %v469, %v463
      %v512 = vpack.c.b16 %v470, %v464
      %v513 = vpack.c.b16 %v471, %v465
      %v514 = vpack.c.b16 %v472, %v466
      %v515 = vpack.c.b16 %v473, %v467
      %v516 = vpack.c.b16 %v480, %v474
      %v517 = vpack.c.b16 %v481, %v475
      %v518 = vpack.c.b16 %v482, %v476
      %v519 = vpack.c.b16 %v483, %v477
      %v520 = vpack.c.b16 %v484, %v478
      %v521 = vpack.c.b16 %v485, %v479
      %v522 = vpack.c.b16 %v492, %v486
      %v523 = vpack.c.b16 %v493, %v487
      %v524 = vpack.c.b16 %v494, %v488
      %v525 = vpack.c.b16 %v495, %v489
      %v526 = vpack.c.b16 %v496, %v490
      %v527 = vpack.c.b16 %v497, %v491
      %v528 = vpack.c.b16 %v504, %v498
      %v529 = vpack.c.b16 %v505, %v499
      %v530 = vpack.c.b16 %v506, %v500
      %v531 = vpack.c.b16 %v507, %v501
      %v532 = vpack.c.b16 %v508, %v502
      %v533 = vpack.c.b16 %v509, %v503
      %v559 = vsel %vm99, %v381, 0
      %561 = vmatprep.subr.bf16.mxu0 0
      %562 = vmatpush1.bf16.msra.mxu0 0
      %563 = vmatprep.subr.bf16.mxu0 0
      %564 = vmatpush1.bf16.msra.mxu0 0
      %565 = vmatprep.subr.bf16.mxu0 0
      %566 = vmatpush1.bf16.msra.mxu0 0
      %567 = vmatprep.subr.bf16.mxu0 0
      %568 = vmatpush1.bf16.msra.mxu0 0
      %569 = vmatprep.subr.bf16.mxu0 %v529
      %570 = vmatpush1.bf16.msra.mxu0 %v528
      %571 = vmatprep.subr.bf16.mxu0 %v523
      %572 = vmatpush1.bf16.msra.mxu0 %v522
      %573 = vmatprep.subr.bf16.mxu0 %v517
      %574 = vmatpush1.bf16.msra.mxu0 %v516
      %575 = vmatprep.subr.bf16.mxu0 %v511
      %576 = vmatpush1.bf16.msra.mxu0 %v510
      %577 = vmatprep.subr.bf16.mxu0 0
      %578 = vmatpush2.bf16.msra.mxu0 0
      %579 = vmatprep.subr.bf16.mxu0 0
      %580 = vmatpush2.bf16.msra.mxu0 0
      %581 = vmatprep.subr.bf16.mxu0 0
      %582 = vmatpush2.bf16.msra.mxu0 0
      %583 = vmatprep.subr.bf16.mxu0 0
      %584 = vmatpush2.bf16.msra.mxu0 0
      %585 = vmatprep.subr.bf16.mxu0 0
      %586 = vmatpush2.bf16.msra.mxu0 0
      %587 = vmatprep.subr.bf16.mxu0 0
      %588 = vmatpush2.bf16.msra.mxu0 0
      %589 = vmatprep.subr.bf16.mxu0 0
      %590 = vmatpush2.bf16.msra.mxu0 0
      %591 = vmatprep.subr.bf16.mxu0 0
      %592 = vmatpush2.bf16.msra.mxu0 0
      %593 = vmatprep.mubr.bf16.mxu0 0
      %594 = vmatmul.mubr.bf16.gmra.mxu0 %v559
      %v595 = vpop.f32.mrf.mxu0
      %v596 = vadd.f32 %v411, %v595
      %v597 = vpop.f32.mrf.mxu0
      %v598 = vadd.f32 %v415, %v597
      %v599 = vpop.f32.mrf.mxu0
      %v600 = vpop.f32.mrf.mxu0
      %601 = vdwg.mxu0
      %602 = vmatprep.subr.bf16.mxu0 0
      %603 = vmatpush1.bf16.msra.mxu0 0
      %604 = vmatprep.subr.bf16.mxu0 0
      %605 = vmatpush1.bf16.msra.mxu0 0
      %606 = vmatprep.subr.bf16.mxu0 0
      %607 = vmatpush1.bf16.msra.mxu0 0
      %608 = vmatprep.subr.bf16.mxu0 0
      %609 = vmatpush1.bf16.msra.mxu0 0
      %610 = vmatprep.subr.bf16.mxu0 %v531
      %611 = vmatpush1.bf16.msra.mxu0 %v530
      %612 = vmatprep.subr.bf16.mxu0 %v525
      %613 = vmatpush1.bf16.msra.mxu0 %v524
      %614 = vmatprep.subr.bf16.mxu0 %v519
      %615 = vmatpush1.bf16.msra.mxu0 %v518
      %616 = vmatprep.subr.bf16.mxu0 %v513
      %617 = vmatpush1.bf16.msra.mxu0 %v512
      %618 = vmatprep.subr.bf16.mxu0 0
      %619 = vmatpush2.bf16.msra.mxu0 0
      %620 = vmatprep.subr.bf16.mxu0 0
      %621 = vmatpush2.bf16.msra.mxu0 0
      %622 = vmatprep.subr.bf16.mxu0 0
      %623 = vmatpush2.bf16.msra.mxu0 0
      %624 = vmatprep.subr.bf16.mxu0 0
      %625 = vmatpush2.bf16.msra.mxu0 0
      %626 = vmatprep.subr.bf16.mxu0 0
      %627 = vmatpush2.bf16.msra.mxu0 0
      %628 = vmatprep.subr.bf16.mxu0 0
      %629 = vmatpush2.bf16.msra.mxu0 0
      %630 = vmatprep.subr.bf16.mxu0 0
      %631 = vmatpush2.bf16.msra.mxu0 0
      %632 = vmatprep.subr.bf16.mxu0 0
      %633 = vmatpush2.bf16.msra.mxu0 0
      %634 = vmatprep.mubr.bf16.mxu0 0
      %635 = vmatmul.mubr.bf16.gmra.mxu0 %v559
      %v636 = vpop.f32.mrf.mxu0
      %v637 = vadd.f32 %v419, %v636
      %v638 = vpop.f32.mrf.mxu0
      %v639 = vadd.f32 %v423, %v638
      %v640 = vpop.f32.mrf.mxu0
      %v641 = vpop.f32.mrf.mxu0
      %642 = vdwg.mxu0
      %643 = vmatprep.subr.bf16.mxu0 0
      %644 = vmatpush1.bf16.msra.mxu0 0
      %645 = vmatprep.subr.bf16.mxu0 0
      %646 = vmatpush1.bf16.msra.mxu0 0
      %647 = vmatprep.subr.bf16.mxu0 0
      %648 = vmatpush1.bf16.msra.mxu0 0
      %649 = vmatprep.subr.bf16.mxu0 0
      %650 = vmatpush1.bf16.msra.mxu0 0
      %651 = vmatprep.subr.bf16.mxu0 %v533
      %652 = vmatpush1.bf16.msra.mxu0 %v532
      %653 = vmatprep.subr.bf16.mxu0 %v527
      %654 = vmatpush1.bf16.msra.mxu0 %v526
      %655 = vmatprep.subr.bf16.mxu0 %v521
      %656 = vmatpush1.bf16.msra.mxu0 %v520
      %657 = vmatprep.subr.bf16.mxu0 %v515
      %658 = vmatpush1.bf16.msra.mxu0 %v514
      %659 = vmatprep.subr.bf16.mxu0 0
      %660 = vmatpush2.bf16.msra.mxu0 0
      %661 = vmatprep.subr.bf16.mxu0 0
      %662 = vmatpush2.bf16.msra.mxu0 0
      %663 = vmatprep.subr.bf16.mxu0 0
      %664 = vmatpush2.bf16.msra.mxu0 0
      %665 = vmatprep.subr.bf16.mxu0 0
      %666 = vmatpush2.bf16.msra.mxu0 0
      %667 = vmatprep.subr.bf16.mxu0 0
      %668 = vmatpush2.bf16.msra.mxu0 0
      %669 = vmatprep.subr.bf16.mxu0 0
      %670 = vmatpush2.bf16.msra.mxu0 0
      %671 = vmatprep.subr.bf16.mxu0 0
      %672 = vmatpush2.bf16.msra.mxu0 0
      %673 = vmatprep.subr.bf16.mxu0 0
      %674 = vmatpush2.bf16.msra.mxu0 0
      %675 = vmatprep.mubr.bf16.mxu0 0
      %676 = vmatmul.mubr.bf16.gmra.mxu0 %v559
      %v677 = vpop.f32.mrf.mxu0
      %v678 = vadd.f32 %v427, %v677
      %v679 = vpop.f32.mrf.mxu0
      %v680 = vadd.f32 %v431, %v679
      %v681 = vpop.f32.mrf.mxu0
      %v682 = vpop.f32.mrf.mxu0
      %683 = vdwg.mxu0
      %v690 = vcombine.low %v596, %v598
      %v691 = vcombine.low %v637, %v639
      %v693 = vunpack.c.l.s4 1983009808
      %v694 = vunpack.c.0.s8 %v693
      %v695 = vlaneseq
      %v696 = vshrl.u32 %v695, 7
      %v697 = vsub.s32 %v694, %v696
      %v698 = vrot.slane %v690, %v697
      %v700 = vunpack.c.l.s4 1983009808
      %v701 = vunpack.c.0.s8 %v700
      %v702 = vlaneseq
      %v703 = vshrl.u32 %v702, 7
      %v704 = vsub.s32 %v701, %v703
      %v705 = vrot.slane %v691, %v704
      %v706 = vcombine.low %v698, %v705
      %v707 = vcombine.low %v678, %v680
      %v709 = vunpack.c.l.s4 1983009808
      %v710 = vunpack.c.0.s8 %v709
      %v711 = vlaneseq
      %v712 = vshrl.u32 %v711, 7
      %v713 = vsub.s32 %v710, %v712
      %v714 = vrot.slane %v707, %v713
      %717 = vst [vmem:[#allocation5] sm:$0xff] %v706
      %718 = vst [vmem:[#allocation5 + $0x8] sm:$0xf] %v714
    $region37: #{gps_forward.15} parent=1 // pred_fallthru
      _
    // Predicated region
    $region38: #{gps_forward.15} parent=1 // pred_check
      _
    $region39: #{gps_forward.15} parent=1 // pred_check_branch
      %720 = sbr.rel (0) target = $region41
    $region40: #{gps_forward.15} parent=1 // pred_region
      %s722 = ssub.s32 96, 96
      %723 = vsyncadd [#allocation4], %s722
      %s725 = sshll.u32 [#allocation3], 4
      %s726 = int_to_ptr.vmem [resolvable:$true] %s725
      %728 = dma.vmem_to_hbm [thread:$0]  %s726, 96, %s7, [#allocation4]
    $region41: #{gps_forward.15} parent=1 // pred_fallthru
      _
    // Predicated region
    $region42: #{gps_forward.15} parent=1 // pred_check
      _
    $region43: #{gps_forward.15} parent=1 // pred_check_branch
      %730 = sbr.rel (0) target = $region45
    $region44: #{gps_forward.15} parent=1 // pred_region
      %s732 = ssub.s32 192, 192
      %733 = vsyncadd [#allocation6], %s732
      %s735 = sshll.u32 [#allocation5], 4
      %s736 = int_to_ptr.vmem [resolvable:$true] %s735
      %738 = dma.vmem_to_hbm [thread:$0]  %s736, 192, %s8, [#allocation6]
    $region45: #{gps_forward.15} parent=1 // pred_fallthru
      _
    // Predicated region
    $region46: #{gps_forward.15} parent=1 // pred_check
      _
    $region47: #{gps_forward.15} parent=1 // pred_check_branch
      %740 = sbr.rel (0) target = $region49
    $region48: #{gps_forward.15} parent=1 // pred_region
      %741 = dma.done [#allocation4], 96
    $region49: #{gps_forward.15} parent=1 // pred_fallthru
      _
    // Predicated region
    $region50: #{gps_forward.15} parent=1 // pred_check
      _
    $region51: #{gps_forward.15} parent=1 // pred_check_branch
      %743 = sbr.rel (0) target = $region53
    $region52: #{gps_forward.15} parent=1 // pred_region
      %744 = dma.done [#allocation6], 192
    $region53: #{gps_forward.15} parent=1 // pred_fallthru
      _
    %745 = vsyncpa [#allocation4], 1
    %746 = vsyncpa [#allocation6], 1

// kernel: gps_forward.10
$region0: #{gps_forward.10}
  #allocation0 [shape = 'u32[]', space=smem, size = 0x4, offset = 0x4, fixed_abs, tag = 'smem constant byte address 0x4 - core index']
  #allocation1 [shape = 'u32[144,128]{1,0:T(1,128)}', space=vmem, size = 0x12000, scoped, tag = 'internal scratch']
  #allocation2 [shape = 'f32[2,8,64]{2,1,0:T(8,128)}', space=vmem, size = 0x2000, scoped, tag = 'scratch operand']
  %s0 = inlined_call_operand.vmem [shape: bf16[2,8,192], index: 0, kind: input, shape index: {}]
  %s1 = inlined_call_operand.vmem [shape: f32[2,1,8], index: 1, kind: input, shape index: {}]
  %s2 = inlined_call_operand.vmem [shape: bf16[64,64], index: 2, kind: input, shape index: {}]
  %s3 = inlined_call_operand.vmem [shape: f32[1,64], index: 3, kind: input, shape index: {}]
  %s4 = inlined_call_operand.vmem [shape: f32[2,8,64], index: 4, kind: output, shape index: {}]
  %s5 = sld [smem:[#allocation0]]
  $region26: #{gps_forward.10} parent=0
    _
  %s7 = ssub.s32 1, %s5
  %s8 = scalar_select 0, %s7, %s5
  // Predicated region
  $region2: #{gps_forward.10} parent=0 // pred_check
    _
  $region3: #{gps_forward.10} parent=0 // pred_check_branch
    %10 = sbr.rel (0) target = $region5
  $region4: #{gps_forward.10} parent=0 // pred_region
    _
  $region5: #{gps_forward.10} parent=0 // pred_fallthru
    _
  // Predicated region
  $region6: #{gps_forward.10} parent=0 // pred_check
    _
  $region7: #{gps_forward.10} parent=0 // pred_check_branch
    %12 = sbr.rel (0) target = $region9
  $region8: #{gps_forward.10} parent=0 // pred_region
    _
  $region9: #{gps_forward.10} parent=0 // pred_fallthru
    _
  // Predicated region
  $region10: #{gps_forward.10} parent=0 // pred_check
    _
  $region11: #{gps_forward.10} parent=0 // pred_check_branch
    %14 = sbr.rel (0) target = $region13
  $region12: #{gps_forward.10} parent=0 // pred_region
    _
  $region13: #{gps_forward.10} parent=0 // pred_fallthru
    _
  // Predicated region
  $region14: #{gps_forward.10} parent=0 // pred_check
    _
  $region15: #{gps_forward.10} parent=0 // pred_check_branch
    %16 = sbr.rel (0) target = $region17
  $region16: #{gps_forward.10} parent=0 // pred_region
    _
  $region17: #{gps_forward.10} parent=0 // pred_fallthru
    _
  %v18 = vld [vmem:[%s0] sm:$0xff]
  %v19 = vld [vmem:[%s0 + $0x8] sm:$0xff]
  %v20 = vld [vmem:[%s1] sm:$0x1]
  %v21 = vld [vmem:[%s1 + $0x1] sm:$0x1]
  %v24 = vlaneseq
  %v25 = vshrl.u32 %v24, 7
  %v26 = vsub.s32 0, %v25
  %v27 = vrot.slane %v20, %v26
  %v28 = vlaneseq
  %v29 = vshrl.u32 %v28, 7
  %v30 = vsub.s32 0, %v29
  %v31 = vrot.slane %v21, %v30
  %v35 = vunpack.c.l.b16 %v18
  %v36 = vpack.c.b16 %v35, %v35
  %37 = vrot.lane.b32.xlu0 %v36, 64
  %v38 = vpop.permute.xlu0 %37
  %vm39 = vcmask 64512
  %v41 = vsel %vm39, %v18, 0
  %v44 = vsel %vm39, %v38, 0
  %46 = vmatprep.subr.bf16.mxu0 0
  %47 = vmatpush1.bf16.xpose.msra.mxu0 0
  %48 = vmatprep.subr.bf16.mxu0 0
  %49 = vmatpush1.bf16.xpose.msra.mxu0 0
  %50 = vmatprep.subr.bf16.mxu0 0
  %51 = vmatpush1.bf16.xpose.msra.mxu0 0
  %52 = vmatprep.subr.bf16.mxu0 0
  %53 = vmatpush1.bf16.xpose.msra.mxu0 0
  %54 = vmatprep.subr.bf16.mxu0 0
  %55 = vmatpush1.bf16.xpose.msra.mxu0 0
  %56 = vmatprep.subr.bf16.mxu0 0
  %57 = vmatpush1.bf16.xpose.msra.mxu0 0
  %58 = vmatprep.subr.bf16.mxu0 0
  %59 = vmatpush1.bf16.xpose.msra.mxu0 0
  %60 = vmatprep.subr.bf16.mxu0 0
  %61 = vmatpush1.bf16.xpose.msra.mxu0 %v44
  %62 = vmatprep.subr.bf16.mxu0 0
  %63 = vmatpush2.bf16.xpose.msra.mxu0 0
  %64 = vmatprep.subr.bf16.mxu0 0
  %65 = vmatpush2.bf16.xpose.msra.mxu0 0
  %66 = vmatprep.subr.bf16.mxu0 0
  %67 = vmatpush2.bf16.xpose.msra.mxu0 0
  %68 = vmatprep.subr.bf16.mxu0 0
  %69 = vmatpush2.bf16.xpose.msra.mxu0 0
  %70 = vmatprep.subr.bf16.mxu0 0
  %71 = vmatpush2.bf16.xpose.msra.mxu0 0
  %72 = vmatprep.subr.bf16.mxu0 0
  %73 = vmatpush2.bf16.xpose.msra.mxu0 0
  %74 = vmatprep.subr.bf16.mxu0 0
  %75 = vmatpush2.bf16.xpose.msra.mxu0 0
  %76 = vmatprep.subr.bf16.mxu0 0
  %77 = vmatpush2.bf16.xpose.msra.mxu0 0
  %78 = vmatprep.mubr.bf16.mxu0 0
  %79 = vmatmul.mubr.bf16.gmra.mxu0 %v41
  %v80 = vpop.f32.mrf.mxu0
  %v81 = vadd.f32 %v27, %v80
  %v82 = vpop.f32.mrf.mxu0
  %v83 = vpop.f32.mrf.mxu0
  %v84 = vpop.f32.mrf.mxu0
  %85 = vdwg.mxu0
  %v87 = vunpack.c.l.b16 %v19
  %v88 = vpack.c.b16 %v87, %v87
  %89 = vrot.lane.b32.xlu0 %v88, 64
  %v90 = vpop.permute.xlu0 %89
  %v92 = vsel %vm39, %v19, 0
  %v95 = vsel %vm39, %v90, 0
  %97 = vmatprep.subr.bf16.mxu0 0
  %98 = vmatpush1.bf16.xpose.msra.mxu0 0
  %99 = vmatprep.subr.bf16.mxu0 0
  %100 = vmatpush1.bf16.xpose.msra.mxu0 0
  %101 = vmatprep.subr.bf16.mxu0 0
  %102 = vmatpush1.bf16.xpose.msra.mxu0 0
  %103 = vmatprep.subr.bf16.mxu0 0
  %104 = vmatpush1.bf16.xpose.msra.mxu0 0
  %105 = vmatprep.subr.bf16.mxu0 0
  %106 = vmatpush1.bf16.xpose.msra.mxu0 0
  %107 = vmatprep.subr.bf16.mxu0 0
  %108 = vmatpush1.bf16.xpose.msra.mxu0 0
  %109 = vmatprep.subr.bf16.mxu0 0
  %110 = vmatpush1.bf16.xpose.msra.mxu0 0
  %111 = vmatprep.subr.bf16.mxu0 0
  %112 = vmatpush1.bf16.xpose.msra.mxu0 %v95
  %113 = vmatprep.subr.bf16.mxu0 0
  %114 = vmatpush2.bf16.xpose.msra.mxu0 0
  %115 = vmatprep.subr.bf16.mxu0 0
  %116 = vmatpush2.bf16.xpose.msra.mxu0 0
  %117 = vmatprep.subr.bf16.mxu0 0
  %118 = vmatpush2.bf16.xpose.msra.mxu0 0
  %119 = vmatprep.subr.bf16.mxu0 0
  %120 = vmatpush2.bf16.xpose.msra.mxu0 0
  %121 = vmatprep.subr.bf16.mxu0 0
  %122 = vmatpush2.bf16.xpose.msra.mxu0 0
  %123 = vmatprep.subr.bf16.mxu0 0
  %124 = vmatpush2.bf16.xpose.msra.mxu0 0
  %125 = vmatprep.subr.bf16.mxu0 0
  %126 = vmatpush2.bf16.xpose.msra.mxu0 0
  %127 = vmatprep.subr.bf16.mxu0 0
  %128 = vmatpush2.bf16.xpose.msra.mxu0 0
  %129 = vmatprep.mubr.bf16.mxu0 0
  %130 = vmatmul.mubr.bf16.gmra.mxu0 %v92
  %v131 = vpop.f32.mrf.mxu0
  %v132 = vadd.f32 %v31, %v131
  %v133 = vpop.f32.mrf.mxu0
  %v134 = vpop.f32.mrf.mxu0
  %v135 = vpop.f32.mrf.mxu0
  %136 = vdwg.mxu0
  %v137 = vsel %vm39, %v81, -inf
  %138 = vmax.xlane.f32.xlu0 %v137
  %v139 = vpop.xlane.xlu0 %138
  %v140 = vsel %vm39, %v132, -inf
  %141 = vmax.xlane.f32.xlu0 %v140
  %v142 = vpop.xlane.xlu0 %141
  %v143 = vsub.f32 %v81, %v139
  %v144 = vsub.f32 %v132, %v142
  %v145 = vmul.f32 %v143, 1.442695
  %v146 = vpow.pop %v145
  %v147 = vmul.f32 %v144, 1.442695
  %v148 = vpow.pop %v147
  %v149 = vsel %vm39, %v146, 0.0
  %150 = vadd.xlane.f32.xlu0 %v149
  %v151 = vpop.xlane.xlu0 %150
  %v152 = vsel %vm39, %v148, 0.0
  %153 = vadd.xlane.f32.xlu0 %v152
  %v154 = vpop.xlane.xlu0 %153
  %v155 = vrcp.pop %v151
  %v156 = vrcp.pop %v154
  %v157 = vpack.c.bf16 %v146, %v146
  %v158 = vpack.c.bf16 %v148, %v148
  %v159 = vrot.slane %v18, 4
  %v161 = vsel %vm39, %v157, 0
  %vm163 = vcmask 1043456
  %v165 = vsel %vm163, %v159, 0
  %167 = vmatprep.subr.bf16.mxu0 0
  %168 = vmatpush1.bf16.msra.mxu0 0
  %169 = vmatprep.subr.bf16.mxu0 0
  %170 = vmatpush1.bf16.msra.mxu0 0
  %171 = vmatprep.subr.bf16.mxu0 0
  %172 = vmatpush1.bf16.msra.mxu0 0
  %173 = vmatprep.subr.bf16.mxu0 0
  %174 = vmatpush1.bf16.msra.mxu0 0
  %175 = vmatprep.subr.bf16.mxu0 0
  %176 = vmatpush1.bf16.msra.mxu0 0
  %177 = vmatprep.subr.bf16.mxu0 0
  %178 = vmatpush1.bf16.msra.mxu0 0
  %179 = vmatprep.subr.bf16.mxu0 0
  %180 = vmatpush1.bf16.msra.mxu0 0
  %181 = vmatprep.subr.bf16.mxu0 0
  %182 = vmatpush1.bf16.msra.mxu0 %v165
  %183 = vmatprep.subr.bf16.mxu0 0
  %184 = vmatpush2.bf16.msra.mxu0 0
  %185 = vmatprep.subr.bf16.mxu0 0
  %186 = vmatpush2.bf16.msra.mxu0 0
  %187 = vmatprep.subr.bf16.mxu0 0
  %188 = vmatpush2.bf16.msra.mxu0 0
  %189 = vmatprep.subr.bf16.mxu0 0
  %190 = vmatpush2.bf16.msra.mxu0 0
  %191 = vmatprep.subr.bf16.mxu0 0
  %192 = vmatpush2.bf16.msra.mxu0 0
  %193 = vmatprep.subr.bf16.mxu0 0
  %194 = vmatpush2.bf16.msra.mxu0 0
  %195 = vmatprep.subr.bf16.mxu0 0
  %196 = vmatpush2.bf16.msra.mxu0 0
  %197 = vmatprep.subr.bf16.mxu0 0
  %198 = vmatpush2.bf16.msra.mxu0 0
  %199 = vmatprep.mubr.bf16.mxu0 0
  %200 = vmatmul.mubr.bf16.gmra.mxu0 %v161
  %v201 = vpop.f32.mrf.mxu0
  %v202 = vadd.f32 0.0, %v201
  %v203 = vpop.f32.mrf.mxu0
  %v204 = vpop.f32.mrf.mxu0
  %v205 = vpop.f32.mrf.mxu0
  %206 = vdwg.mxu0
  %v207 = vrot.slane %v19, 4
  %v209 = vsel %vm39, %v158, 0
  %v212 = vsel %vm163, %v207, 0
  %214 = vmatprep.subr.bf16.mxu0 0
  %215 = vmatpush1.bf16.msra.mxu0 0
  %216 = vmatprep.subr.bf16.mxu0 0
  %217 = vmatpush1.bf16.msra.mxu0 0
  %218 = vmatprep.subr.bf16.mxu0 0
  %219 = vmatpush1.bf16.msra.mxu0 0
  %220 = vmatprep.subr.bf16.mxu0 0
  %221 = vmatpush1.bf16.msra.mxu0 0
  %222 = vmatprep.subr.bf16.mxu0 0
  %223 = vmatpush1.bf16.msra.mxu0 0
  %224 = vmatprep.subr.bf16.mxu0 0
  %225 = vmatpush1.bf16.msra.mxu0 0
  %226 = vmatprep.subr.bf16.mxu0 0
  %227 = vmatpush1.bf16.msra.mxu0 0
  %228 = vmatprep.subr.bf16.mxu0 0
  %229 = vmatpush1.bf16.msra.mxu0 %v212
  %230 = vmatprep.subr.bf16.mxu0 0
  %231 = vmatpush2.bf16.msra.mxu0 0
  %232 = vmatprep.subr.bf16.mxu0 0
  %233 = vmatpush2.bf16.msra.mxu0 0
  %234 = vmatprep.subr.bf16.mxu0 0
  %235 = vmatpush2.bf16.msra.mxu0 0
  %236 = vmatprep.subr.bf16.mxu0 0
  %237 = vmatpush2.bf16.msra.mxu0 0
  %238 = vmatprep.subr.bf16.mxu0 0
  %239 = vmatpush2.bf16.msra.mxu0 0
  %240 = vmatprep.subr.bf16.mxu0 0
  %241 = vmatpush2.bf16.msra.mxu0 0
  %242 = vmatprep.subr.bf16.mxu0 0
  %243 = vmatpush2.bf16.msra.mxu0 0
  %244 = vmatprep.subr.bf16.mxu0 0
  %245 = vmatpush2.bf16.msra.mxu0 0
  %246 = vmatprep.mubr.bf16.mxu0 0
  %247 = vmatmul.mubr.bf16.gmra.mxu0 %v209
  %v248 = vpop.f32.mrf.mxu0
  %v249 = vadd.f32 0.0, %v248
  %v250 = vpop.f32.mrf.mxu0
  %v251 = vpop.f32.mrf.mxu0
  %v252 = vpop.f32.mrf.mxu0
  %253 = vdwg.mxu0
  %v254 = vmul.f32 %v202, %v155
  %v255 = vmul.f32 %v249, %v156
  %256 = vst.msk [vmem:[#allocation2] sm:$0xff] %vm39, %v254
  %257 = vst.msk [vmem:[#allocation2 + $0x8] sm:$0xff] %vm39, %v255
  %258 = vrot.lane.b32.xlu0 %v36, 120
  %v259 = vpop.permute.xlu0 %258
  %260 = vrot.lane.b32.xlu0 %v36, 56
  %v261 = vpop.permute.xlu0 %260
  %v263 = vsel %vm39, %v259, 0
  %v266 = vsel %vm39, %v261, 0
  %268 = vmatprep.subr.bf16.mxu0 0
  %269 = vmatpush1.bf16.xpose.msra.mxu0 0
  %270 = vmatprep.subr.bf16.mxu0 0
  %271 = vmatpush1.bf16.xpose.msra.mxu0 0
  %272 = vmatprep.subr.bf16.mxu0 0
  %273 = vmatpush1.bf16.xpose.msra.mxu0 0
  %274 = vmatprep.subr.bf16.mxu0 0
  %275 = vmatpush1.bf16.xpose.msra.mxu0 0
  %276 = vmatprep.subr.bf16.mxu0 0
  %277 = vmatpush1.bf16.xpose.msra.mxu0 0
  %278 = vmatprep.subr.bf16.mxu0 0
  %279 = vmatpush1.bf16.xpose.msra.mxu0 0
  %280 = vmatprep.subr.bf16.mxu0 0
  %281 = vmatpush1.bf16.xpose.msra.mxu0 0
  %282 = vmatprep.subr.bf16.mxu0 0
  %283 = vmatpush1.bf16.xpose.msra.mxu0 %v266
  %284 = vmatprep.subr.bf16.mxu0 0
  %285 = vmatpush2.bf16.xpose.msra.mxu0 0
  %286 = vmatprep.subr.bf16.mxu0 0
  %287 = vmatpush2.bf16.xpose.msra.mxu0 0
  %288 = vmatprep.subr.bf16.mxu0 0
  %289 = vmatpush2.bf16.xpose.msra.mxu0 0
  %290 = vmatprep.subr.bf16.mxu0 0
  %291 = vmatpush2.bf16.xpose.msra.mxu0 0
  %292 = vmatprep.subr.bf16.mxu0 0
  %293 = vmatpush2.bf16.xpose.msra.mxu0 0
  %294 = vmatprep.subr.bf16.mxu0 0
  %295 = vmatpush2.bf16.xpose.msra.mxu0 0
  %296 = vmatprep.subr.bf16.mxu0 0
  %297 = vmatpush2.bf16.xpose.msra.mxu0 0
  %298 = vmatprep.subr.bf16.mxu0 0
  %299 = vmatpush2.bf16.xpose.msra.mxu0 0
  %300 = vmatprep.mubr.bf16.mxu0 0
  %301 = vmatmul.mubr.bf16.gmra.mxu0 %v263
  %v302 = vpop.f32.mrf.mxu0
  %v303 = vadd.f32 %v27, %v302
  %v304 = vpop.f32.mrf.mxu0
  %v305 = vpop.f32.mrf.mxu0
  %v306 = vpop.f32.mrf.mxu0
  %307 = vdwg.mxu0
  %308 = vrot.lane.b32.xlu0 %v88, 120
  %v309 = vpop.permute.xlu0 %308
  %310 = vrot.lane.b32.xlu0 %v88, 56
  %v311 = vpop.permute.xlu0 %310
  %v313 = vsel %vm39, %v309, 0
  %v316 = vsel %vm39, %v311, 0
  %318 = vmatprep.subr.bf16.mxu0 0
  %319 = vmatpush1.bf16.xpose.msra.mxu0 0
  %320 = vmatprep.subr.bf16.mxu0 0
  %321 = vmatpush1.bf16.xpose.msra.mxu0 0
  %322 = vmatprep.subr.bf16.mxu0 0
  %323 = vmatpush1.bf16.xpose.msra.mxu0 0
  %324 = vmatprep.subr.bf16.mxu0 0
  %325 = vmatpush1.bf16.xpose.msra.mxu0 0
  %326 = vmatprep.subr.bf16.mxu0 0
  %327 = vmatpush1.bf16.xpose.msra.mxu0 0
  %328 = vmatprep.subr.bf16.mxu0 0
  %329 = vmatpush1.bf16.xpose.msra.mxu0 0
  %330 = vmatprep.subr.bf16.mxu0 0
  %331 = vmatpush1.bf16.xpose.msra.mxu0 0
  %332 = vmatprep.subr.bf16.mxu0 0
  %333 = vmatpush1.bf16.xpose.msra.mxu0 %v316
  %334 = vmatprep.subr.bf16.mxu0 0
  %335 = vmatpush2.bf16.xpose.msra.mxu0 0
  %336 = vmatprep.subr.bf16.mxu0 0
  %337 = vmatpush2.bf16.xpose.msra.mxu0 0
  %338 = vmatprep.subr.bf16.mxu0 0
  %339 = vmatpush2.bf16.xpose.msra.mxu0 0
  %340 = vmatprep.subr.bf16.mxu0 0
  %341 = vmatpush2.bf16.xpose.msra.mxu0 0
  %342 = vmatprep.subr.bf16.mxu0 0
  %343 = vmatpush2.bf16.xpose.msra.mxu0 0
  %344 = vmatprep.subr.bf16.mxu0 0
  %345 = vmatpush2.bf16.xpose.msra.mxu0 0
  %346 = vmatprep.subr.bf16.mxu0 0
  %347 = vmatpush2.bf16.xpose.msra.mxu0 0
  %348 = vmatprep.subr.bf16.mxu0 0
  %349 = vmatpush2.bf16.xpose.msra.mxu0 0
  %350 = vmatprep.mubr.bf16.mxu0 0
  %351 = vmatmul.mubr.bf16.gmra.mxu0 %v313
  %v352 = vpop.f32.mrf.mxu0
  %v353 = vadd.f32 %v31, %v352
  %v354 = vpop.f32.mrf.mxu0
  %v355 = vpop.f32.mrf.mxu0
  %v356 = vpop.f32.mrf.mxu0
  %357 = vdwg.mxu0
  %v358 = vsel %vm39, %v303, -inf
  %359 = vmax.xlane.f32.xlu0 %v358
  %v360 = vpop.xlane.xlu0 %359
  %v361 = vsel %vm39, %v353, -inf
  %362 = vmax.xlane.f32.xlu0 %v361
  %v363 = vpop.xlane.xlu0 %362
  %v364 = vsub.f32 %v303, %v360
  %v365 = vsub.f32 %v353, %v363
  %v366 = vmul.f32 %v364, 1.442695
  %v367 = vpow.pop %v366
  %v368 = vmul.f32 %v365, 1.442695
  %v369 = vpow.pop %v368
  %v370 = vsel %vm39, %v367, 0.0
  %371 = vadd.xlane.f32.xlu0 %v370
  %v372 = vpop.xlane.xlu0 %371
  %v373 = vsel %vm39, %v369, 0.0
  %374 = vadd.xlane.f32.xlu0 %v373
  %v375 = vpop.xlane.xlu0 %374
  %v376 = vrcp.pop %v372
  %v377 = vrcp.pop %v375
  %v378 = vpack.c.bf16 %v367, %v367
  %v379 = vpack.c.bf16 %v369, %v369
  %380 = vrot.lane.b32.xlu0 %v18, 120
  %v381 = vpop.permute.xlu0 %380
  %v382 = vrot.slane %v381, 4
  %v384 = vsel %vm39, %v378, 0
  %v387 = vsel %vm163, %v382, 0
  %389 = vmatprep.subr.bf16.mxu0 0
  %390 = vmatpush1.bf16.msra.mxu0 0
  %391 = vmatprep.subr.bf16.mxu0 0
  %392 = vmatpush1.bf16.msra.mxu0 0
  %393 = vmatprep.subr.bf16.mxu0 0
  %394 = vmatpush1.bf16.msra.mxu0 0
  %395 = vmatprep.subr.bf16.mxu0 0
  %396 = vmatpush1.bf16.msra.mxu0 0
  %397 = vmatprep.subr.bf16.mxu0 0
  %398 = vmatpush1.bf16.msra.mxu0 0
  %399 = vmatprep.subr.bf16.mxu0 0
  %400 = vmatpush1.bf16.msra.mxu0 0
  %401 = vmatprep.subr.bf16.mxu0 0
  %402 = vmatpush1.bf16.msra.mxu0 0
  %403 = vmatprep.subr.bf16.mxu0 0
  %404 = vmatpush1.bf16.msra.mxu0 %v387
  %405 = vmatprep.subr.bf16.mxu0 0
  %406 = vmatpush2.bf16.msra.mxu0 0
  %407 = vmatprep.subr.bf16.mxu0 0
  %408 = vmatpush2.bf16.msra.mxu0 0
  %409 = vmatprep.subr.bf16.mxu0 0
  %410 = vmatpush2.bf16.msra.mxu0 0
  %411 = vmatprep.subr.bf16.mxu0 0
  %412 = vmatpush2.bf16.msra.mxu0 0
  %413 = vmatprep.subr.bf16.mxu0 0
  %414 = vmatpush2.bf16.msra.mxu0 0
  %415 = vmatprep.subr.bf16.mxu0 0
  %416 = vmatpush2.bf16.msra.mxu0 0
  %417 = vmatprep.subr.bf16.mxu0 0
  %418 = vmatpush2.bf16.msra.mxu0 0
  %419 = vmatprep.subr.bf16.mxu0 0
  %420 = vmatpush2.bf16.msra.mxu0 0
  %421 = vmatprep.mubr.bf16.mxu0 0
  %422 = vmatmul.mubr.bf16.gmra.mxu0 %v384
  %v423 = vpop.f32.mrf.mxu0
  %v424 = vadd.f32 0.0, %v423
  %v425 = vpop.f32.mrf.mxu0
  %v426 = vpop.f32.mrf.mxu0
  %v427 = vpop.f32.mrf.mxu0
  %428 = vdwg.mxu0
  %429 = vrot.lane.b32.xlu0 %v19, 120
  %v430 = vpop.permute.xlu0 %429
  %v431 = vrot.slane %v430, 4
  %v433 = vsel %vm39, %v379, 0
  %v436 = vsel %vm163, %v431, 0
  %438 = vmatprep.subr.bf16.mxu0 0
  %439 = vmatpush1.bf16.msra.mxu0 0
  %440 = vmatprep.subr.bf16.mxu0 0
  %441 = vmatpush1.bf16.msra.mxu0 0
  %442 = vmatprep.subr.bf16.mxu0 0
  %443 = vmatpush1.bf16.msra.mxu0 0
  %444 = vmatprep.subr.bf16.mxu0 0
  %445 = vmatpush1.bf16.msra.mxu0 0
  %446 = vmatprep.subr.bf16.mxu0 0
  %447 = vmatpush1.bf16.msra.mxu0 0
  %448 = vmatprep.subr.bf16.mxu0 0
  %449 = vmatpush1.bf16.msra.mxu0 0
  %450 = vmatprep.subr.bf16.mxu0 0
  %451 = vmatpush1.bf16.msra.mxu0 0
  %452 = vmatprep.subr.bf16.mxu0 0
  %453 = vmatpush1.bf16.msra.mxu0 %v436
  %454 = vmatprep.subr.bf16.mxu0 0
  %455 = vmatpush2.bf16.msra.mxu0 0
  %456 = vmatprep.subr.bf16.mxu0 0
  %457 = vmatpush2.bf16.msra.mxu0 0
  %458 = vmatprep.subr.bf16.mxu0 0
  %459 = vmatpush2.bf16.msra.mxu0 0
  %460 = vmatprep.subr.bf16.mxu0 0
  %461 = vmatpush2.bf16.msra.mxu0 0
  %462 = vmatprep.subr.bf16.mxu0 0
  %463 = vmatpush2.bf16.msra.mxu0 0
  %464 = vmatprep.subr.bf16.mxu0 0
  %465 = vmatpush2.bf16.msra.mxu0 0
  %466 = vmatprep.subr.bf16.mxu0 0
  %467 = vmatpush2.bf16.msra.mxu0 0
  %468 = vmatprep.subr.bf16.mxu0 0
  %469 = vmatpush2.bf16.msra.mxu0 0
  %470 = vmatprep.mubr.bf16.mxu0 0
  %471 = vmatmul.mubr.bf16.gmra.mxu0 %v433
  %v472 = vpop.f32.mrf.mxu0
  %v473 = vadd.f32 0.0, %v472
  %v474 = vpop.f32.mrf.mxu0
  %v475 = vpop.f32.mrf.mxu0
  %v476 = vpop.f32.mrf.mxu0
  %477 = vdwg.mxu0
  %v478 = vmul.f32 %v424, %v376
  %v479 = vmul.f32 %v473, %v377
  %482 = vrot.lane.b32.xlu0 %v478, 8
  %v483 = vpop.permute.xlu0 %482
  %484 = vrot.lane.b32.xlu0 %v479, 8
  %v485 = vpop.permute.xlu0 %484
  %vm488 = vcmask 130112
  %489 = vst.msk [vmem:[#allocation2] sm:$0xff] %vm488, %v483
  %490 = vst.msk [vmem:[#allocation2 + $0x8] sm:$0xff] %vm488, %v485
  %491 = vrot.lane.b32.xlu0 %v36, 112
  %v492 = vpop.permute.xlu0 %491
  %493 = vrot.lane.b32.xlu0 %v36, 48
  %v494 = vpop.permute.xlu0 %493
  %v496 = vsel %vm39, %v492, 0
  %v499 = vsel %vm39, %v494, 0
  %501 = vmatprep.subr.bf16.mxu0 0
  %502 = vmatpush1.bf16.xpose.msra.mxu0 0
  %503 = vmatprep.subr.bf16.mxu0 0
  %504 = vmatpush1.bf16.xpose.msra.mxu0 0
  %505 = vmatprep.subr.bf16.mxu0 0
  %506 = vmatpush1.bf16.xpose.msra.mxu0 0
  %507 = vmatprep.subr.bf16.mxu0 0
  %508 = vmatpush1.bf16.xpose.msra.mxu0 0
  %509 = vmatprep.subr.bf16.mxu0 0
  %510 = vmatpush1.bf16.xpose.msra.mxu0 0
  %511 = vmatprep.subr.bf16.mxu0 0
  %512 = vmatpush1.bf16.xpose.msra.mxu0 0
  %513 = vmatprep.subr.bf16.mxu0 0
  %514 = vmatpush1.bf16.xpose.msra.mxu0 0
  %515 = vmatprep.subr.bf16.mxu0 0
  %516 = vmatpush1.bf16.xpose.msra.mxu0 %v499
  %517 = vmatprep.subr.bf16.mxu0 0
  %518 = vmatpush2.bf16.xpose.msra.mxu0 0
  %519 = vmatprep.subr.bf16.mxu0 0
  %520 = vmatpush2.bf16.xpose.msra.mxu0 0
  %521 = vmatprep.subr.bf16.mxu0 0
  %522 = vmatpush2.bf16.xpose.msra.mxu0 0
  %523 = vmatprep.subr.bf16.mxu0 0
  %524 = vmatpush2.bf16.xpose.msra.mxu0 0
  %525 = vmatprep.subr.bf16.mxu0 0
  %526 = vmatpush2.bf16.xpose.msra.mxu0 0
  %527 = vmatprep.subr.bf16.mxu0 0
  %528 = vmatpush2.bf16.xpose.msra.mxu0 0
  %529 = vmatprep.subr.bf16.mxu0 0
  %530 = vmatpush2.bf16.xpose.msra.mxu0 0
  %531 = vmatprep.subr.bf16.mxu0 0
  %532 = vmatpush2.bf16.xpose.msra.mxu0 0
  %533 = vmatprep.mubr.bf16.mxu0 0
  %534 = vmatmul.mubr.bf16.gmra.mxu0 %v496
  %v535 = vpop.f32.mrf.mxu0
  %v536 = vadd.f32 %v27, %v535
  %v537 = vpop.f32.mrf.mxu0
  %v538 = vpop.f32.mrf.mxu0
  %v539 = vpop.f32.mrf.mxu0
  %540 = vdwg.mxu0
  %541 = vrot.lane.b32.xlu0 %v88, 112
  %v542 = vpop.permute.xlu0 %541
  %543 = vrot.lane.b32.xlu0 %v88, 48
  %v544 = vpop.permute.xlu0 %543
  %v546 = vsel %vm39, %v542, 0
  %v549 = vsel %vm39, %v544, 0
  %551 = vmatprep.subr.bf16.mxu0 0
  %552 = vmatpush1.bf16.xpose.msra.mxu0 0
  %553 = vmatprep.subr.bf16.mxu0 0
  %554 = vmatpush1.bf16.xpose.msra.mxu0 0
  %555 = vmatprep.subr.bf16.mxu0 0
  %556 = vmatpush1.bf16.xpose.msra.mxu0 0
  %557 = vmatprep.subr.bf16.mxu0 0
  %558 = vmatpush1.bf16.xpose.msra.mxu0 0
  %559 = vmatprep.subr.bf16.mxu0 0
  %560 = vmatpush1.bf16.xpose.msra.mxu0 0
  %561 = vmatprep.subr.bf16.mxu0 0
  %562 = vmatpush1.bf16.xpose.msra.mxu0 0
  %563 = vmatprep.subr.bf16.mxu0 0
  %564 = vmatpush1.bf16.xpose.msra.mxu0 0
  %565 = vmatprep.subr.bf16.mxu0 0
  %566 = vmatpush1.bf16.xpose.msra.mxu0 %v549
  %567 = vmatprep.subr.bf16.mxu0 0
  %568 = vmatpush2.bf16.xpose.msra.mxu0 0
  %569 = vmatprep.subr.bf16.mxu0 0
  %570 = vmatpush2.bf16.xpose.msra.mxu0 0
  %571 = vmatprep.subr.bf16.mxu0 0
  %572 = vmatpush2.bf16.xpose.msra.mxu0 0
  %573 = vmatprep.subr.bf16.mxu0 0
  %574 = vmatpush2.bf16.xpose.msra.mxu0 0
  %575 = vmatprep.subr.bf16.mxu0 0
  %576 = vmatpush2.bf16.xpose.msra.mxu0 0
  %577 = vmatprep.subr.bf16.mxu0 0
  %578 = vmatpush2.bf16.xpose.msra.mxu0 0
  %579 = vmatprep.subr.bf16.mxu0 0
  %580 = vmatpush2.bf16.xpose.msra.mxu0 0
  %581 = vmatprep.subr.bf16.mxu0 0
  %582 = vmatpush2.bf16.xpose.msra.mxu0 0
  %583 = vmatprep.mubr.bf16.mxu0 0
  %584 = vmatmul.mubr.bf16.gmra.mxu0 %v546
  %v585 = vpop.f32.mrf.mxu0
  %v586 = vadd.f32 %v31, %v585
  %v587 = vpop.f32.mrf.mxu0
  %v588 = vpop.f32.mrf.mxu0
  %v589 = vpop.f32.mrf.mxu0
  %590 = vdwg.mxu0
  %v591 = vsel %vm39, %v536, -inf
  %592 = vmax.xlane.f32.xlu0 %v591
  %v593 = vpop.xlane.xlu0 %592
  %v594 = vsel %vm39, %v586, -inf
  %595 = vmax.xlane.f32.xlu0 %v594
  %v596 = vpop.xlane.xlu0 %595
  %v597 = vsub.f32 %v536, %v593
  %v598 = vsub.f32 %v586, %v596
  %v599 = vmul.f32 %v597, 1.442695
  %v600 = vpow.pop %v599
  %v601 = vmul.f32 %v598, 1.442695
  %v602 = vpow.pop %v601
  %v603 = vsel %vm39, %v600, 0.0
  %604 = vadd.xlane.f32.xlu0 %v603
  %v605 = vpop.xlane.xlu0 %604
  %v606 = vsel %vm39, %v602, 0.0
  %607 = vadd.xlane.f32.xlu0 %v606
  %v608 = vpop.xlane.xlu0 %607
  %v609 = vrcp.pop %v605
  %v610 = vrcp.pop %v608
  %v611 = vpack.c.bf16 %v600, %v600
  %v612 = vpack.c.bf16 %v602, %v602
  %613 = vrot.lane.b32.xlu0 %v18, 112
  %v614 = vpop.permute.xlu0 %613
  %v615 = vrot.slane %v614, 4
  %v617 = vsel %vm39, %v611, 0
  %v620 = vsel %vm163, %v615, 0
  %622 = vmatprep.subr.bf16.mxu0 0
  %623 = vmatpush1.bf16.msra.mxu0 0
  %624 = vmatprep.subr.bf16.mxu0 0
  %625 = vmatpush1.bf16.msra.mxu0 0
  %626 = vmatprep.subr.bf16.mxu0 0
  %627 = vmatpush1.bf16.msra.mxu0 0
  %628 = vmatprep.subr.bf16.mxu0 0
  %629 = vmatpush1.bf16.msra.mxu0 0
  %630 = vmatprep.subr.bf16.mxu0 0
  %631 = vmatpush1.bf16.msra.mxu0 0
  %632 = vmatprep.subr.bf16.mxu0 0
  %633 = vmatpush1.bf16.msra.mxu0 0
  %634 = vmatprep.subr.bf16.mxu0 0
  %635 = vmatpush1.bf16.msra.mxu0 0
  %636 = vmatprep.subr.bf16.mxu0 0
  %637 = vmatpush1.bf16.msra.mxu0 %v620
  %638 = vmatprep.subr.bf16.mxu0 0
  %639 = vmatpush2.bf16.msra.mxu0 0
  %640 = vmatprep.subr.bf16.mxu0 0
  %641 = vmatpush2.bf16.msra.mxu0 0
  %642 = vmatprep.subr.bf16.mxu0 0
  %643 = vmatpush2.bf16.msra.mxu0 0
  %644 = vmatprep.subr.bf16.mxu0 0
  %645 = vmatpush2.bf16.msra.mxu0 0
  %646 = vmatprep.subr.bf16.mxu0 0
  %647 = vmatpush2.bf16.msra.mxu0 0
  %648 = vmatprep.subr.bf16.mxu0 0
  %649 = vmatpush2.bf16.msra.mxu0 0
  %650 = vmatprep.subr.bf16.mxu0 0
  %651 = vmatpush2.bf16.msra.mxu0 0
  %652 = vmatprep.subr.bf16.mxu0 0
  %653 = vmatpush2.bf16.msra.mxu0 0
  %654 = vmatprep.mubr.bf16.mxu0 0
  %655 = vmatmul.mubr.bf16.gmra.mxu0 %v617
  %v656 = vpop.f32.mrf.mxu0
  %v657 = vadd.f32 0.0, %v656
  %v658 = vpop.f32.mrf.mxu0
  %v659 = vpop.f32.mrf.mxu0
  %v660 = vpop.f32.mrf.mxu0
  %661 = vdwg.mxu0
  %662 = vrot.lane.b32.xlu0 %v19, 112
  %v663 = vpop.permute.xlu0 %662
  %v664 = vrot.slane %v663, 4
  %v666 = vsel %vm39, %v612, 0
  %v669 = vsel %vm163, %v664, 0
  %671 = vmatprep.subr.bf16.mxu0 0
  %672 = vmatpush1.bf16.msra.mxu0 0
  %673 = vmatprep.subr.bf16.mxu0 0
  %674 = vmatpush1.bf16.msra.mxu0 0
  %675 = vmatprep.subr.bf16.mxu0 0
  %676 = vmatpush1.bf16.msra.mxu0 0
  %677 = vmatprep.subr.bf16.mxu0 0
  %678 = vmatpush1.bf16.msra.mxu0 0
  %679 = vmatprep.subr.bf16.mxu0 0
  %680 = vmatpush1.bf16.msra.mxu0 0
  %681 = vmatprep.subr.bf16.mxu0 0
  %682 = vmatpush1.bf16.msra.mxu0 0
  %683 = vmatprep.subr.bf16.mxu0 0
  %684 = vmatpush1.bf16.msra.mxu0 0
  %685 = vmatprep.subr.bf16.mxu0 0
  %686 = vmatpush1.bf16.msra.mxu0 %v669
  %687 = vmatprep.subr.bf16.mxu0 0
  %688 = vmatpush2.bf16.msra.mxu0 0
  %689 = vmatprep.subr.bf16.mxu0 0
  %690 = vmatpush2.bf16.msra.mxu0 0
  %691 = vmatprep.subr.bf16.mxu0 0
  %692 = vmatpush2.bf16.msra.mxu0 0
  %693 = vmatprep.subr.bf16.mxu0 0
  %694 = vmatpush2.bf16.msra.mxu0 0
  %695 = vmatprep.subr.bf16.mxu0 0
  %696 = vmatpush2.bf16.msra.mxu0 0
  %697 = vmatprep.subr.bf16.mxu0 0
  %698 = vmatpush2.bf16.msra.mxu0 0
  %699 = vmatprep.subr.bf16.mxu0 0
  %700 = vmatpush2.bf16.msra.mxu0 0
  %701 = vmatprep.subr.bf16.mxu0 0
  %702 = vmatpush2.bf16.msra.mxu0 0
  %703 = vmatprep.mubr.bf16.mxu0 0
  %704 = vmatmul.mubr.bf16.gmra.mxu0 %v666
  %v705 = vpop.f32.mrf.mxu0
  %v706 = vadd.f32 0.0, %v705
  %v707 = vpop.f32.mrf.mxu0
  %v708 = vpop.f32.mrf.mxu0
  %v709 = vpop.f32.mrf.mxu0
  %710 = vdwg.mxu0
  %v711 = vmul.f32 %v657, %v609
  %v712 = vmul.f32 %v706, %v610
  %715 = vrot.lane.b32.xlu0 %v711, 16
  %v716 = vpop.permute.xlu0 %715
  %717 = vrot.lane.b32.xlu0 %v712, 16
  %v718 = vpop.permute.xlu0 %717
  %vm721 = vcmask 195712
  %722 = vst.msk [vmem:[#allocation2] sm:$0xff] %vm721, %v716
  %723 = vst.msk [vmem:[#allocation2 + $0x8] sm:$0xff] %vm721, %v718
  %724 = vrot.lane.b32.xlu0 %v36, 104
  %v725 = vpop.permute.xlu0 %724
  %726 = vrot.lane.b32.xlu0 %v36, 40
  %v727 = vpop.permute.xlu0 %726
  %v729 = vsel %vm39, %v725, 0
  %v732 = vsel %vm39, %v727, 0
  %734 = vmatprep.subr.bf16.mxu0 0
  %735 = vmatpush1.bf16.xpose.msra.mxu0 0
  %736 = vmatprep.subr.bf16.mxu0 0
  %737 = vmatpush1.bf16.xpose.msra.mxu0 0
  %738 = vmatprep.subr.bf16.mxu0 0
  %739 = vmatpush1.bf16.xpose.msra.mxu0 0
  %740 = vmatprep.subr.bf16.mxu0 0
  %741 = vmatpush1.bf16.xpose.msra.mxu0 0
  %742 = vmatprep.subr.bf16.mxu0 0
  %743 = vmatpush1.bf16.xpose.msra.mxu0 0
  %744 = vmatprep.subr.bf16.mxu0 0
  %745 = vmatpush1.bf16.xpose.msra.mxu0 0
  %746 = vmatprep.subr.bf16.mxu0 0
  %747 = vmatpush1.bf16.xpose.msra.mxu0 0
  %748 = vmatprep.subr.bf16.mxu0 0
  %749 = vmatpush1.bf16.xpose.msra.mxu0 %v732
  %750 = vmatprep.subr.bf16.mxu0 0
  %751 = vmatpush2.bf16.xpose.msra.mxu0 0
  %752 = vmatprep.subr.bf16.mxu0 0
  %753 = vmatpush2.bf16.xpose.msra.mxu0 0
  %754 = vmatprep.subr.bf16.mxu0 0
  %755 = vmatpush2.bf16.xpose.msra.mxu0 0
  %756 = vmatprep.subr.bf16.mxu0 0
  %757 = vmatpush2.bf16.xpose.msra.mxu0 0
  %758 = vmatprep.subr.bf16.mxu0 0
  %759 = vmatpush2.bf16.xpose.msra.mxu0 0
  %760 = vmatprep.subr.bf16.mxu0 0
  %761 = vmatpush2.bf16.xpose.msra.mxu0 0
  %762 = vmatprep.subr.bf16.mxu0 0
  %763 = vmatpush2.bf16.xpose.msra.mxu0 0
  %764 = vmatprep.subr.bf16.mxu0 0
  %765 = vmatpush2.bf16.xpose.msra.mxu0 0
  %766 = vmatprep.mubr.bf16.mxu0 0
  %767 = vmatmul.mubr.bf16.gmra.mxu0 %v729
  %v768 = vpop.f32.mrf.mxu0
  %v769 = vadd.f32 %v27, %v768
  %v770 = vpop.f32.mrf.mxu0
  %v771 = vpop.f32.mrf.mxu0
  %v772 = vpop.f32.mrf.mxu0
  %773 = vdwg.mxu0
  %774 = vrot.lane.b32.xlu0 %v88, 104
  %v775 = vpop.permute.xlu0 %774
  %776 = vrot.lane.b32.xlu0 %v88, 40
  %v777 = vpop.permute.xlu0 %776
  %v779 = vsel %vm39, %v775, 0
  %v782 = vsel %vm39, %v777, 0
  %784 = vmatprep.subr.bf16.mxu0 0
  %785 = vmatpush1.bf16.xpose.msra.mxu0 0
  %786 = vmatprep.subr.bf16.mxu0 0
  %787 = vmatpush1.bf16.xpose.msra.mxu0 0
  %788 = vmatprep.subr.bf16.mxu0 0
  %789 = vmatpush1.bf16.xpose.msra.mxu0 0
  %790 = vmatprep.subr.bf16.mxu0 0
  %791 = vmatpush1.bf16.xpose.msra.mxu0 0
  %792 = vmatprep.subr.bf16.mxu0 0
  %793 = vmatpush1.bf16.xpose.msra.mxu0 0
  %794 = vmatprep.subr.bf16.mxu0 0
  %795 = vmatpush1.bf16.xpose.msra.mxu0 0
  %796 = vmatprep.subr.bf16.mxu0 0
  %797 = vmatpush1.bf16.xpose.msra.mxu0 0
  %798 = vmatprep.subr.bf16.mxu0 0
  %799 = vmatpush1.bf16.xpose.msra.mxu0 %v782
  %800 = vmatprep.subr.bf16.mxu0 0
  %801 = vmatpush2.bf16.xpose.msra.mxu0 0
  %802 = vmatprep.subr.bf16.mxu0 0
  %803 = vmatpush2.bf16.xpose.msra.mxu0 0
  %804 = vmatprep.subr.bf16.mxu0 0
  %805 = vmatpush2.bf16.xpose.msra.mxu0 0
  %806 = vmatprep.subr.bf16.mxu0 0
  %807 = vmatpush2.bf16.xpose.msra.mxu0 0
  %808 = vmatprep.subr.bf16.mxu0 0
  %809 = vmatpush2.bf16.xpose.msra.mxu0 0
  %810 = vmatprep.subr.bf16.mxu0 0
  %811 = vmatpush2.bf16.xpose.msra.mxu0 0
  %812 = vmatprep.subr.bf16.mxu0 0
  %813 = vmatpush2.bf16.xpose.msra.mxu0 0
  %814 = vmatprep.subr.bf16.mxu0 0
  %815 = vmatpush2.bf16.xpose.msra.mxu0 0
  %816 = vmatprep.mubr.bf16.mxu0 0
  %817 = vmatmul.mubr.bf16.gmra.mxu0 %v779
  %v818 = vpop.f32.mrf.mxu0
  %v819 = vadd.f32 %v31, %v818
  %v820 = vpop.f32.mrf.mxu0
  %v821 = vpop.f32.mrf.mxu0
  %v822 = vpop.f32.mrf.mxu0
  %823 = vdwg.mxu0
  %v824 = vsel %vm39, %v769, -inf
  %825 = vmax.xlane.f32.xlu0 %v824
  %v826 = vpop.xlane.xlu0 %825
  %v827 = vsel %vm39, %v819, -inf
  %828 = vmax.xlane.f32.xlu0 %v827
  %v829 = vpop.xlane.xlu0 %828
  %v830 = vsub.f32 %v769, %v826
  %v831 = vsub.f32 %v819, %v829
  %v832 = vmul.f32 %v830, 1.442695
  %v833 = vpow.pop %v832
  %v834 = vmul.f32 %v831, 1.442695
  %v835 = vpow.pop %v834
  %v836 = vsel %vm39, %v833, 0.0
  %837 = vadd.xlane.f32.xlu0 %v836
  %v838 = vpop.xlane.xlu0 %837
  %v839 = vsel %vm39, %v835, 0.0
  %840 = vadd.xlane.f32.xlu0 %v839
  %v841 = vpop.xlane.xlu0 %840
  %v842 = vrcp.pop %v838
  %v843 = vrcp.pop %v841
  %v844 = vpack.c.bf16 %v833, %v833
  %v845 = vpack.c.bf16 %v835, %v835
  %846 = vrot.lane.b32.xlu0 %v18, 104
  %v847 = vpop.permute.xlu0 %846
  %v848 = vrot.slane %v847, 4
  %v850 = vsel %vm39, %v844, 0
  %v853 = vsel %vm163, %v848, 0
  %855 = vmatprep.subr.bf16.mxu0 0
  %856 = vmatpush1.bf16.msra.mxu0 0
  %857 = vmatprep.subr.bf16.mxu0 0
  %858 = vmatpush1.bf16.msra.mxu0 0
  %859 = vmatprep.subr.bf16.mxu0 0
  %860 = vmatpush1.bf16.msra.mxu0 0
  %861 = vmatprep.subr.bf16.mxu0 0
  %862 = vmatpush1.bf16.msra.mxu0 0
  %863 = vmatprep.subr.bf16.mxu0 0
  %864 = vmatpush1.bf16.msra.mxu0 0
  %865 = vmatprep.subr.bf16.mxu0 0
  %866 = vmatpush1.bf16.msra.mxu0 0
  %867 = vmatprep.subr.bf16.mxu0 0
  %868 = vmatpush1.bf16.msra.mxu0 0
  %869 = vmatprep.subr.bf16.mxu0 0
  %870 = vmatpush1.bf16.msra.mxu0 %v853
  %871 = vmatprep.subr.bf16.mxu0 0
  %872 = vmatpush2.bf16.msra.mxu0 0
  %873 = vmatprep.subr.bf16.mxu0 0
  %874 = vmatpush2.bf16.msra.mxu0 0
  %875 = vmatprep.subr.bf16.mxu0 0
  %876 = vmatpush2.bf16.msra.mxu0 0
  %877 = vmatprep.subr.bf16.mxu0 0
  %878 = vmatpush2.bf16.msra.mxu0 0
  %879 = vmatprep.subr.bf16.mxu0 0
  %880 = vmatpush2.bf16.msra.mxu0 0
  %881 = vmatprep.subr.bf16.mxu0 0
  %882 = vmatpush2.bf16.msra.mxu0 0
  %883 = vmatprep.subr.bf16.mxu0 0
  %884 = vmatpush2.bf16.msra.mxu0 0
  %885 = vmatprep.subr.bf16.mxu0 0
  %886 = vmatpush2.bf16.msra.mxu0 0
  %887 = vmatprep.mubr.bf16.mxu0 0
  %888 = vmatmul.mubr.bf16.gmra.mxu0 %v850
  %v889 = vpop.f32.mrf.mxu0
  %v890 = vadd.f32 0.0, %v889
  %v891 = vpop.f32.mrf.mxu0
  %v892 = vpop.f32.mrf.mxu0
  %v893 = vpop.f32.mrf.mxu0
  %894 = vdwg.mxu0
  %895 = vrot.lane.b32.xlu0 %v19, 104
  %v896 = vpop.permute.xlu0 %895
  %v897 = vrot.slane %v896, 4
  %v899 = vsel %vm39, %v845, 0
  %v902 = vsel %vm163, %v897, 0
  %904 = vmatprep.subr.bf16.mxu0 0
  %905 = vmatpush1.bf16.msra.mxu0 0
  %906 = vmatprep.subr.bf16.mxu0 0
  %907 = vmatpush1.bf16.msra.mxu0 0
  %908 = vmatprep.subr.bf16.mxu0 0
  %909 = vmatpush1.bf16.msra.mxu0 0
  %910 = vmatprep.subr.bf16.mxu0 0
  %911 = vmatpush1.bf16.msra.mxu0 0
  %912 = vmatprep.subr.bf16.mxu0 0
  %913 = vmatpush1.bf16.msra.mxu0 0
  %914 = vmatprep.subr.bf16.mxu0 0
  %915 = vmatpush1.bf16.msra.mxu0 0
  %916 = vmatprep.subr.bf16.mxu0 0
  %917 = vmatpush1.bf16.msra.mxu0 0
  %918 = vmatprep.subr.bf16.mxu0 0
  %919 = vmatpush1.bf16.msra.mxu0 %v902
  %920 = vmatprep.subr.bf16.mxu0 0
  %921 = vmatpush2.bf16.msra.mxu0 0
  %922 = vmatprep.subr.bf16.mxu0 0
  %923 = vmatpush2.bf16.msra.mxu0 0
  %924 = vmatprep.subr.bf16.mxu0 0
  %925 = vmatpush2.bf16.msra.mxu0 0
  %926 = vmatprep.subr.bf16.mxu0 0
  %927 = vmatpush2.bf16.msra.mxu0 0
  %928 = vmatprep.subr.bf16.mxu0 0
  %929 = vmatpush2.bf16.msra.mxu0 0
  %930 = vmatprep.subr.bf16.mxu0 0
  %931 = vmatpush2.bf16.msra.mxu0 0
  %932 = vmatprep.subr.bf16.mxu0 0
  %933 = vmatpush2.bf16.msra.mxu0 0
  %934 = vmatprep.subr.bf16.mxu0 0
  %935 = vmatpush2.bf16.msra.mxu0 0
  %936 = vmatprep.mubr.bf16.mxu0 0
  %937 = vmatmul.mubr.bf16.gmra.mxu0 %v899
  %v938 = vpop.f32.mrf.mxu0
  %v939 = vadd.f32 0.0, %v938
  %v940 = vpop.f32.mrf.mxu0
  %v941 = vpop.f32.mrf.mxu0
  %v942 = vpop.f32.mrf.mxu0
  %943 = vdwg.mxu0
  %v944 = vmul.f32 %v890, %v842
  %v945 = vmul.f32 %v939, %v843
  %948 = vrot.lane.b32.xlu0 %v944, 24
  %v949 = vpop.permute.xlu0 %948
  %950 = vrot.lane.b32.xlu0 %v945, 24
  %v951 = vpop.permute.xlu0 %950
  %vm954 = vcmask 261312
  %955 = vst.msk [vmem:[#allocation2] sm:$0xff] %vm954, %v949
  %956 = vst.msk [vmem:[#allocation2 + $0x8] sm:$0xff] %vm954, %v951
  %957 = vrot.lane.b32.xlu0 %v36, 96
  %v958 = vpop.permute.xlu0 %957
  %959 = vrot.lane.b32.xlu0 %v36, 32
  %v960 = vpop.permute.xlu0 %959
  %v962 = vsel %vm39, %v958, 0
  %v965 = vsel %vm39, %v960, 0
  %967 = vmatprep.subr.bf16.mxu0 0
  %968 = vmatpush1.bf16.xpose.msra.mxu0 0
  %969 = vmatprep.subr.bf16.mxu0 0
  %970 = vmatpush1.bf16.xpose.msra.mxu0 0
  %971 = vmatprep.subr.bf16.mxu0 0
  %972 = vmatpush1.bf16.xpose.msra.mxu0 0
  %973 = vmatprep.subr.bf16.mxu0 0
  %974 = vmatpush1.bf16.xpose.msra.mxu0 0
  %975 = vmatprep.subr.bf16.mxu0 0
  %976 = vmatpush1.bf16.xpose.msra.mxu0 0
  %977 = vmatprep.subr.bf16.mxu0 0
  %978 = vmatpush1.bf16.xpose.msra.mxu0 0
  %979 = vmatprep.subr.bf16.mxu0 0
  %980 = vmatpush1.bf16.xpose.msra.mxu0 0
  %981 = vmatprep.subr.bf16.mxu0 0
  %982 = vmatpush1.bf16.xpose.msra.mxu0 %v965
  %983 = vmatprep.subr.bf16.mxu0 0
  %984 = vmatpush2.bf16.xpose.msra.mxu0 0
  %985 = vmatprep.subr.bf16.mxu0 0
  %986 = vmatpush2.bf16.xpose.msra.mxu0 0
  %987 = vmatprep.subr.bf16.mxu0 0
  %988 = vmatpush2.bf16.xpose.msra.mxu0 0
  %989 = vmatprep.subr.bf16.mxu0 0
  %990 = vmatpush2.bf16.xpose.msra.mxu0 0
  %991 = vmatprep.subr.bf16.mxu0 0
  %992 = vmatpush2.bf16.xpose.msra.mxu0 0
  %993 = vmatprep.subr.bf16.mxu0 0
  %994 = vmatpush2.bf16.xpose.msra.mxu0 0
  %995 = vmatprep.subr.bf16.mxu0 0
  %996 = vmatpush2.bf16.xpose.msra.mxu0 0
  %997 = vmatprep.subr.bf16.mxu0 0
  %998 = vmatpush2.bf16.xpose.msra.mxu0 0
  %999 = vmatprep.mubr.bf16.mxu0 0
  %1000 = vmatmul.mubr.bf16.gmra.mxu0 %v962
  %v1001 = vpop.f32.mrf.mxu0
  %v1002 = vadd.f32 %v27, %v1001
  %v1003 = vpop.f32.mrf.mxu0
  %v1004 = vpop.f32.mrf.mxu0
  %v1005 = vpop.f32.mrf.mxu0
  %1006 = vdwg.mxu0
  %1007 = vrot.lane.b32.xlu0 %v88, 96
  %v1008 = vpop.permute.xlu0 %1007
  %1009 = vrot.lane.b32.xlu0 %v88, 32
  %v1010 = vpop.permute.xlu0 %1009
  %v1012 = vsel %vm39, %v1008, 0
  %v1015 = vsel %vm39, %v1010, 0
  %1017 = vmatprep.subr.bf16.mxu0 0
  %1018 = vmatpush1.bf16.xpose.msra.mxu0 0
  %1019 = vmatprep.subr.bf16.mxu0 0
  %1020 = vmatpush1.bf16.xpose.msra.mxu0 0
  %1021 = vmatprep.subr.bf16.mxu0 0
  %1022 = vmatpush1.bf16.xpose.msra.mxu0 0
  %1023 = vmatprep.subr.bf16.mxu0 0
  %1024 = vmatpush1.bf16.xpose.msra.mxu0 0
  %1025 = vmatprep.subr.bf16.mxu0 0
  %1026 = vmatpush1.bf16.xpose.msra.mxu0 0
  %1027 = vmatprep.subr.bf16.mxu0 0
  %1028 = vmatpush1.bf16.xpose.msra.mxu0 0
  %1029 = vmatprep.subr.bf16.mxu0 0
  %1030 = vmatpush1.bf16.xpose.msra.mxu0 0
  %1031 = vmatprep.subr.bf16.mxu0 0
  %1032 = vmatpush1.bf16.xpose.msra.mxu0 %v1015
  %1033 = vmatprep.subr.bf16.mxu0 0
  %1034 = vmatpush2.bf16.xpose.msra.mxu0 0
  %1035 = vmatprep.subr.bf16.mxu0 0
  %1036 = vmatpush2.bf16.xpose.msra.mxu0 0
  %1037 = vmatprep.subr.bf16.mxu0 0
  %1038 = vmatpush2.bf16.xpose.msra.mxu0 0
  %1039 = vmatprep.subr.bf16.mxu0 0
  %1040 = vmatpush2.bf16.xpose.msra.mxu0 0
  %1041 = vmatprep.subr.bf16.mxu0 0
  %1042 = vmatpush2.bf16.xpose.msra.mxu0 0
  %1043 = vmatprep.subr.bf16.mxu0 0
  %1044 = vmatpush2.bf16.xpose.msra.mxu0 0
  %1045 = vmatprep.subr.bf16.mxu0 0
  %1046 = vmatpush2.bf16.xpose.msra.mxu0 0
  %1047 = vmatprep.subr.bf16.mxu0 0
  %1048 = vmatpush2.bf16.xpose.msra.mxu0 0
  %1049 = vmatprep.mubr.bf16.mxu0 0
  %1050 = vmatmul.mubr.bf16.gmra.mxu0 %v1012
  %v1051 = vpop.f32.mrf.mxu0
  %v1052 = vadd.f32 %v31, %v1051
  %v1053 = vpop.f32.mrf.mxu0
  %v1054 = vpop.f32.mrf.mxu0
  %v1055 = vpop.f32.mrf.mxu0
  %1056 = vdwg.mxu0
  %v1057 = vsel %vm39, %v1002, -inf
  %1058 = vmax.xlane.f32.xlu0 %v1057
  %v1059 = vpop.xlane.xlu0 %1058
  %v1060 = vsel %vm39, %v1052, -inf
  %1061 = vmax.xlane.f32.xlu0 %v1060
  %v1062 = vpop.xlane.xlu0 %1061
  %v1063 = vsub.f32 %v1002, %v1059
  %v1064 = vsub.f32 %v1052, %v1062
  %v1065 = vmul.f32 %v1063, 1.442695
  %v1066 = vpow.pop %v1065
  %v1067 = vmul.f32 %v1064, 1.442695
  %v1068 = vpow.pop %v1067
  %v1069 = vsel %vm39, %v1066, 0.0
  %1070 = vadd.xlane.f32.xlu0 %v1069
  %v1071 = vpop.xlane.xlu0 %1070
  %v1072 = vsel %vm39, %v1068, 0.0
  %1073 = vadd.xlane.f32.xlu0 %v1072
  %v1074 = vpop.xlane.xlu0 %1073
  %v1075 = vrcp.pop %v1071
  %v1076 = vrcp.pop %v1074
  %v1077 = vpack.c.bf16 %v1066, %v1066
  %v1078 = vpack.c.bf16 %v1068, %v1068
  %1079 = vrot.lane.b32.xlu0 %v18, 96
  %v1080 = vpop.permute.xlu0 %1079
  %v1081 = vrot.slane %v1080, 4
  %v1083 = vsel %vm39, %v1077, 0
  %v1086 = vsel %vm163, %v1081, 0
  %1088 = vmatprep.subr.bf16.mxu0 0
  %1089 = vmatpush1.bf16.msra.mxu0 0
  %1090 = vmatprep.subr.bf16.mxu0 0
  %1091 = vmatpush1.bf16.msra.mxu0 0
  %1092 = vmatprep.subr.bf16.mxu0 0
  %1093 = vmatpush1.bf16.msra.mxu0 0
  %1094 = vmatprep.subr.bf16.mxu0 0
  %1095 = vmatpush1.bf16.msra.mxu0 0
  %1096 = vmatprep.subr.bf16.mxu0 0
  %1097 = vmatpush1.bf16.msra.mxu0 0
  %1098 = vmatprep.subr.bf16.mxu0 0
  %1099 = vmatpush1.bf16.msra.mxu0 0
  %1100 = vmatprep.subr.bf16.mxu0 0
  %1101 = vmatpush1.bf16.msra.mxu0 0
  %1102 = vmatprep.subr.bf16.mxu0 0
  %1103 = vmatpush1.bf16.msra.mxu0 %v1086
  %1104 = vmatprep.subr.bf16.mxu0 0
  %1105 = vmatpush2.bf16.msra.mxu0 0
  %1106 = vmatprep.subr.bf16.mxu0 0
  %1107 = vmatpush2.bf16.msra.mxu0 0
  %1108 = vmatprep.subr.bf16.mxu0 0
  %1109 = vmatpush2.bf16.msra.mxu0 0
  %1110 = vmatprep.subr.bf16.mxu0 0
  %1111 = vmatpush2.bf16.msra.mxu0 0
  %1112 = vmatprep.subr.bf16.mxu0 0
  %1113 = vmatpush2.bf16.msra.mxu0 0
  %1114 = vmatprep.subr.bf16.mxu0 0
  %1115 = vmatpush2.bf16.msra.mxu0 0
  %1116 = vmatprep.subr.bf16.mxu0 0
  %1117 = vmatpush2.bf16.msra.mxu0 0
  %1118 = vmatprep.subr.bf16.mxu0 0
  %1119 = vmatpush2.bf16.msra.mxu0 0
  %1120 = vmatprep.mubr.bf16.mxu0 0
  %1121 = vmatmul.mubr.bf16.gmra.mxu0 %v1083
  %v1122 = vpop.f32.mrf.mxu0
  %v1123 = vadd.f32 0.0, %v1122
  %v1124 = vpop.f32.mrf.mxu0
  %v1125 = vpop.f32.mrf.mxu0
  %v1126 = vpop.f32.mrf.mxu0
  %1127 = vdwg.mxu0
  %1128 = vrot.lane.b32.xlu0 %v19, 96
  %v1129 = vpop.permute.xlu0 %1128
  %v1130 = vrot.slane %v1129, 4
  %v1132 = vsel %vm39, %v1078, 0
  %v1135 = vsel %vm163, %v1130, 0
  %1137 = vmatprep.subr.bf16.mxu0 0
  %1138 = vmatpush1.bf16.msra.mxu0 0
  %1139 = vmatprep.subr.bf16.mxu0 0
  %1140 = vmatpush1.bf16.msra.mxu0 0
  %1141 = vmatprep.subr.bf16.mxu0 0
  %1142 = vmatpush1.bf16.msra.mxu0 0
  %1143 = vmatprep.subr.bf16.mxu0 0
  %1144 = vmatpush1.bf16.msra.mxu0 0
  %1145 = vmatprep.subr.bf16.mxu0 0
  %1146 = vmatpush1.bf16.msra.mxu0 0
  %1147 = vmatprep.subr.bf16.mxu0 0
  %1148 = vmatpush1.bf16.msra.mxu0 0
  %1149 = vmatprep.subr.bf16.mxu0 0
  %1150 = vmatpush1.bf16.msra.mxu0 0
  %1151 = vmatprep.subr.bf16.mxu0 0
  %1152 = vmatpush1.bf16.msra.mxu0 %v1135
  %1153 = vmatprep.subr.bf16.mxu0 0
  %1154 = vmatpush2.bf16.msra.mxu0 0
  %1155 = vmatprep.subr.bf16.mxu0 0
  %1156 = vmatpush2.bf16.msra.mxu0 0
  %1157 = vmatprep.subr.bf16.mxu0 0
  %1158 = vmatpush2.bf16.msra.mxu0 0
  %1159 = vmatprep.subr.bf16.mxu0 0
  %1160 = vmatpush2.bf16.msra.mxu0 0
  %1161 = vmatprep.subr.bf16.mxu0 0
  %1162 = vmatpush2.bf16.msra.mxu0 0
  %1163 = vmatprep.subr.bf16.mxu0 0
  %1164 = vmatpush2.bf16.msra.mxu0 0
  %1165 = vmatprep.subr.bf16.mxu0 0
  %1166 = vmatpush2.bf16.msra.mxu0 0
  %1167 = vmatprep.subr.bf16.mxu0 0
  %1168 = vmatpush2.bf16.msra.mxu0 0
  %1169 = vmatprep.mubr.bf16.mxu0 0
  %1170 = vmatmul.mubr.bf16.gmra.mxu0 %v1132
  %v1171 = vpop.f32.mrf.mxu0
  %v1172 = vadd.f32 0.0, %v1171
  %v1173 = vpop.f32.mrf.mxu0
  %v1174 = vpop.f32.mrf.mxu0
  %v1175 = vpop.f32.mrf.mxu0
  %1176 = vdwg.mxu0
  %v1177 = vmul.f32 %v1123, %v1075
  %v1178 = vmul.f32 %v1172, %v1076
  %1181 = vrot.lane.b32.xlu0 %v1177, 32
  %v1182 = vpop.permute.xlu0 %1181
  %1183 = vrot.lane.b32.xlu0 %v1178, 32
  %v1184 = vpop.permute.xlu0 %1183
  %vm1187 = vcmask 326912
  %1188 = vst.msk [vmem:[#allocation2] sm:$0xff] %vm1187, %v1182
  %1189 = vst.msk [vmem:[#allocation2 + $0x8] sm:$0xff] %vm1187, %v1184
  %1190 = vrot.lane.b32.xlu0 %v36, 88
  %v1191 = vpop.permute.xlu0 %1190
  %1192 = vrot.lane.b32.xlu0 %v36, 24
  %v1193 = vpop.permute.xlu0 %1192
  %v1195 = vsel %vm39, %v1191, 0
  %v1198 = vsel %vm39, %v1193, 0
  %1200 = vmatprep.subr.bf16.mxu0 0
  %1201 = vmatpush1.bf16.xpose.msra.mxu0 0
  %1202 = vmatprep.subr.bf16.mxu0 0
  %1203 = vmatpush1.bf16.xpose.msra.mxu0 0
  %1204 = vmatprep.subr.bf16.mxu0 0
  %1205 = vmatpush1.bf16.xpose.msra.mxu0 0
  %1206 = vmatprep.subr.bf16.mxu0 0
  %1207 = vmatpush1.bf16.xpose.msra.mxu0 0
  %1208 = vmatprep.subr.bf16.mxu0 0
  %1209 = vmatpush1.bf16.xpose.msra.mxu0 0
  %1210 = vmatprep.subr.bf16.mxu0 0
  %1211 = vmatpush1.bf16.xpose.msra.mxu0 0
  %1212 = vmatprep.subr.bf16.mxu0 0
  %1213 = vmatpush1.bf16.xpose.msra.mxu0 0
  %1214 = vmatprep.subr.bf16.mxu0 0
  %1215 = vmatpush1.bf16.xpose.msra.mxu0 %v1198
  %1216 = vmatprep.subr.bf16.mxu0 0
  %1217 = vmatpush2.bf16.xpose.msra.mxu0 0
  %1218 = vmatprep.subr.bf16.mxu0 0
  %1219 = vmatpush2.bf16.xpose.msra.mxu0 0
  %1220 = vmatprep.subr.bf16.mxu0 0
  %1221 = vmatpush2.bf16.xpose.msra.mxu0 0
  %1222 = vmatprep.subr.bf16.mxu0 0
  %1223 = vmatpush2.bf16.xpose.msra.mxu0 0
  %1224 = vmatprep.subr.bf16.mxu0 0
  %1225 = vmatpush2.bf16.xpose.msra.mxu0 0
  %1226 = vmatprep.subr.bf16.mxu0 0
  %1227 = vmatpush2.bf16.xpose.msra.mxu0 0
  %1228 = vmatprep.subr.bf16.mxu0 0
  %1229 = vmatpush2.bf16.xpose.msra.mxu0 0
  %1230 = vmatprep.subr.bf16.mxu0 0
  %1231 = vmatpush2.bf16.xpose.msra.mxu0 0
  %1232 = vmatprep.mubr.bf16.mxu0 0
  %1233 = vmatmul.mubr.bf16.gmra.mxu0 %v1195
  %v1234 = vpop.f32.mrf.mxu0
  %v1235 = vadd.f32 %v27, %v1234
  %v1236 = vpop.f32.mrf.mxu0
  %v1237 = vpop.f32.mrf.mxu0
  %v1238 = vpop.f32.mrf.mxu0
  %1239 = vdwg.mxu0
  %1240 = vrot.lane.b32.xlu0 %v88, 88
  %v1241 = vpop.permute.xlu0 %1240
  %1242 = vrot.lane.b32.xlu0 %v88, 24
  %v1243 = vpop.permute.xlu0 %1242
  %v1245 = vsel %vm39, %v1241, 0
  %v1248 = vsel %vm39, %v1243, 0
  %1250 = vmatprep.subr.bf16.mxu0 0
  %1251 = vmatpush1.bf16.xpose.msra.mxu0 0
  %1252 = vmatprep.subr.bf16.mxu0 0
  %1253 = vmatpush1.bf16.xpose.msra.mxu0 0
  %1254 = vmatprep.subr.bf16.mxu0 0
  %1255 = vmatpush1.bf16.xpose.msra.mxu0 0
  %1256 = vmatprep.subr.bf16.mxu0 0
  %1257 = vmatpush1.bf16.xpose.msra.mxu0 0
  %1258 = vmatprep.subr.bf16.mxu0 0
  %1259 = vmatpush1.bf16.xpose.msra.mxu0 0
  %1260 = vmatprep.subr.bf16.mxu0 0
  %1261 = vmatpush1.bf16.xpose.msra.mxu0 0
  %1262 = vmatprep.subr.bf16.mxu0 0
  %1263 = vmatpush1.bf16.xpose.msra.mxu0 0
  %1264 = vmatprep.subr.bf16.mxu0 0
  %1265 = vmatpush1.bf16.xpose.msra.mxu0 %v1248
  %1266 = vmatprep.subr.bf16.mxu0 0
  %1267 = vmatpush2.bf16.xpose.msra.mxu0 0
  %1268 = vmatprep.subr.bf16.mxu0 0
  %1269 = vmatpush2.bf16.xpose.msra.mxu0 0
  %1270 = vmatprep.subr.bf16.mxu0 0
  %1271 = vmatpush2.bf16.xpose.msra.mxu0 0
  %1272 = vmatprep.subr.bf16.mxu0 0
  %1273 = vmatpush2.bf16.xpose.msra.mxu0 0
  %1274 = vmatprep.subr.bf16.mxu0 0
  %1275 = vmatpush2.bf16.xpose.msra.mxu0 0
  %1276 = vmatprep.subr.bf16.mxu0 0
  %1277 = vmatpush2.bf16.xpose.msra.mxu0 0
  %1278 = vmatprep.subr.bf16.mxu0 0
  %1279 = vmatpush2.bf16.xpose.msra.mxu0 0
  %1280 = vmatprep.subr.bf16.mxu0 0
  %1281 = vmatpush2.bf16.xpose.msra.mxu0 0
  %1282 = vmatprep.mubr.bf16.mxu0 0
  %1283 = vmatmul.mubr.bf16.gmra.mxu0 %v1245
  %v1284 = vpop.f32.mrf.mxu0
  %v1285 = vadd.f32 %v31, %v1284
  %v1286 = vpop.f32.mrf.mxu0
  %v1287 = vpop.f32.mrf.mxu0
  %v1288 = vpop.f32.mrf.mxu0
  %1289 = vdwg.mxu0
  %v1290 = vsel %vm39, %v1235, -inf
  %1291 = vmax.xlane.f32.xlu0 %v1290
  %v1292 = vpop.xlane.xlu0 %1291
  %v1293 = vsel %vm39, %v1285, -inf
  %1294 = vmax.xlane.f32.xlu0 %v1293
  %v1295 = vpop.xlane.xlu0 %1294
  %v1296 = vsub.f32 %v1235, %v1292
  %v1297 = vsub.f32 %v1285, %v1295
  %v1298 = vmul.f32 %v1296, 1.442695
  %v1299 = vpow.pop %v1298
  %v1300 = vmul.f32 %v1297, 1.442695
  %v1301 = vpow.pop %v1300
  %v1302 = vsel %vm39, %v1299, 0.0
  %1303 = vadd.xlane.f32.xlu0 %v1302
  %v1304 = vpop.xlane.xlu0 %1303
  %v1305 = vsel %vm39, %v1301, 0.0
  %1306 = vadd.xlane.f32.xlu0 %v1305
  %v1307 = vpop.xlane.xlu0 %1306
  %v1308 = vrcp.pop %v1304
  %v1309 = vrcp.pop %v1307
  %v1310 = vpack.c.bf16 %v1299, %v1299
  %v1311 = vpack.c.bf16 %v1301, %v1301
  %1312 = vrot.lane.b32.xlu0 %v18, 88
  %v1313 = vpop.permute.xlu0 %1312
  %v1314 = vrot.slane %v1313, 4
  %v1316 = vsel %vm39, %v1310, 0
  %v1319 = vsel %vm163, %v1314, 0
  %1321 = vmatprep.subr.bf16.mxu0 0
  %1322 = vmatpush1.bf16.msra.mxu0 0
  %1323 = vmatprep.subr.bf16.mxu0 0
  %1324 = vmatpush1.bf16.msra.mxu0 0
  %1325 = vmatprep.subr.bf16.mxu0 0
  %1326 = vmatpush1.bf16.msra.mxu0 0
  %1327 = vmatprep.subr.bf16.mxu0 0
  %1328 = vmatpush1.bf16.msra.mxu0 0
  %1329 = vmatprep.subr.bf16.mxu0 0
  %1330 = vmatpush1.bf16.msra.mxu0 0
  %1331 = vmatprep.subr.bf16.mxu0 0
  %1332 = vmatpush1.bf16.msra.mxu0 0
  %1333 = vmatprep.subr.bf16.mxu0 0
  %1334 = vmatpush1.bf16.msra.mxu0 0
  %1335 = vmatprep.subr.bf16.mxu0 0
  %1336 = vmatpush1.bf16.msra.mxu0 %v1319
  %1337 = vmatprep.subr.bf16.mxu0 0
  %1338 = vmatpush2.bf16.msra.mxu0 0
  %1339 = vmatprep.subr.bf16.mxu0 0
  %1340 = vmatpush2.bf16.msra.mxu0 0
  %1341 = vmatprep.subr.bf16.mxu0 0
  %1342 = vmatpush2.bf16.msra.mxu0 0
  %1343 = vmatprep.subr.bf16.mxu0 0
  %1344 = vmatpush2.bf16.msra.mxu0 0
  %1345 = vmatprep.subr.bf16.mxu0 0
  %1346 = vmatpush2.bf16.msra.mxu0 0
  %1347 = vmatprep.subr.bf16.mxu0 0
  %1348 = vmatpush2.bf16.msra.mxu0 0
  %1349 = vmatprep.subr.bf16.mxu0 0
  %1350 = vmatpush2.bf16.msra.mxu0 0
  %1351 = vmatprep.subr.bf16.mxu0 0
  %1352 = vmatpush2.bf16.msra.mxu0 0
  %1353 = vmatprep.mubr.bf16.mxu0 0
  %1354 = vmatmul.mubr.bf16.gmra.mxu0 %v1316
  %v1355 = vpop.f32.mrf.mxu0
  %v1356 = vadd.f32 0.0, %v1355
  %v1357 = vpop.f32.mrf.mxu0
  %v1358 = vpop.f32.mrf.mxu0
  %v1359 = vpop.f32.mrf.mxu0
  %1360 = vdwg.mxu0
  %1361 = vrot.lane.b32.xlu0 %v19, 88
  %v1362 = vpop.permute.xlu0 %1361
  %v1363 = vrot.slane %v1362, 4
  %v1365 = vsel %vm39, %v1311, 0
  %v1368 = vsel %vm163, %v1363, 0
  %1370 = vmatprep.subr.bf16.mxu0 0
  %1371 = vmatpush1.bf16.msra.mxu0 0
  %1372 = vmatprep.subr.bf16.mxu0 0
  %1373 = vmatpush1.bf16.msra.mxu0 0
  %1374 = vmatprep.subr.bf16.mxu0 0
  %1375 = vmatpush1.bf16.msra.mxu0 0
  %1376 = vmatprep.subr.bf16.mxu0 0
  %1377 = vmatpush1.bf16.msra.mxu0 0
  %1378 = vmatprep.subr.bf16.mxu0 0
  %1379 = vmatpush1.bf16.msra.mxu0 0
  %1380 = vmatprep.subr.bf16.mxu0 0
  %1381 = vmatpush1.bf16.msra.mxu0 0
  %1382 = vmatprep.subr.bf16.mxu0 0
  %1383 = vmatpush1.bf16.msra.mxu0 0
  %1384 = vmatprep.subr.bf16.mxu0 0
  %1385 = vmatpush1.bf16.msra.mxu0 %v1368
  %1386 = vmatprep.subr.bf16.mxu0 0
  %1387 = vmatpush2.bf16.msra.mxu0 0
  %1388 = vmatprep.subr.bf16.mxu0 0
  %1389 = vmatpush2.bf16.msra.mxu0 0
  %1390 = vmatprep.subr.bf16.mxu0 0
  %1391 = vmatpush2.bf16.msra.mxu0 0
  %1392 = vmatprep.subr.bf16.mxu0 0
  %1393 = vmatpush2.bf16.msra.mxu0 0
  %1394 = vmatprep.subr.bf16.mxu0 0
  %1395 = vmatpush2.bf16.msra.mxu0 0
  %1396 = vmatprep.subr.bf16.mxu0 0
  %1397 = vmatpush2.bf16.msra.mxu0 0
  %1398 = vmatprep.subr.bf16.mxu0 0
  %1399 = vmatpush2.bf16.msra.mxu0 0
  %1400 = vmatprep.subr.bf16.mxu0 0
  %1401 = vmatpush2.bf16.msra.mxu0 0
  %1402 = vmatprep.mubr.bf16.mxu0 0
  %1403 = vmatmul.mubr.bf16.gmra.mxu0 %v1365
  %v1404 = vpop.f32.mrf.mxu0
  %v1405 = vadd.f32 0.0, %v1404
  %v1406 = vpop.f32.mrf.mxu0
  %v1407 = vpop.f32.mrf.mxu0
  %v1408 = vpop.f32.mrf.mxu0
  %1409 = vdwg.mxu0
  %v1410 = vmul.f32 %v1356, %v1308
  %v1411 = vmul.f32 %v1405, %v1309
  %1414 = vrot.lane.b32.xlu0 %v1410, 40
  %v1415 = vpop.permute.xlu0 %1414
  %1416 = vrot.lane.b32.xlu0 %v1411, 40
  %v1417 = vpop.permute.xlu0 %1416
  %vm1420 = vcmask 392512
  %1421 = vst.msk [vmem:[#allocation2] sm:$0xff] %vm1420, %v1415
  %1422 = vst.msk [vmem:[#allocation2 + $0x8] sm:$0xff] %vm1420, %v1417
  %1423 = vrot.lane.b32.xlu0 %v36, 80
  %v1424 = vpop.permute.xlu0 %1423
  %1425 = vrot.lane.b32.xlu0 %v36, 16
  %v1426 = vpop.permute.xlu0 %1425
  %v1428 = vsel %vm39, %v1424, 0
  %v1431 = vsel %vm39, %v1426, 0
  %1433 = vmatprep.subr.bf16.mxu0 0
  %1434 = vmatpush1.bf16.xpose.msra.mxu0 0
  %1435 = vmatprep.subr.bf16.mxu0 0
  %1436 = vmatpush1.bf16.xpose.msra.mxu0 0
  %1437 = vmatprep.subr.bf16.mxu0 0
  %1438 = vmatpush1.bf16.xpose.msra.mxu0 0
  %1439 = vmatprep.subr.bf16.mxu0 0
  %1440 = vmatpush1.bf16.xpose.msra.mxu0 0
  %1441 = vmatprep.subr.bf16.mxu0 0
  %1442 = vmatpush1.bf16.xpose.msra.mxu0 0
  %1443 = vmatprep.subr.bf16.mxu0 0
  %1444 = vmatpush1.bf16.xpose.msra.mxu0 0
  %1445 = vmatprep.subr.bf16.mxu0 0
  %1446 = vmatpush1.bf16.xpose.msra.mxu0 0
  %1447 = vmatprep.subr.bf16.mxu0 0
  %1448 = vmatpush1.bf16.xpose.msra.mxu0 %v1431
  %1449 = vmatprep.subr.bf16.mxu0 0
  %1450 = vmatpush2.bf16.xpose.msra.mxu0 0
  %1451 = vmatprep.subr.bf16.mxu0 0
  %1452 = vmatpush2.bf16.xpose.msra.mxu0 0
  %1453 = vmatprep.subr.bf16.mxu0 0
  %1454 = vmatpush2.bf16.xpose.msra.mxu0 0
  %1455 = vmatprep.subr.bf16.mxu0 0
  %1456 = vmatpush2.bf16.xpose.msra.mxu0 0
  %1457 = vmatprep.subr.bf16.mxu0 0
  %1458 = vmatpush2.bf16.xpose.msra.mxu0 0
  %1459 = vmatprep.subr.bf16.mxu0 0
  %1460 = vmatpush2.bf16.xpose.msra.mxu0 0
  %1461 = vmatprep.subr.bf16.mxu0 0
  %1462 = vmatpush2.bf16.xpose.msra.mxu0 0
  %1463 = vmatprep.subr.bf16.mxu0 0
  %1464 = vmatpush2.bf16.xpose.msra.mxu0 0
  %1465 = vmatprep.mubr.bf16.mxu0 0
  %1466 = vmatmul.mubr.bf16.gmra.mxu0 %v1428
  %v1467 = vpop.f32.mrf.mxu0
  %v1468 = vadd.f32 %v27, %v1467
  %v1469 = vpop.f32.mrf.mxu0
  %v1470 = vpop.f32.mrf.mxu0
  %v1471 = vpop.f32.mrf.mxu0
  %1472 = vdwg.mxu0
  %1473 = vrot.lane.b32.xlu0 %v88, 80
  %v1474 = vpop.permute.xlu0 %1473
  %1475 = vrot.lane.b32.xlu0 %v88, 16
  %v1476 = vpop.permute.xlu0 %1475
  %v1478 = vsel %vm39, %v1474, 0
  %v1481 = vsel %vm39, %v1476, 0
  %1483 = vmatprep.subr.bf16.mxu0 0
  %1484 = vmatpush1.bf16.xpose.msra.mxu0 0
  %1485 = vmatprep.subr.bf16.mxu0 0
  %1486 = vmatpush1.bf16.xpose.msra.mxu0 0
  %1487 = vmatprep.subr.bf16.mxu0 0
  %1488 = vmatpush1.bf16.xpose.msra.mxu0 0
  %1489 = vmatprep.subr.bf16.mxu0 0
  %1490 = vmatpush1.bf16.xpose.msra.mxu0 0
  %1491 = vmatprep.subr.bf16.mxu0 0
  %1492 = vmatpush1.bf16.xpose.msra.mxu0 0
  %1493 = vmatprep.subr.bf16.mxu0 0
  %1494 = vmatpush1.bf16.xpose.msra.mxu0 0
  %1495 = vmatprep.subr.bf16.mxu0 0
  %1496 = vmatpush1.bf16.xpose.msra.mxu0 0
  %1497 = vmatprep.subr.bf16.mxu0 0
  %1498 = vmatpush1.bf16.xpose.msra.mxu0 %v1481
  %1499 = vmatprep.subr.bf16.mxu0 0
  %1500 = vmatpush2.bf16.xpose.msra.mxu0 0
  %1501 = vmatprep.subr.bf16.mxu0 0
  %1502 = vmatpush2.bf16.xpose.msra.mxu0 0
  %1503 = vmatprep.subr.bf16.mxu0 0
  %1504 = vmatpush2.bf16.xpose.msra.mxu0 0
  %1505 = vmatprep.subr.bf16.mxu0 0
  %1506 = vmatpush2.bf16.xpose.msra.mxu0 0
  %1507 = vmatprep.subr.bf16.mxu0 0
  %1508 = vmatpush2.bf16.xpose.msra.mxu0 0
  %1509 = vmatprep.subr.bf16.mxu0 0
  %1510 = vmatpush2.bf16.xpose.msra.mxu0 0
  %1511 = vmatprep.subr.bf16.mxu0 0
  %1512 = vmatpush2.bf16.xpose.msra.mxu0 0
  %1513 = vmatprep.subr.bf16.mxu0 0
  %1514 = vmatpush2.bf16.xpose.msra.mxu0 0
  %1515 = vmatprep.mubr.bf16.mxu0 0
  %1516 = vmatmul.mubr.bf16.gmra.mxu0 %v1478
  %v1517 = vpop.f32.mrf.mxu0
  %v1518 = vadd.f32 %v31, %v1517
  %v1519 = vpop.f32.mrf.mxu0
  %v1520 = vpop.f32.mrf.mxu0
  %v1521 = vpop.f32.mrf.mxu0
  %1522 = vdwg.mxu0
  %v1523 = vsel %vm39, %v1468, -inf
  %1524 = vmax.xlane.f32.xlu0 %v1523
  %v1525 = vpop.xlane.xlu0 %1524
  %v1526 = vsel %vm39, %v1518, -inf
  %1527 = vmax.xlane.f32.xlu0 %v1526
  %v1528 = vpop.xlane.xlu0 %1527
  %v1529 = vsub.f32 %v1468, %v1525
  %v1530 = vsub.f32 %v1518, %v1528
  %v1531 = vmul.f32 %v1529, 1.442695
  %v1532 = vpow.pop %v1531
  %v1533 = vmul.f32 %v1530, 1.442695
  %v1534 = vpow.pop %v1533
  %v1535 = vsel %vm39, %v1532, 0.0
  %1536 = vadd.xlane.f32.xlu0 %v1535
  %v1537 = vpop.xlane.xlu0 %1536
  %v1538 = vsel %vm39, %v1534, 0.0
  %1539 = vadd.xlane.f32.xlu0 %v1538
  %v1540 = vpop.xlane.xlu0 %1539
  %v1541 = vrcp.pop %v1537
  %v1542 = vrcp.pop %v1540
  %v1543 = vpack.c.bf16 %v1532, %v1532
  %v1544 = vpack.c.bf16 %v1534, %v1534
  %1545 = vrot.lane.b32.xlu0 %v18, 80
  %v1546 = vpop.permute.xlu0 %1545
  %v1547 = vrot.slane %v1546, 4
  %v1549 = vsel %vm39, %v1543, 0
  %v1552 = vsel %vm163, %v1547, 0
  %1554 = vmatprep.subr.bf16.mxu0 0
  %1555 = vmatpush1.bf16.msra.mxu0 0
  %1556 = vmatprep.subr.bf16.mxu0 0
  %1557 = vmatpush1.bf16.msra.mxu0 0
  %1558 = vmatprep.subr.bf16.mxu0 0
  %1559 = vmatpush1.bf16.msra.mxu0 0
  %1560 = vmatprep.subr.bf16.mxu0 0
  %1561 = vmatpush1.bf16.msra.mxu0 0
  %1562 = vmatprep.subr.bf16.mxu0 0
  %1563 = vmatpush1.bf16.msra.mxu0 0
  %1564 = vmatprep.subr.bf16.mxu0 0
  %1565 = vmatpush1.bf16.msra.mxu0 0
  %1566 = vmatprep.subr.bf16.mxu0 0
  %1567 = vmatpush1.bf16.msra.mxu0 0
  %1568 = vmatprep.subr.bf16.mxu0 0
  %1569 = vmatpush1.bf16.msra.mxu0 %v1552
  %1570 = vmatprep.subr.bf16.mxu0 0
  %1571 = vmatpush2.bf16.msra.mxu0 0
  %1572 = vmatprep.subr.bf16.mxu0 0
  %1573 = vmatpush2.bf16.msra.mxu0 0
  %1574 = vmatprep.subr.bf16.mxu0 0
  %1575 = vmatpush2.bf16.msra.mxu0 0
  %1576 = vmatprep.subr.bf16.mxu0 0
  %1577 = vmatpush2.bf16.msra.mxu0 0
  %1578 = vmatprep.subr.bf16.mxu0 0
  %1579 = vmatpush2.bf16.msra.mxu0 0
  %1580 = vmatprep.subr.bf16.mxu0 0
  %1581 = vmatpush2.bf16.msra.mxu0 0
  %1582 = vmatprep.subr.bf16.mxu0 0
  %1583 = vmatpush2.bf16.msra.mxu0 0
  %1584 = vmatprep.subr.bf16.mxu0 0
  %1585 = vmatpush2.bf16.msra.mxu0 0
  %1586 = vmatprep.mubr.bf16.mxu0 0
  %1587 = vmatmul.mubr.bf16.gmra.mxu0 %v1549
  %v1588 = vpop.f32.mrf.mxu0
  %v1589 = vadd.f32 0.0, %v1588
  %v1590 = vpop.f32.mrf.mxu0
  %v1591 = vpop.f32.mrf.mxu0
  %v1592 = vpop.f32.mrf.mxu0
  %1593 = vdwg.mxu0
  %1594 = vrot.lane.b32.xlu0 %v19, 80
  %v1595 = vpop.permute.xlu0 %1594
  %v1596 = vrot.slane %v1595, 4
  %v1598 = vsel %vm39, %v1544, 0
  %v1601 = vsel %vm163, %v1596, 0
  %1603 = vmatprep.subr.bf16.mxu0 0
  %1604 = vmatpush1.bf16.msra.mxu0 0
  %1605 = vmatprep.subr.bf16.mxu0 0
  %1606 = vmatpush1.bf16.msra.mxu0 0
  %1607 = vmatprep.subr.bf16.mxu0 0
  %1608 = vmatpush1.bf16.msra.mxu0 0
  %1609 = vmatprep.subr.bf16.mxu0 0
  %1610 = vmatpush1.bf16.msra.mxu0 0
  %1611 = vmatprep.subr.bf16.mxu0 0
  %1612 = vmatpush1.bf16.msra.mxu0 0
  %1613 = vmatprep.subr.bf16.mxu0 0
  %1614 = vmatpush1.bf16.msra.mxu0 0
  %1615 = vmatprep.subr.bf16.mxu0 0
  %1616 = vmatpush1.bf16.msra.mxu0 0
  %1617 = vmatprep.subr.bf16.mxu0 0
  %1618 = vmatpush1.bf16.msra.mxu0 %v1601
  %1619 = vmatprep.subr.bf16.mxu0 0
  %1620 = vmatpush2.bf16.msra.mxu0 0
  %1621 = vmatprep.subr.bf16.mxu0 0
  %1622 = vmatpush2.bf16.msra.mxu0 0
  %1623 = vmatprep.subr.bf16.mxu0 0
  %1624 = vmatpush2.bf16.msra.mxu0 0
  %1625 = vmatprep.subr.bf16.mxu0 0
  %1626 = vmatpush2.bf16.msra.mxu0 0
  %1627 = vmatprep.subr.bf16.mxu0 0
  %1628 = vmatpush2.bf16.msra.mxu0 0
  %1629 = vmatprep.subr.bf16.mxu0 0
  %1630 = vmatpush2.bf16.msra.mxu0 0
  %1631 = vmatprep.subr.bf16.mxu0 0
  %1632 = vmatpush2.bf16.msra.mxu0 0
  %1633 = vmatprep.subr.bf16.mxu0 0
  %1634 = vmatpush2.bf16.msra.mxu0 0
  %1635 = vmatprep.mubr.bf16.mxu0 0
  %1636 = vmatmul.mubr.bf16.gmra.mxu0 %v1598
  %v1637 = vpop.f32.mrf.mxu0
  %v1638 = vadd.f32 0.0, %v1637
  %v1639 = vpop.f32.mrf.mxu0
  %v1640 = vpop.f32.mrf.mxu0
  %v1641 = vpop.f32.mrf.mxu0
  %1642 = vdwg.mxu0
  %v1643 = vmul.f32 %v1589, %v1541
  %v1644 = vmul.f32 %v1638, %v1542
  %1647 = vrot.lane.b32.xlu0 %v1643, 48
  %v1648 = vpop.permute.xlu0 %1647
  %1649 = vrot.lane.b32.xlu0 %v1644, 48
  %v1650 = vpop.permute.xlu0 %1649
  %vm1653 = vcmask 458112
  %1654 = vst.msk [vmem:[#allocation2] sm:$0xff] %vm1653, %v1648
  %1655 = vst.msk [vmem:[#allocation2 + $0x8] sm:$0xff] %vm1653, %v1650
  %1656 = vrot.lane.b32.xlu0 %v36, 72
  %v1657 = vpop.permute.xlu0 %1656
  %1658 = vrot.lane.b32.xlu0 %v36, 8
  %v1659 = vpop.permute.xlu0 %1658
  %v1661 = vsel %vm39, %v1657, 0
  %v1664 = vsel %vm39, %v1659, 0
  %1666 = vmatprep.subr.bf16.mxu0 0
  %1667 = vmatpush1.bf16.xpose.msra.mxu0 0
  %1668 = vmatprep.subr.bf16.mxu0 0
  %1669 = vmatpush1.bf16.xpose.msra.mxu0 0
  %1670 = vmatprep.subr.bf16.mxu0 0
  %1671 = vmatpush1.bf16.xpose.msra.mxu0 0
  %1672 = vmatprep.subr.bf16.mxu0 0
  %1673 = vmatpush1.bf16.xpose.msra.mxu0 0
  %1674 = vmatprep.subr.bf16.mxu0 0
  %1675 = vmatpush1.bf16.xpose.msra.mxu0 0
  %1676 = vmatprep.subr.bf16.mxu0 0
  %1677 = vmatpush1.bf16.xpose.msra.mxu0 0
  %1678 = vmatprep.subr.bf16.mxu0 0
  %1679 = vmatpush1.bf16.xpose.msra.mxu0 0
  %1680 = vmatprep.subr.bf16.mxu0 0
  %1681 = vmatpush1.bf16.xpose.msra.mxu0 %v1664
  %1682 = vmatprep.subr.bf16.mxu0 0
  %1683 = vmatpush2.bf16.xpose.msra.mxu0 0
  %1684 = vmatprep.subr.bf16.mxu0 0
  %1685 = vmatpush2.bf16.xpose.msra.mxu0 0
  %1686 = vmatprep.subr.bf16.mxu0 0
  %1687 = vmatpush2.bf16.xpose.msra.mxu0 0
  %1688 = vmatprep.subr.bf16.mxu0 0
  %1689 = vmatpush2.bf16.xpose.msra.mxu0 0
  %1690 = vmatprep.subr.bf16.mxu0 0
  %1691 = vmatpush2.bf16.xpose.msra.mxu0 0
  %1692 = vmatprep.subr.bf16.mxu0 0
  %1693 = vmatpush2.bf16.xpose.msra.mxu0 0
  %1694 = vmatprep.subr.bf16.mxu0 0
  %1695 = vmatpush2.bf16.xpose.msra.mxu0 0
  %1696 = vmatprep.subr.bf16.mxu0 0
  %1697 = vmatpush2.bf16.xpose.msra.mxu0 0
  %1698 = vmatprep.mubr.bf16.mxu0 0
  %1699 = vmatmul.mubr.bf16.gmra.mxu0 %v1661
  %v1700 = vpop.f32.mrf.mxu0
  %v1701 = vadd.f32 %v27, %v1700
  %v1702 = vpop.f32.mrf.mxu0
  %v1703 = vpop.f32.mrf.mxu0
  %v1704 = vpop.f32.mrf.mxu0
  %1705 = vdwg.mxu0
  %1706 = vrot.lane.b32.xlu0 %v88, 72
  %v1707 = vpop.permute.xlu0 %1706
  %1708 = vrot.lane.b32.xlu0 %v88, 8
  %v1709 = vpop.permute.xlu0 %1708
  %v1711 = vsel %vm39, %v1707, 0
  %v1714 = vsel %vm39, %v1709, 0
  %1716 = vmatprep.subr.bf16.mxu0 0
  %1717 = vmatpush1.bf16.xpose.msra.mxu0 0
  %1718 = vmatprep.subr.bf16.mxu0 0
  %1719 = vmatpush1.bf16.xpose.msra.mxu0 0
  %1720 = vmatprep.subr.bf16.mxu0 0
  %1721 = vmatpush1.bf16.xpose.msra.mxu0 0
  %1722 = vmatprep.subr.bf16.mxu0 0
  %1723 = vmatpush1.bf16.xpose.msra.mxu0 0
  %1724 = vmatprep.subr.bf16.mxu0 0
  %1725 = vmatpush1.bf16.xpose.msra.mxu0 0
  %1726 = vmatprep.subr.bf16.mxu0 0
  %1727 = vmatpush1.bf16.xpose.msra.mxu0 0
  %1728 = vmatprep.subr.bf16.mxu0 0
  %1729 = vmatpush1.bf16.xpose.msra.mxu0 0
  %1730 = vmatprep.subr.bf16.mxu0 0
  %1731 = vmatpush1.bf16.xpose.msra.mxu0 %v1714
  %1732 = vmatprep.subr.bf16.mxu0 0
  %1733 = vmatpush2.bf16.xpose.msra.mxu0 0
  %1734 = vmatprep.subr.bf16.mxu0 0
  %1735 = vmatpush2.bf16.xpose.msra.mxu0 0
  %1736 = vmatprep.subr.bf16.mxu0 0
  %1737 = vmatpush2.bf16.xpose.msra.mxu0 0
  %1738 = vmatprep.subr.bf16.mxu0 0
  %1739 = vmatpush2.bf16.xpose.msra.mxu0 0
  %1740 = vmatprep.subr.bf16.mxu0 0
  %1741 = vmatpush2.bf16.xpose.msra.mxu0 0
  %1742 = vmatprep.subr.bf16.mxu0 0
  %1743 = vmatpush2.bf16.xpose.msra.mxu0 0
  %1744 = vmatprep.subr.bf16.mxu0 0
  %1745 = vmatpush2.bf16.xpose.msra.mxu0 0
  %1746 = vmatprep.subr.bf16.mxu0 0
  %1747 = vmatpush2.bf16.xpose.msra.mxu0 0
  %1748 = vmatprep.mubr.bf16.mxu0 0
  %1749 = vmatmul.mubr.bf16.gmra.mxu0 %v1711
  %v1750 = vpop.f32.mrf.mxu0
  %v1751 = vadd.f32 %v31, %v1750
  %v1752 = vpop.f32.mrf.mxu0
  %v1753 = vpop.f32.mrf.mxu0
  %v1754 = vpop.f32.mrf.mxu0
  %1755 = vdwg.mxu0
  %v1756 = vsel %vm39, %v1701, -inf
  %1757 = vmax.xlane.f32.xlu0 %v1756
  %v1758 = vpop.xlane.xlu0 %1757
  %v1759 = vsel %vm39, %v1751, -inf
  %1760 = vmax.xlane.f32.xlu0 %v1759
  %v1761 = vpop.xlane.xlu0 %1760
  %v1762 = vsub.f32 %v1701, %v1758
  %v1763 = vsub.f32 %v1751, %v1761
  %v1764 = vmul.f32 %v1762, 1.442695
  %v1765 = vpow.pop %v1764
  %v1766 = vmul.f32 %v1763, 1.442695
  %v1767 = vpow.pop %v1766
  %v1768 = vsel %vm39, %v1765, 0.0
  %1769 = vadd.xlane.f32.xlu0 %v1768
  %v1770 = vpop.xlane.xlu0 %1769
  %v1771 = vsel %vm39, %v1767, 0.0
  %1772 = vadd.xlane.f32.xlu0 %v1771
  %v1773 = vpop.xlane.xlu0 %1772
  %v1774 = vrcp.pop %v1770
  %v1775 = vrcp.pop %v1773
  %v1776 = vpack.c.bf16 %v1765, %v1765
  %v1777 = vpack.c.bf16 %v1767, %v1767
  %1778 = vrot.lane.b32.xlu0 %v18, 72
  %v1779 = vpop.permute.xlu0 %1778
  %v1780 = vrot.slane %v1779, 4
  %v1782 = vsel %vm39, %v1776, 0
  %v1785 = vsel %vm163, %v1780, 0
  %1787 = vmatprep.subr.bf16.mxu0 0
  %1788 = vmatpush1.bf16.msra.mxu0 0
  %1789 = vmatprep.subr.bf16.mxu0 0
  %1790 = vmatpush1.bf16.msra.mxu0 0
  %1791 = vmatprep.subr.bf16.mxu0 0
  %1792 = vmatpush1.bf16.msra.mxu0 0
  %1793 = vmatprep.subr.bf16.mxu0 0
  %1794 = vmatpush1.bf16.msra.mxu0 0
  %1795 = vmatprep.subr.bf16.mxu0 0
  %1796 = vmatpush1.bf16.msra.mxu0 0
  %1797 = vmatprep.subr.bf16.mxu0 0
  %1798 = vmatpush1.bf16.msra.mxu0 0
  %1799 = vmatprep.subr.bf16.mxu0 0
  %1800 = vmatpush1.bf16.msra.mxu0 0
  %1801 = vmatprep.subr.bf16.mxu0 0
  %1802 = vmatpush1.bf16.msra.mxu0 %v1785
  %1803 = vmatprep.subr.bf16.mxu0 0
  %1804 = vmatpush2.bf16.msra.mxu0 0
  %1805 = vmatprep.subr.bf16.mxu0 0
  %1806 = vmatpush2.bf16.msra.mxu0 0
  %1807 = vmatprep.subr.bf16.mxu0 0
  %1808 = vmatpush2.bf16.msra.mxu0 0
  %1809 = vmatprep.subr.bf16.mxu0 0
  %1810 = vmatpush2.bf16.msra.mxu0 0
  %1811 = vmatprep.subr.bf16.mxu0 0
  %1812 = vmatpush2.bf16.msra.mxu0 0
  %1813 = vmatprep.subr.bf16.mxu0 0
  %1814 = vmatpush2.bf16.msra.mxu0 0
  %1815 = vmatprep.subr.bf16.mxu0 0
  %1816 = vmatpush2.bf16.msra.mxu0 0
  %1817 = vmatprep.subr.bf16.mxu0 0
  %1818 = vmatpush2.bf16.msra.mxu0 0
  %1819 = vmatprep.mubr.bf16.mxu0 0
  %1820 = vmatmul.mubr.bf16.gmra.mxu0 %v1782
  %v1821 = vpop.f32.mrf.mxu0
  %v1822 = vadd.f32 0.0, %v1821
  %v1823 = vpop.f32.mrf.mxu0
  %v1824 = vpop.f32.mrf.mxu0
  %v1825 = vpop.f32.mrf.mxu0
  %1826 = vdwg.mxu0
  %1827 = vrot.lane.b32.xlu0 %v19, 72
  %v1828 = vpop.permute.xlu0 %1827
  %v1829 = vrot.slane %v1828, 4
  %v1831 = vsel %vm39, %v1777, 0
  %v1834 = vsel %vm163, %v1829, 0
  %1836 = vmatprep.subr.bf16.mxu0 0
  %1837 = vmatpush1.bf16.msra.mxu0 0
  %1838 = vmatprep.subr.bf16.mxu0 0
  %1839 = vmatpush1.bf16.msra.mxu0 0
  %1840 = vmatprep.subr.bf16.mxu0 0
  %1841 = vmatpush1.bf16.msra.mxu0 0
  %1842 = vmatprep.subr.bf16.mxu0 0
  %1843 = vmatpush1.bf16.msra.mxu0 0
  %1844 = vmatprep.subr.bf16.mxu0 0
  %1845 = vmatpush1.bf16.msra.mxu0 0
  %1846 = vmatprep.subr.bf16.mxu0 0
  %1847 = vmatpush1.bf16.msra.mxu0 0
  %1848 = vmatprep.subr.bf16.mxu0 0
  %1849 = vmatpush1.bf16.msra.mxu0 0
  %1850 = vmatprep.subr.bf16.mxu0 0
  %1851 = vmatpush1.bf16.msra.mxu0 %v1834
  %1852 = vmatprep.subr.bf16.mxu0 0
  %1853 = vmatpush2.bf16.msra.mxu0 0
  %1854 = vmatprep.subr.bf16.mxu0 0
  %1855 = vmatpush2.bf16.msra.mxu0 0
  %1856 = vmatprep.subr.bf16.mxu0 0
  %1857 = vmatpush2.bf16.msra.mxu0 0
  %1858 = vmatprep.subr.bf16.mxu0 0
  %1859 = vmatpush2.bf16.msra.mxu0 0
  %1860 = vmatprep.subr.bf16.mxu0 0
  %1861 = vmatpush2.bf16.msra.mxu0 0
  %1862 = vmatprep.subr.bf16.mxu0 0
  %1863 = vmatpush2.bf16.msra.mxu0 0
  %1864 = vmatprep.subr.bf16.mxu0 0
  %1865 = vmatpush2.bf16.msra.mxu0 0
  %1866 = vmatprep.subr.bf16.mxu0 0
  %1867 = vmatpush2.bf16.msra.mxu0 0
  %1868 = vmatprep.mubr.bf16.mxu0 0
  %1869 = vmatmul.mubr.bf16.gmra.mxu0 %v1831
  %v1870 = vpop.f32.mrf.mxu0
  %v1871 = vadd.f32 0.0, %v1870
  %v1872 = vpop.f32.mrf.mxu0
  %v1873 = vpop.f32.mrf.mxu0
  %v1874 = vpop.f32.mrf.mxu0
  %1875 = vdwg.mxu0
  %v1876 = vmul.f32 %v1822, %v1774
  %v1877 = vmul.f32 %v1871, %v1775
  %1880 = vrot.lane.b32.xlu0 %v1876, 56
  %v1881 = vpop.permute.xlu0 %1880
  %1882 = vrot.lane.b32.xlu0 %v1877, 56
  %v1883 = vpop.permute.xlu0 %1882
  %vm1886 = vcmask 523712
  %1887 = vst.msk [vmem:[#allocation2] sm:$0xff] %vm1886, %v1881
  %1888 = vst.msk [vmem:[#allocation2 + $0x8] sm:$0xff] %vm1886, %v1883
  %v1889 = vld [vmem:[#allocation2] sm:$0xff]
  %v1890 = vld [vmem:[#allocation2 + $0x8] sm:$0xff]
  %v1891 = vpack.c.bf16 %v1889, %v1889
  %v1892 = vpack.c.bf16 %v1890, %v1890
  %v1893 = vld [vmem:[%s2] sm:$0xf]
  %v1894 = vld [vmem:[%s2 + $0x4] sm:$0xf]
  %v1895 = vld [vmem:[%s2 + $0x8] sm:$0xf]
  %v1896 = vld [vmem:[%s2 + $0xc] sm:$0xf]
  %v1897 = vld [vmem:[%s2 + $0x10] sm:$0xf]
  %v1898 = vld [vmem:[%s2 + $0x14] sm:$0xf]
  %v1899 = vld [vmem:[%s2 + $0x18] sm:$0xf]
  %v1900 = vld [vmem:[%s2 + $0x1c] sm:$0xf]
  %v1901 = vld [vmem:[%s3] sm:$0x1]
  %v1903 = vlaneseq
  %v1904 = vshrl.u32 %v1903, 7
  %v1905 = vsub.s32 0, %v1904
  %v1906 = vrot.slane %v1901, %v1905
  %v1910 = vunpack.c.l.b16 %v1891
  %v1911 = vunpack.c.l.b16 %v1892
  %v1912 = vpack.c.b16 %v1911, %v1910
  %v1921 = vunpack.c.l.b16 %v1893
  %v1922 = vunpack.c.l.b16 %v1894
  %v1923 = vunpack.c.l.b16 %v1895
  %v1924 = vunpack.c.l.b16 %v1896
  %v1925 = vunpack.c.l.b16 %v1897
  %v1926 = vunpack.c.l.b16 %v1898
  %v1927 = vunpack.c.l.b16 %v1899
  %v1928 = vunpack.c.l.b16 %v1900
  %v1929 = vpack.c.b16 %v1922, %v1921
  %v1930 = vpack.c.b16 %v1924, %v1923
  %v1931 = vpack.c.b16 %v1926, %v1925
  %v1932 = vpack.c.b16 %v1928, %v1927
  %vm1937 = vcmask 523264
  %v1939 = vsel %vm1937, %v1912, 0
  %1941 = vmatprep.subr.bf16.mxu0 0
  %1942 = vmatpush1.bf16.msra.mxu0 0
  %1943 = vmatprep.subr.bf16.mxu0 0
  %1944 = vmatpush1.bf16.msra.mxu0 0
  %1945 = vmatprep.subr.bf16.mxu0 0
  %1946 = vmatpush1.bf16.msra.mxu0 0
  %1947 = vmatprep.subr.bf16.mxu0 0
  %1948 = vmatpush1.bf16.msra.mxu0 0
  %1949 = vmatprep.subr.bf16.mxu0 0
  %1950 = vmatpush1.bf16.msra.mxu0 %v1932
  %1951 = vmatprep.subr.bf16.mxu0 0
  %1952 = vmatpush1.bf16.msra.mxu0 %v1931
  %1953 = vmatprep.subr.bf16.mxu0 0
  %1954 = vmatpush1.bf16.msra.mxu0 %v1930
  %1955 = vmatprep.subr.bf16.mxu0 0
  %1956 = vmatpush1.bf16.msra.mxu0 %v1929
  %1957 = vmatprep.subr.bf16.mxu0 0
  %1958 = vmatpush2.bf16.msra.mxu0 0
  %1959 = vmatprep.subr.bf16.mxu0 0
  %1960 = vmatpush2.bf16.msra.mxu0 0
  %1961 = vmatprep.subr.bf16.mxu0 0
  %1962 = vmatpush2.bf16.msra.mxu0 0
  %1963 = vmatprep.subr.bf16.mxu0 0
  %1964 = vmatpush2.bf16.msra.mxu0 0
  %1965 = vmatprep.subr.bf16.mxu0 0
  %1966 = vmatpush2.bf16.msra.mxu0 0
  %1967 = vmatprep.subr.bf16.mxu0 0
  %1968 = vmatpush2.bf16.msra.mxu0 0
  %1969 = vmatprep.subr.bf16.mxu0 0
  %1970 = vmatpush2.bf16.msra.mxu0 0
  %1971 = vmatprep.subr.bf16.mxu0 0
  %1972 = vmatpush2.bf16.msra.mxu0 0
  %1973 = vmatprep.mubr.bf16.mxu0 0
  %1974 = vmatmul.mubr.bf16.gmra.mxu0 %v1939
  %v1975 = vpop.f32.mrf.mxu0
  %v1976 = vadd.f32 %v1906, %v1975
  %v1977 = vpop.f32.mrf.mxu0
  %v1978 = vpop.f32.mrf.mxu0
  %v1979 = vadd.f32 %v1906, %v1978
  %v1980 = vpop.f32.mrf.mxu0
  %1981 = vdwg.mxu0
  %1982 = vst.msk [vmem:[%s4] sm:$0xff] %vm1937, %v1976
  %1983 = vst.msk [vmem:[%s4 + $0x8] sm:$0xff] %vm1937, %v1979
  // Predicated region
  $region18: #{gps_forward.10} parent=0 // pred_check
    _
  $region19: #{gps_forward.10} parent=0 // pred_check_branch
    %1985 = sbr.rel (0) target = $region21
  $region20: #{gps_forward.10} parent=0 // pred_region
    _
  $region21: #{gps_forward.10} parent=0 // pred_fallthru
    _
  // Predicated region
  $region22: #{gps_forward.10} parent=0 // pred_check
    _
  $region23: #{gps_forward.10} parent=0 // pred_check_branch
    %1987 = sbr.rel (0) target = $region25
  $region24: #{gps_forward.10} parent=0 // pred_region
    _
  $region25: #{gps_forward.10} parent=0 // pred_fallthru
    _

</llo_original>
